<compile_context>
chip_gen: v7x
topology: tpu7x:2x2x1
jax: 0.10.0
libtpu: 0.0.40
codegen_flags: <defaults>
</compile_context>

<pallas_src>
import jax
import jax.numpy as jnp
from jax import lax
from jax.experimental import pallas as pl
from jax.experimental.pallas import tpu as pltpu
import numpy as np

# ----------------------------------------------------------------------------
# Static network geometry (pinned by the module's view(-1, 20*29) -> L_in=250).
# ----------------------------------------------------------------------------
L_IN = 250
PAD = 30
C0, C1, C2, C3 = 2, 5, 10, 20          # channel counts through the stack
K1, K2, K3 = 60, 30, 15                # conv kernel sizes
N_HID = 100

LP0 = L_IN + 2 * PAD                   # 310 padded input length
L1 = LP0 - K1 + 1                      # 251 conv1 output length (stride 1)
LP1 = L1 + 2 * PAD                     # 311
LF2 = LP1 - K2 + 1                     # 282 full-resolution (stride-1) positions
L2C = (LP1 - K2) // 2 + 1              # 141 stride-2 conv2 positions
L2 = L2C // 2                          # 70  after MaxPool1d(2)
LP2 = L2 + 2 * PAD                     # 130
LF3 = LP2 - K3 + 1                     # 116
L3C = (LP2 - K3) // 2 + 1              # 58
L3 = L3C // 2                          # 29
H = C3 * L3                            # 580 = 20 * 29


# ----------------------------------------------------------------------------
# The single fused kernel (one grid step == one batch element)
# ----------------------------------------------------------------------------
def _cnn_kernel(x_ref, w1_ref, b1_ref, w2_ref, b2_ref, w3_ref, b3_ref,
                wf1_ref, bf1_ref, wf2_ref, bf2_ref, o_ref,
                a0_ref, a1_ref, a2_ref, q1_ref, q2_ref, q3_ref):
    f32 = jnp.float32

    def sel_mat(n_full, n_pool, offset):
        # 0/1 selection matrix: picks full-resolution column 4p + offset for
        # pooled column p (folds conv stride 2 + MaxPool1d(2) into a matmul).
        j = lax.broadcasted_iota(jnp.int32, (n_full, n_pool), 0)
        p = lax.broadcasted_iota(jnp.int32, (n_full, n_pool), 1)
        return (j == 4 * p + offset).astype(f32)

    # ---- pad input into (C0, LP0) ----------------------------------------
    a0_ref[...] = jnp.zeros_like(a0_ref)
    a0_ref[:, pl.ds(PAD, L_IN)] = x_ref[0]

    # ---- block 1: Conv1d(2->5, k=60, s=1, p=30) + ReLU --------------------
    for k in range(K1):                                     # in-VMEM im2col
        q1_ref[pl.ds(k * C0, C0), :] = a0_ref[:, pl.ds(k, L1)]
    y1 = jnp.dot(w1_ref[...], q1_ref[...],
                 preferred_element_type=f32) + b1_ref[...]  # (5, 251)
    a1_ref[...] = jnp.zeros_like(a1_ref)
    a1_ref[:, pl.ds(PAD, L1)] = jnp.maximum(y1, 0.0)

    # ---- block 2: Conv1d(5->10, k=30, s=2, p=30) + MaxPool1d(2) + ReLU ----
    for k in range(K2):
        q2_ref[pl.ds(k * C1, C1), :] = a1_ref[:, pl.ds(k, LF2)]
    y2f = jnp.dot(w2_ref[...], q2_ref[...],
                  preferred_element_type=f32) + b2_ref[...]  # (10, 282) stride-1
    y2 = jnp.maximum(
        jnp.dot(y2f, sel_mat(LF2, L2, 0), preferred_element_type=f32),
        jnp.dot(y2f, sel_mat(LF2, L2, 2), preferred_element_type=f32))  # (10, 70)
    a2_ref[...] = jnp.zeros_like(a2_ref)
    a2_ref[:, pl.ds(PAD, L2)] = jnp.maximum(y2, 0.0)

    # ---- block 3: Conv1d(10->20, k=15, s=2, p=30) + MaxPool1d(2) + ReLU ---
    for k in range(K3):
        q3_ref[pl.ds(k * C2, C2), :] = a2_ref[:, pl.ds(k, LF3)]
    y3f = jnp.dot(w3_ref[...], q3_ref[...],
                  preferred_element_type=f32) + b3_ref[...]  # (20, 116)
    y3 = jnp.maximum(
        jnp.dot(y3f, sel_mat(LF3, L3, 0), preferred_element_type=f32),
        jnp.dot(y3f, sel_mat(LF3, L3, 2), preferred_element_type=f32))  # (20, 29)
    a3 = jnp.maximum(y3, 0.0)          # (C3, L3) channel-major == torch.view order

    # ---- flatten (c*29 + l) + Linear(580,100) + Tanh + Linear(100,out) ----
    feats = jnp.concatenate([a3[c:c + 1, :] for c in range(C3)], axis=1)  # (1, 580)
    h = jnp.tanh(jnp.dot(feats, wf1_ref[...],
                         preferred_element_type=f32) + bf1_ref[...])
    o_ref[0] = jnp.dot(h, wf2_ref[...],
                       preferred_element_type=f32) + bf2_ref[...]


# ----------------------------------------------------------------------------
# One-time weight re-layout (hoisted out of the per-call forward pass)
# ----------------------------------------------------------------------------
def prepare_params(params):
    (W1, b1, W2, b2, W3, b3, Wf1, bf1, Wf2, bf2) = params
    # (C_out, C_in, K) -> (C_out, K*C_in), matching patch row order k*C_in + c
    w1t = jnp.transpose(W1, (0, 2, 1)).reshape(C1, K1 * C0)
    w2t = jnp.transpose(W2, (0, 2, 1)).reshape(C2, K2 * C1)
    w3t = jnp.transpose(W3, (0, 2, 1)).reshape(C3, K3 * C2)
    return (w1t, b1.reshape(C1, 1),
            w2t, b2.reshape(C2, 1),
            w3t, b3.reshape(C3, 1),
            Wf1.T, bf1.reshape(1, -1),
            Wf2.T, bf2.reshape(1, -1))


def _cost_estimate(batch, out_classes):
    per_item = (2 * C1 * L1 * (K1 * C0)
                + 2 * C2 * LF2 * (K2 * C1) + 2 * 2 * C2 * L2 * LF2
                + 2 * C3 * LF3 * (K3 * C2) + 2 * 2 * C3 * L3 * LF3
                + 2 * H * N_HID + 2 * N_HID * out_classes)
    bytes_accessed = 4 * (batch * (C0 * L_IN + out_classes)
                          + C1 * (K1 * C0 + 1) + C2 * (K2 * C1 + 1)
                          + C3 * (K3 * C2 + 1) + H * N_HID + N_HID
                          + N_HID * out_classes + out_classes)
    return pl.CostEstimate(flops=batch * per_item,
                           transcendentals=batch * N_HID,
                           bytes_accessed=bytes_accessed)


def build_cnn_forward(batch, out_classes=2):
    def _full(shape):
        return pl.BlockSpec(shape, lambda *_: (0,) * len(shape))

    grid_spec = pltpu.PrefetchScalarGridSpec(
        num_scalar_prefetch=0,
        grid=(batch,),
        in_specs=[
            pl.BlockSpec((1, C0, L_IN), lambda b: (b, 0, 0)),   # x (NCL)
            _full((C1, K1 * C0)), _full((C1, 1)),               # conv1
            _full((C2, K2 * C1)), _full((C2, 1)),               # conv2
            _full((C3, K3 * C2)), _full((C3, 1)),               # conv3
            _full((H, N_HID)), _full((1, N_HID)),               # fc1
            _full((N_HID, out_classes)), _full((1, out_classes)),  # fc2
        ],
        out_specs=pl.BlockSpec((1, 1, out_classes), lambda b: (b, 0, 0)),
        scratch_shapes=[
            pltpu.VMEM((C0, LP0), jnp.float32),        # padded input
            pltpu.VMEM((C1, LP1), jnp.float32),        # padded act 1
            pltpu.VMEM((C2, LP2), jnp.float32),        # padded act 2
            pltpu.VMEM((K1 * C0, L1), jnp.float32),    # im2col patches 1
            pltpu.VMEM((K2 * C1, LF2), jnp.float32),   # im2col patches 2
            pltpu.VMEM((K3 * C2, LF3), jnp.float32),   # im2col patches 3
        ],
    )
    call = pl.pallas_call(
        _cnn_kernel,
        out_shape=jax.ShapeDtypeStruct((batch, 1, out_classes), jnp.float32),
        grid_spec=grid_spec,
        compiler_params=pltpu.CompilerParams(dimension_semantics=("parallel",)),
        cost_estimate=_cost_estimate(batch, out_classes),
    )

    def forward(x_ncl, prep):
        out = call(x_ncl, *prep)
        return out.reshape(batch, out_classes)

    return forward


# ----------------------------------------------------------------------------
# Pure-JAX reference (mirrors the PyTorch forward) for a correctness check
# ----------------------------------------------------------------------------
def _ref_conv1d(x, W, b, stride, pad):
    y = lax.conv_general_dilated(x, W, (stride,), [(pad, pad)],
                                 dimension_numbers=('NCH', 'OIH', 'NCH'))
    return y + b[None, :, None]


def _ref_pool2(y):
    B, C, L = y.shape
    Lp = (L // 2) * 2
    return jnp.max(y[:, :, :Lp].reshape(B, C, Lp // 2, 2), axis=-1)


def cnn_reference(x, params):
    (W1, b1, W2, b2, W3, b3, Wf1, bf1, Wf2, bf2) = params
    y = jnp.maximum(_ref_conv1d(x, W1, b1, 1, 30), 0.0)
    y = jnp.maximum(_ref_pool2(_ref_conv1d(y, W2, b2, 2, 30)), 0.0)
    y = jnp.maximum(_ref_pool2(_ref_conv1d(y, W3, b3, 2, 30)), 0.0)
    f = y.reshape(y.shape[0], -1)
    h = jnp.tanh(f @ Wf1.T + bf1)
    return h @ Wf2.T + bf2


if __name__ == "__main__":
    key = jax.random.PRNGKey(0)
    ks = jax.random.split(key, 11)

    def uinit(k, shape, fan_in):
        bound = 1.0 / float(np.sqrt(fan_in))
        return jax.random.uniform(k, shape, jnp.float32, -bound, bound)

    # Deterministic parameters, shapes exactly as in the PyTorch __init__.
    W1 = uinit(ks[0], (C1, C0, K1), C0 * K1);   b1 = uinit(ks[1], (C1,), C0 * K1)
    W2 = uinit(ks[2], (C2, C1, K2), C1 * K2);   b2 = uinit(ks[3], (C2,), C1 * K2)
    W3 = uinit(ks[4], (C3, C2, K3), C2 * K3);   b3 = uinit(ks[5], (C3,), C2 * K3)
    Wf1 = uinit(ks[6], (N_HID, H), H);          bf1 = uinit(ks[7], (N_HID,), H)
    Wf2 = uinit(ks[8], (2, N_HID), N_HID);      bf2 = uinit(ks[9], (2,), N_HID)
    params = (W1, b1, W2, b2, W3, b3, Wf1, bf1, Wf2, bf2)

    # Input NCL: batch=2, in_chann=2, L=250. The module's view(-1, 20*29) pins
    # the spatial extent; L=250 yields exactly 29 positions after the conv stack.
    x = jax.random.normal(ks[10], (2, C0, L_IN), jnp.float32)

    prep = prepare_params(params)               # one-time weight re-layout
    forward = jax.jit(build_cnn_forward(batch=2, out_classes=2))
    out = jax.block_until_ready(forward(x, prep))
    assert out.shape == (2, 2)

    ref = cnn_reference(x, params)
    np.testing.assert_allclose(np.asarray(out), np.asarray(ref),
                               rtol=2e-2, atol=2e-2)

    print("KERNEL_OK")
</pallas_src>

<mosaic_0001>
module attributes {stable_mosaic.version = 11 : i64} {
  func.func @_cnn_kernel(%arg0: i32, %arg1: memref<1x2x250xf32, #tpu.memory_space<vmem>>, %arg2: memref<5x120xf32, #tpu.memory_space<vmem>>, %arg3: memref<5x1xf32, #tpu.memory_space<vmem>>, %arg4: memref<10x150xf32, #tpu.memory_space<vmem>>, %arg5: memref<10x1xf32, #tpu.memory_space<vmem>>, %arg6: memref<20x150xf32, #tpu.memory_space<vmem>>, %arg7: memref<20x1xf32, #tpu.memory_space<vmem>>, %arg8: memref<580x100xf32, #tpu.memory_space<vmem>>, %arg9: memref<1x100xf32, #tpu.memory_space<vmem>>, %arg10: memref<100x2xf32, #tpu.memory_space<vmem>>, %arg11: memref<1x2xf32, #tpu.memory_space<vmem>>, %arg12: memref<1x1x2xf32, #tpu.memory_space<vmem>>, %arg13: memref<2x310xf32, #tpu.memory_space<vmem>>, %arg14: memref<5x311xf32, #tpu.memory_space<vmem>>, %arg15: memref<10x130xf32, #tpu.memory_space<vmem>>, %arg16: memref<120x251xf32, #tpu.memory_space<vmem>>, %arg17: memref<150x282xf32, #tpu.memory_space<vmem>>, %arg18: memref<150x116xf32, #tpu.memory_space<vmem>>) attributes {dimension_semantics = [#tpu.dimension_semantics<parallel>], iteration_bounds = array<i64: 2>, scalar_prefetch = 0 : i64, scratch_operands = 6 : i64, tpu.core_type = #tpu.core_type<tc>, window_params = [{transform_indices = @transform_0, window_bounds = array<i64: 1, 2, 250>}, {pipeline_mode = #tpu.pipeline_mode<synchronous>, transform_indices = @transform_1, window_bounds = array<i64: 5, 120>}, {pipeline_mode = #tpu.pipeline_mode<synchronous>, transform_indices = @transform_2, window_bounds = array<i64: 5, 1>}, {pipeline_mode = #tpu.pipeline_mode<synchronous>, transform_indices = @transform_3, window_bounds = array<i64: 10, 150>}, {pipeline_mode = #tpu.pipeline_mode<synchronous>, transform_indices = @transform_4, window_bounds = array<i64: 10, 1>}, {pipeline_mode = #tpu.pipeline_mode<synchronous>, transform_indices = @transform_5, window_bounds = array<i64: 20, 150>}, {pipeline_mode = #tpu.pipeline_mode<synchronous>, transform_indices = @transform_6, window_bounds = array<i64: 20, 1>}, {pipeline_mode = #tpu.pipeline_mode<synchronous>, transform_indices = @transform_7, window_bounds = array<i64: 580, 100>}, {pipeline_mode = #tpu.pipeline_mode<synchronous>, transform_indices = @transform_8, window_bounds = array<i64: 1, 100>}, {pipeline_mode = #tpu.pipeline_mode<synchronous>, transform_indices = @transform_9, window_bounds = array<i64: 100, 2>}, {pipeline_mode = #tpu.pipeline_mode<synchronous>, transform_indices = @transform_10, window_bounds = array<i64: 1, 2>}, {transform_indices = @transform_11, window_bounds = array<i64: 1, 1, 2>}]} {
    %cst = arith.constant 0.000000e+00 : f32
    %0 = vector.broadcast %cst : f32 to vector<2x310xf32>
    %c0 = arith.constant 0 : index
    %c0_0 = arith.constant 0 : index
    %1 = vector.load %arg13[%c0, %c0_0] : memref<2x310xf32, #tpu.memory_space<vmem>>, vector<2x310xf32>
    tpu.vector_store %arg13[%c0, %c0_0], %0 {strides = array<i32>} : memref<2x310xf32, #tpu.memory_space<vmem>>, vector<2x310xf32>,
    %c0_1 = arith.constant 0 : index
    %c0_2 = arith.constant 0 : index
    %c0_3 = arith.constant 0 : index
    %2 = vector.load %arg1[%c0_1, %c0_2, %c0_3] : memref<1x2x250xf32, #tpu.memory_space<vmem>>, vector<1x2x250xf32>
    %3 = vector.shape_cast %2 : vector<1x2x250xf32> to vector<2x250xf32>
    %c0_4 = arith.constant 0 : index
    %c30 = arith.constant 30 : index
    %4 = vector.load %arg13[%c0_4, %c30] : memref<2x310xf32, #tpu.memory_space<vmem>>, vector<2x250xf32>
    tpu.vector_store %arg13[%c0_4, %c30], %3 {strides = array<i32>} : memref<2x310xf32, #tpu.memory_space<vmem>>, vector<2x250xf32>,
    %c0_5 = arith.constant 0 : index
    %c0_6 = arith.constant 0 : index
    %5 = vector.load %arg13[%c0_5, %c0_6] : memref<2x310xf32, #tpu.memory_space<vmem>>, vector<2x251xf32>
    %c0_7 = arith.constant 0 : index
    %c0_8 = arith.constant 0 : index
    %6 = vector.load %arg16[%c0_7, %c0_8] : memref<120x251xf32, #tpu.memory_space<vmem>>, vector<2x251xf32>
    tpu.vector_store %arg16[%c0_7, %c0_8], %5 {strides = array<i32>} : memref<120x251xf32, #tpu.memory_space<vmem>>, vector<2x251xf32>,
    %c0_9 = arith.constant 0 : index
    %c1 = arith.constant 1 : index
    %7 = vector.load %arg13[%c0_9, %c1] : memref<2x310xf32, #tpu.memory_space<vmem>>, vector<2x251xf32>
    %c2 = arith.constant 2 : index
    %c0_10 = arith.constant 0 : index
    %8 = vector.load %arg16[%c2, %c0_10] : memref<120x251xf32, #tpu.memory_space<vmem>>, vector<2x251xf32>
    tpu.vector_store %arg16[%c2, %c0_10], %7 {strides = array<i32>} : memref<120x251xf32, #tpu.memory_space<vmem>>, vector<2x251xf32>,
    %c0_11 = arith.constant 0 : index
    %c2_12 = arith.constant 2 : index
    %9 = vector.load %arg13[%c0_11, %c2_12] : memref<2x310xf32, #tpu.memory_space<vmem>>, vector<2x251xf32>
    %c4 = arith.constant 4 : index
    %c0_13 = arith.constant 0 : index
    %10 = vector.load %arg16[%c4, %c0_13] : memref<120x251xf32, #tpu.memory_space<vmem>>, vector<2x251xf32>
    tpu.vector_store %arg16[%c4, %c0_13], %9 {strides = array<i32>} : memref<120x251xf32, #tpu.memory_space<vmem>>, vector<2x251xf32>,
    %c0_14 = arith.constant 0 : index
    %c3 = arith.constant 3 : index
    %11 = vector.load %arg13[%c0_14, %c3] : memref<2x310xf32, #tpu.memory_space<vmem>>, vector<2x251xf32>
    %c6 = arith.constant 6 : index
    %c0_15 = arith.constant 0 : index
    %12 = vector.load %arg16[%c6, %c0_15] : memref<120x251xf32, #tpu.memory_space<vmem>>, vector<2x251xf32>
    tpu.vector_store %arg16[%c6, %c0_15], %11 {strides = array<i32>} : memref<120x251xf32, #tpu.memory_space<vmem>>, vector<2x251xf32>,
    %c0_16 = arith.constant 0 : index
    %c4_17 = arith.constant 4 : index
    %13 = vector.load %arg13[%c0_16, %c4_17] : memref<2x310xf32, #tpu.memory_space<vmem>>, vector<2x251xf32>
    %c8 = arith.constant 8 : index
    %c0_18 = arith.constant 0 : index
    %14 = vector.load %arg16[%c8, %c0_18] : memref<120x251xf32, #tpu.memory_space<vmem>>, vector<2x251xf32>
    tpu.vector_store %arg16[%c8, %c0_18], %13 {strides = array<i32>} : memref<120x251xf32, #tpu.memory_space<vmem>>, vector<2x251xf32>,
    %c0_19 = arith.constant 0 : index
    %c5 = arith.constant 5 : index
    %15 = vector.load %arg13[%c0_19, %c5] : memref<2x310xf32, #tpu.memory_space<vmem>>, vector<2x251xf32>
    %c10 = arith.constant 10 : index
    %c0_20 = arith.constant 0 : index
    %16 = vector.load %arg16[%c10, %c0_20] : memref<120x251xf32, #tpu.memory_space<vmem>>, vector<2x251xf32>
    tpu.vector_store %arg16[%c10, %c0_20], %15 {strides = array<i32>} : memref<120x251xf32, #tpu.memory_space<vmem>>, vector<2x251xf32>,
    %c0_21 = arith.constant 0 : index
    %c6_22 = arith.constant 6 : index
    %17 = vector.load %arg13[%c0_21, %c6_22] : memref<2x310xf32, #tpu.memory_space<vmem>>, vector<2x251xf32>
    %c12 = arith.constant 12 : index
    %c0_23 = arith.constant 0 : index
    %18 = vector.load %arg16[%c12, %c0_23] : memref<120x251xf32, #tpu.memory_space<vmem>>, vector<2x251xf32>
    tpu.vector_store %arg16[%c12, %c0_23], %17 {strides = array<i32>} : memref<120x251xf32, #tpu.memory_space<vmem>>, vector<2x251xf32>,
    %c0_24 = arith.constant 0 : index
    %c7 = arith.constant 7 : index
    %19 = vector.load %arg13[%c0_24, %c7] : memref<2x310xf32, #tpu.memory_space<vmem>>, vector<2x251xf32>
    %c14 = arith.constant 14 : index
    %c0_25 = arith.constant 0 : index
    %20 = vector.load %arg16[%c14, %c0_25] : memref<120x251xf32, #tpu.memory_space<vmem>>, vector<2x251xf32>
    tpu.vector_store %arg16[%c14, %c0_25], %19 {strides = array<i32>} : memref<120x251xf32, #tpu.memory_space<vmem>>, vector<2x251xf32>,
    %c0_26 = arith.constant 0 : index
    %c8_27 = arith.constant 8 : index
    %21 = vector.load %arg13[%c0_26, %c8_27] : memref<2x310xf32, #tpu.memory_space<vmem>>, vector<2x251xf32>
    %c16 = arith.constant 16 : index
    %c0_28 = arith.constant 0 : index
    %22 = vector.load %arg16[%c16, %c0_28] : memref<120x251xf32, #tpu.memory_space<vmem>>, vector<2x251xf32>
    tpu.vector_store %arg16[%c16, %c0_28], %21 {strides = array<i32>} : memref<120x251xf32, #tpu.memory_space<vmem>>, vector<2x251xf32>,
    %c0_29 = arith.constant 0 : index
    %c9 = arith.constant 9 : index
    %23 = vector.load %arg13[%c0_29, %c9] : memref<2x310xf32, #tpu.memory_space<vmem>>, vector<2x251xf32>
    %c18 = arith.constant 18 : index
    %c0_30 = arith.constant 0 : index
    %24 = vector.load %arg16[%c18, %c0_30] : memref<120x251xf32, #tpu.memory_space<vmem>>, vector<2x251xf32>
    tpu.vector_store %arg16[%c18, %c0_30], %23 {strides = array<i32>} : memref<120x251xf32, #tpu.memory_space<vmem>>, vector<2x251xf32>,
    %c0_31 = arith.constant 0 : index
    %c10_32 = arith.constant 10 : index
    %25 = vector.load %arg13[%c0_31, %c10_32] : memref<2x310xf32, #tpu.memory_space<vmem>>, vector<2x251xf32>
    %c20 = arith.constant 20 : index
    %c0_33 = arith.constant 0 : index
    %26 = vector.load %arg16[%c20, %c0_33] : memref<120x251xf32, #tpu.memory_space<vmem>>, vector<2x251xf32>
    tpu.vector_store %arg16[%c20, %c0_33], %25 {strides = array<i32>} : memref<120x251xf32, #tpu.memory_space<vmem>>, vector<2x251xf32>,
    %c0_34 = arith.constant 0 : index
    %c11 = arith.constant 11 : index
    %27 = vector.load %arg13[%c0_34, %c11] : memref<2x310xf32, #tpu.memory_space<vmem>>, vector<2x251xf32>
    %c22 = arith.constant 22 : index
    %c0_35 = arith.constant 0 : index
    %28 = vector.load %arg16[%c22, %c0_35] : memref<120x251xf32, #tpu.memory_space<vmem>>, vector<2x251xf32>
    tpu.vector_store %arg16[%c22, %c0_35], %27 {strides = array<i32>} : memref<120x251xf32, #tpu.memory_space<vmem>>, vector<2x251xf32>,
    %c0_36 = arith.constant 0 : index
    %c12_37 = arith.constant 12 : index
    %29 = vector.load %arg13[%c0_36, %c12_37] : memref<2x310xf32, #tpu.memory_space<vmem>>, vector<2x251xf32>
    %c24 = arith.constant 24 : index
    %c0_38 = arith.constant 0 : index
    %30 = vector.load %arg16[%c24, %c0_38] : memref<120x251xf32, #tpu.memory_space<vmem>>, vector<2x251xf32>
    tpu.vector_store %arg16[%c24, %c0_38], %29 {strides = array<i32>} : memref<120x251xf32, #tpu.memory_space<vmem>>, vector<2x251xf32>,
    %c0_39 = arith.constant 0 : index
    %c13 = arith.constant 13 : index
    %31 = vector.load %arg13[%c0_39, %c13] : memref<2x310xf32, #tpu.memory_space<vmem>>, vector<2x251xf32>
    %c26 = arith.constant 26 : index
    %c0_40 = arith.constant 0 : index
    %32 = vector.load %arg16[%c26, %c0_40] : memref<120x251xf32, #tpu.memory_space<vmem>>, vector<2x251xf32>
    tpu.vector_store %arg16[%c26, %c0_40], %31 {strides = array<i32>} : memref<120x251xf32, #tpu.memory_space<vmem>>, vector<2x251xf32>,
    %c0_41 = arith.constant 0 : index
    %c14_42 = arith.constant 14 : index
    %33 = vector.load %arg13[%c0_41, %c14_42] : memref<2x310xf32, #tpu.memory_space<vmem>>, vector<2x251xf32>
    %c28 = arith.constant 28 : index
    %c0_43 = arith.constant 0 : index
    %34 = vector.load %arg16[%c28, %c0_43] : memref<120x251xf32, #tpu.memory_space<vmem>>, vector<2x251xf32>
    tpu.vector_store %arg16[%c28, %c0_43], %33 {strides = array<i32>} : memref<120x251xf32, #tpu.memory_space<vmem>>, vector<2x251xf32>,
    %c0_44 = arith.constant 0 : index
    %c15 = arith.constant 15 : index
    %35 = vector.load %arg13[%c0_44, %c15] : memref<2x310xf32, #tpu.memory_space<vmem>>, vector<2x251xf32>
    %c30_45 = arith.constant 30 : index
    %c0_46 = arith.constant 0 : index
    %36 = vector.load %arg16[%c30_45, %c0_46] : memref<120x251xf32, #tpu.memory_space<vmem>>, vector<2x251xf32>
    tpu.vector_store %arg16[%c30_45, %c0_46], %35 {strides = array<i32>} : memref<120x251xf32, #tpu.memory_space<vmem>>, vector<2x251xf32>,
    %c0_47 = arith.constant 0 : index
    %c16_48 = arith.constant 16 : index
    %37 = vector.load %arg13[%c0_47, %c16_48] : memref<2x310xf32, #tpu.memory_space<vmem>>, vector<2x251xf32>
    %c32 = arith.constant 32 : index
    %c0_49 = arith.constant 0 : index
    %38 = vector.load %arg16[%c32, %c0_49] : memref<120x251xf32, #tpu.memory_space<vmem>>, vector<2x251xf32>
    tpu.vector_store %arg16[%c32, %c0_49], %37 {strides = array<i32>} : memref<120x251xf32, #tpu.memory_space<vmem>>, vector<2x251xf32>,
    %c0_50 = arith.constant 0 : index
    %c17 = arith.constant 17 : index
    %39 = vector.load %arg13[%c0_50, %c17] : memref<2x310xf32, #tpu.memory_space<vmem>>, vector<2x251xf32>
    %c34 = arith.constant 34 : index
    %c0_51 = arith.constant 0 : index
    %40 = vector.load %arg16[%c34, %c0_51] : memref<120x251xf32, #tpu.memory_space<vmem>>, vector<2x251xf32>
    tpu.vector_store %arg16[%c34, %c0_51], %39 {strides = array<i32>} : memref<120x251xf32, #tpu.memory_space<vmem>>, vector<2x251xf32>,
    %c0_52 = arith.constant 0 : index
    %c18_53 = arith.constant 18 : index
    %41 = vector.load %arg13[%c0_52, %c18_53] : memref<2x310xf32, #tpu.memory_space<vmem>>, vector<2x251xf32>
    %c36 = arith.constant 36 : index
    %c0_54 = arith.constant 0 : index
    %42 = vector.load %arg16[%c36, %c0_54] : memref<120x251xf32, #tpu.memory_space<vmem>>, vector<2x251xf32>
    tpu.vector_store %arg16[%c36, %c0_54], %41 {strides = array<i32>} : memref<120x251xf32, #tpu.memory_space<vmem>>, vector<2x251xf32>,
    %c0_55 = arith.constant 0 : index
    %c19 = arith.constant 19 : index
    %43 = vector.load %arg13[%c0_55, %c19] : memref<2x310xf32, #tpu.memory_space<vmem>>, vector<2x251xf32>
    %c38 = arith.constant 38 : index
    %c0_56 = arith.constant 0 : index
    %44 = vector.load %arg16[%c38, %c0_56] : memref<120x251xf32, #tpu.memory_space<vmem>>, vector<2x251xf32>
    tpu.vector_store %arg16[%c38, %c0_56], %43 {strides = array<i32>} : memref<120x251xf32, #tpu.memory_space<vmem>>, vector<2x251xf32>,
    %c0_57 = arith.constant 0 : index
    %c20_58 = arith.constant 20 : index
    %45 = vector.load %arg13[%c0_57, %c20_58] : memref<2x310xf32, #tpu.memory_space<vmem>>, vector<2x251xf32>
    %c40 = arith.constant 40 : index
    %c0_59 = arith.constant 0 : index
    %46 = vector.load %arg16[%c40, %c0_59] : memref<120x251xf32, #tpu.memory_space<vmem>>, vector<2x251xf32>
    tpu.vector_store %arg16[%c40, %c0_59], %45 {strides = array<i32>} : memref<120x251xf32, #tpu.memory_space<vmem>>, vector<2x251xf32>,
    %c0_60 = arith.constant 0 : index
    %c21 = arith.constant 21 : index
    %47 = vector.load %arg13[%c0_60, %c21] : memref<2x310xf32, #tpu.memory_space<vmem>>, vector<2x251xf32>
    %c42 = arith.constant 42 : index
    %c0_61 = arith.constant 0 : index
    %48 = vector.load %arg16[%c42, %c0_61] : memref<120x251xf32, #tpu.memory_space<vmem>>, vector<2x251xf32>
    tpu.vector_store %arg16[%c42, %c0_61], %47 {strides = array<i32>} : memref<120x251xf32, #tpu.memory_space<vmem>>, vector<2x251xf32>,
    %c0_62 = arith.constant 0 : index
    %c22_63 = arith.constant 22 : index
    %49 = vector.load %arg13[%c0_62, %c22_63] : memref<2x310xf32, #tpu.memory_space<vmem>>, vector<2x251xf32>
    %c44 = arith.constant 44 : index
    %c0_64 = arith.constant 0 : index
    %50 = vector.load %arg16[%c44, %c0_64] : memref<120x251xf32, #tpu.memory_space<vmem>>, vector<2x251xf32>
    tpu.vector_store %arg16[%c44, %c0_64], %49 {strides = array<i32>} : memref<120x251xf32, #tpu.memory_space<vmem>>, vector<2x251xf32>,
    %c0_65 = arith.constant 0 : index
    %c23 = arith.constant 23 : index
    %51 = vector.load %arg13[%c0_65, %c23] : memref<2x310xf32, #tpu.memory_space<vmem>>, vector<2x251xf32>
    %c46 = arith.constant 46 : index
    %c0_66 = arith.constant 0 : index
    %52 = vector.load %arg16[%c46, %c0_66] : memref<120x251xf32, #tpu.memory_space<vmem>>, vector<2x251xf32>
    tpu.vector_store %arg16[%c46, %c0_66], %51 {strides = array<i32>} : memref<120x251xf32, #tpu.memory_space<vmem>>, vector<2x251xf32>,
    %c0_67 = arith.constant 0 : index
    %c24_68 = arith.constant 24 : index
    %53 = vector.load %arg13[%c0_67, %c24_68] : memref<2x310xf32, #tpu.memory_space<vmem>>, vector<2x251xf32>
    %c48 = arith.constant 48 : index
    %c0_69 = arith.constant 0 : index
    %54 = vector.load %arg16[%c48, %c0_69] : memref<120x251xf32, #tpu.memory_space<vmem>>, vector<2x251xf32>
    tpu.vector_store %arg16[%c48, %c0_69], %53 {strides = array<i32>} : memref<120x251xf32, #tpu.memory_space<vmem>>, vector<2x251xf32>,
    %c0_70 = arith.constant 0 : index
    %c25 = arith.constant 25 : index
    %55 = vector.load %arg13[%c0_70, %c25] : memref<2x310xf32, #tpu.memory_space<vmem>>, vector<2x251xf32>
    %c50 = arith.constant 50 : index
    %c0_71 = arith.constant 0 : index
    %56 = vector.load %arg16[%c50, %c0_71] : memref<120x251xf32, #tpu.memory_space<vmem>>, vector<2x251xf32>
    tpu.vector_store %arg16[%c50, %c0_71], %55 {strides = array<i32>} : memref<120x251xf32, #tpu.memory_space<vmem>>, vector<2x251xf32>,
    %c0_72 = arith.constant 0 : index
    %c26_73 = arith.constant 26 : index
    %57 = vector.load %arg13[%c0_72, %c26_73] : memref<2x310xf32, #tpu.memory_space<vmem>>, vector<2x251xf32>
    %c52 = arith.constant 52 : index
    %c0_74 = arith.constant 0 : index
    %58 = vector.load %arg16[%c52, %c0_74] : memref<120x251xf32, #tpu.memory_space<vmem>>, vector<2x251xf32>
    tpu.vector_store %arg16[%c52, %c0_74], %57 {strides = array<i32>} : memref<120x251xf32, #tpu.memory_space<vmem>>, vector<2x251xf32>,
    %c0_75 = arith.constant 0 : index
    %c27 = arith.constant 27 : index
    %59 = vector.load %arg13[%c0_75, %c27] : memref<2x310xf32, #tpu.memory_space<vmem>>, vector<2x251xf32>
    %c54 = arith.constant 54 : index
    %c0_76 = arith.constant 0 : index
    %60 = vector.load %arg16[%c54, %c0_76] : memref<120x251xf32, #tpu.memory_space<vmem>>, vector<2x251xf32>
    tpu.vector_store %arg16[%c54, %c0_76], %59 {strides = array<i32>} : memref<120x251xf32, #tpu.memory_space<vmem>>, vector<2x251xf32>,
    %c0_77 = arith.constant 0 : index
    %c28_78 = arith.constant 28 : index
    %61 = vector.load %arg13[%c0_77, %c28_78] : memref<2x310xf32, #tpu.memory_space<vmem>>, vector<2x251xf32>
    %c56 = arith.constant 56 : index
    %c0_79 = arith.constant 0 : index
    %62 = vector.load %arg16[%c56, %c0_79] : memref<120x251xf32, #tpu.memory_space<vmem>>, vector<2x251xf32>
    tpu.vector_store %arg16[%c56, %c0_79], %61 {strides = array<i32>} : memref<120x251xf32, #tpu.memory_space<vmem>>, vector<2x251xf32>,
    %c0_80 = arith.constant 0 : index
    %c29 = arith.constant 29 : index
    %63 = vector.load %arg13[%c0_80, %c29] : memref<2x310xf32, #tpu.memory_space<vmem>>, vector<2x251xf32>
    %c58 = arith.constant 58 : index
    %c0_81 = arith.constant 0 : index
    %64 = vector.load %arg16[%c58, %c0_81] : memref<120x251xf32, #tpu.memory_space<vmem>>, vector<2x251xf32>
    tpu.vector_store %arg16[%c58, %c0_81], %63 {strides = array<i32>} : memref<120x251xf32, #tpu.memory_space<vmem>>, vector<2x251xf32>,
    %c0_82 = arith.constant 0 : index
    %c30_83 = arith.constant 30 : index
    %65 = vector.load %arg13[%c0_82, %c30_83] : memref<2x310xf32, #tpu.memory_space<vmem>>, vector<2x251xf32>
    %c60 = arith.constant 60 : index
    %c0_84 = arith.constant 0 : index
    %66 = vector.load %arg16[%c60, %c0_84] : memref<120x251xf32, #tpu.memory_space<vmem>>, vector<2x251xf32>
    tpu.vector_store %arg16[%c60, %c0_84], %65 {strides = array<i32>} : memref<120x251xf32, #tpu.memory_space<vmem>>, vector<2x251xf32>,
    %c0_85 = arith.constant 0 : index
    %c31 = arith.constant 31 : index
    %67 = vector.load %arg13[%c0_85, %c31] : memref<2x310xf32, #tpu.memory_space<vmem>>, vector<2x251xf32>
    %c62 = arith.constant 62 : index
    %c0_86 = arith.constant 0 : index
    %68 = vector.load %arg16[%c62, %c0_86] : memref<120x251xf32, #tpu.memory_space<vmem>>, vector<2x251xf32>
    tpu.vector_store %arg16[%c62, %c0_86], %67 {strides = array<i32>} : memref<120x251xf32, #tpu.memory_space<vmem>>, vector<2x251xf32>,
    %c0_87 = arith.constant 0 : index
    %c32_88 = arith.constant 32 : index
    %69 = vector.load %arg13[%c0_87, %c32_88] : memref<2x310xf32, #tpu.memory_space<vmem>>, vector<2x251xf32>
    %c64 = arith.constant 64 : index
    %c0_89 = arith.constant 0 : index
    %70 = vector.load %arg16[%c64, %c0_89] : memref<120x251xf32, #tpu.memory_space<vmem>>, vector<2x251xf32>
    tpu.vector_store %arg16[%c64, %c0_89], %69 {strides = array<i32>} : memref<120x251xf32, #tpu.memory_space<vmem>>, vector<2x251xf32>,
    %c0_90 = arith.constant 0 : index
    %c33 = arith.constant 33 : index
    %71 = vector.load %arg13[%c0_90, %c33] : memref<2x310xf32, #tpu.memory_space<vmem>>, vector<2x251xf32>
    %c66 = arith.constant 66 : index
    %c0_91 = arith.constant 0 : index
    %72 = vector.load %arg16[%c66, %c0_91] : memref<120x251xf32, #tpu.memory_space<vmem>>, vector<2x251xf32>
    tpu.vector_store %arg16[%c66, %c0_91], %71 {strides = array<i32>} : memref<120x251xf32, #tpu.memory_space<vmem>>, vector<2x251xf32>,
    %c0_92 = arith.constant 0 : index
    %c34_93 = arith.constant 34 : index
    %73 = vector.load %arg13[%c0_92, %c34_93] : memref<2x310xf32, #tpu.memory_space<vmem>>, vector<2x251xf32>
    %c68 = arith.constant 68 : index
    %c0_94 = arith.constant 0 : index
    %74 = vector.load %arg16[%c68, %c0_94] : memref<120x251xf32, #tpu.memory_space<vmem>>, vector<2x251xf32>
    tpu.vector_store %arg16[%c68, %c0_94], %73 {strides = array<i32>} : memref<120x251xf32, #tpu.memory_space<vmem>>, vector<2x251xf32>,
    %c0_95 = arith.constant 0 : index
    %c35 = arith.constant 35 : index
    %75 = vector.load %arg13[%c0_95, %c35] : memref<2x310xf32, #tpu.memory_space<vmem>>, vector<2x251xf32>
    %c70 = arith.constant 70 : index
    %c0_96 = arith.constant 0 : index
    %76 = vector.load %arg16[%c70, %c0_96] : memref<120x251xf32, #tpu.memory_space<vmem>>, vector<2x251xf32>
    tpu.vector_store %arg16[%c70, %c0_96], %75 {strides = array<i32>} : memref<120x251xf32, #tpu.memory_space<vmem>>, vector<2x251xf32>,
    %c0_97 = arith.constant 0 : index
    %c36_98 = arith.constant 36 : index
    %77 = vector.load %arg13[%c0_97, %c36_98] : memref<2x310xf32, #tpu.memory_space<vmem>>, vector<2x251xf32>
    %c72 = arith.constant 72 : index
    %c0_99 = arith.constant 0 : index
    %78 = vector.load %arg16[%c72, %c0_99] : memref<120x251xf32, #tpu.memory_space<vmem>>, vector<2x251xf32>
    tpu.vector_store %arg16[%c72, %c0_99], %77 {strides = array<i32>} : memref<120x251xf32, #tpu.memory_space<vmem>>, vector<2x251xf32>,
    %c0_100 = arith.constant 0 : index
    %c37 = arith.constant 37 : index
    %79 = vector.load %arg13[%c0_100, %c37] : memref<2x310xf32, #tpu.memory_space<vmem>>, vector<2x251xf32>
    %c74 = arith.constant 74 : index
    %c0_101 = arith.constant 0 : index
    %80 = vector.load %arg16[%c74, %c0_101] : memref<120x251xf32, #tpu.memory_space<vmem>>, vector<2x251xf32>
    tpu.vector_store %arg16[%c74, %c0_101], %79 {strides = array<i32>} : memref<120x251xf32, #tpu.memory_space<vmem>>, vector<2x251xf32>,
    %c0_102 = arith.constant 0 : index
    %c38_103 = arith.constant 38 : index
    %81 = vector.load %arg13[%c0_102, %c38_103] : memref<2x310xf32, #tpu.memory_space<vmem>>, vector<2x251xf32>
    %c76 = arith.constant 76 : index
    %c0_104 = arith.constant 0 : index
    %82 = vector.load %arg16[%c76, %c0_104] : memref<120x251xf32, #tpu.memory_space<vmem>>, vector<2x251xf32>
    tpu.vector_store %arg16[%c76, %c0_104], %81 {strides = array<i32>} : memref<120x251xf32, #tpu.memory_space<vmem>>, vector<2x251xf32>,
    %c0_105 = arith.constant 0 : index
    %c39 = arith.constant 39 : index
    %83 = vector.load %arg13[%c0_105, %c39] : memref<2x310xf32, #tpu.memory_space<vmem>>, vector<2x251xf32>
    %c78 = arith.constant 78 : index
    %c0_106 = arith.constant 0 : index
    %84 = vector.load %arg16[%c78, %c0_106] : memref<120x251xf32, #tpu.memory_space<vmem>>, vector<2x251xf32>
    tpu.vector_store %arg16[%c78, %c0_106], %83 {strides = array<i32>} : memref<120x251xf32, #tpu.memory_space<vmem>>, vector<2x251xf32>,
    %c0_107 = arith.constant 0 : index
    %c40_108 = arith.constant 40 : index
    %85 = vector.load %arg13[%c0_107, %c40_108] : memref<2x310xf32, #tpu.memory_space<vmem>>, vector<2x251xf32>
    %c80 = arith.constant 80 : index
    %c0_109 = arith.constant 0 : index
    %86 = vector.load %arg16[%c80, %c0_109] : memref<120x251xf32, #tpu.memory_space<vmem>>, vector<2x251xf32>
    tpu.vector_store %arg16[%c80, %c0_109], %85 {strides = array<i32>} : memref<120x251xf32, #tpu.memory_space<vmem>>, vector<2x251xf32>,
    %c0_110 = arith.constant 0 : index
    %c41 = arith.constant 41 : index
    %87 = vector.load %arg13[%c0_110, %c41] : memref<2x310xf32, #tpu.memory_space<vmem>>, vector<2x251xf32>
    %c82 = arith.constant 82 : index
    %c0_111 = arith.constant 0 : index
    %88 = vector.load %arg16[%c82, %c0_111] : memref<120x251xf32, #tpu.memory_space<vmem>>, vector<2x251xf32>
    tpu.vector_store %arg16[%c82, %c0_111], %87 {strides = array<i32>} : memref<120x251xf32, #tpu.memory_space<vmem>>, vector<2x251xf32>,
    %c0_112 = arith.constant 0 : index
    %c42_113 = arith.constant 42 : index
    %89 = vector.load %arg13[%c0_112, %c42_113] : memref<2x310xf32, #tpu.memory_space<vmem>>, vector<2x251xf32>
    %c84 = arith.constant 84 : index
    %c0_114 = arith.constant 0 : index
    %90 = vector.load %arg16[%c84, %c0_114] : memref<120x251xf32, #tpu.memory_space<vmem>>, vector<2x251xf32>
    tpu.vector_store %arg16[%c84, %c0_114], %89 {strides = array<i32>} : memref<120x251xf32, #tpu.memory_space<vmem>>, vector<2x251xf32>,
    %c0_115 = arith.constant 0 : index
    %c43 = arith.constant 43 : index
    %91 = vector.load %arg13[%c0_115, %c43] : memref<2x310xf32, #tpu.memory_space<vmem>>, vector<2x251xf32>
    %c86 = arith.constant 86 : index
    %c0_116 = arith.constant 0 : index
    %92 = vector.load %arg16[%c86, %c0_116] : memref<120x251xf32, #tpu.memory_space<vmem>>, vector<2x251xf32>
    tpu.vector_store %arg16[%c86, %c0_116], %91 {strides = array<i32>} : memref<120x251xf32, #tpu.memory_space<vmem>>, vector<2x251xf32>,
    %c0_117 = arith.constant 0 : index
    %c44_118 = arith.constant 44 : index
    %93 = vector.load %arg13[%c0_117, %c44_118] : memref<2x310xf32, #tpu.memory_space<vmem>>, vector<2x251xf32>
    %c88 = arith.constant 88 : index
    %c0_119 = arith.constant 0 : index
    %94 = vector.load %arg16[%c88, %c0_119] : memref<120x251xf32, #tpu.memory_space<vmem>>, vector<2x251xf32>
    tpu.vector_store %arg16[%c88, %c0_119], %93 {strides = array<i32>} : memref<120x251xf32, #tpu.memory_space<vmem>>, vector<2x251xf32>,
    %c0_120 = arith.constant 0 : index
    %c45 = arith.constant 45 : index
    %95 = vector.load %arg13[%c0_120, %c45] : memref<2x310xf32, #tpu.memory_space<vmem>>, vector<2x251xf32>
    %c90 = arith.constant 90 : index
    %c0_121 = arith.constant 0 : index
    %96 = vector.load %arg16[%c90, %c0_121] : memref<120x251xf32, #tpu.memory_space<vmem>>, vector<2x251xf32>
    tpu.vector_store %arg16[%c90, %c0_121], %95 {strides = array<i32>} : memref<120x251xf32, #tpu.memory_space<vmem>>, vector<2x251xf32>,
    %c0_122 = arith.constant 0 : index
    %c46_123 = arith.constant 46 : index
    %97 = vector.load %arg13[%c0_122, %c46_123] : memref<2x310xf32, #tpu.memory_space<vmem>>, vector<2x251xf32>
    %c92 = arith.constant 92 : index
    %c0_124 = arith.constant 0 : index
    %98 = vector.load %arg16[%c92, %c0_124] : memref<120x251xf32, #tpu.memory_space<vmem>>, vector<2x251xf32>
    tpu.vector_store %arg16[%c92, %c0_124], %97 {strides = array<i32>} : memref<120x251xf32, #tpu.memory_space<vmem>>, vector<2x251xf32>,
    %c0_125 = arith.constant 0 : index
    %c47 = arith.constant 47 : index
    %99 = vector.load %arg13[%c0_125, %c47] : memref<2x310xf32, #tpu.memory_space<vmem>>, vector<2x251xf32>
    %c94 = arith.constant 94 : index
    %c0_126 = arith.constant 0 : index
    %100 = vector.load %arg16[%c94, %c0_126] : memref<120x251xf32, #tpu.memory_space<vmem>>, vector<2x251xf32>
    tpu.vector_store %arg16[%c94, %c0_126], %99 {strides = array<i32>} : memref<120x251xf32, #tpu.memory_space<vmem>>, vector<2x251xf32>,
    %c0_127 = arith.constant 0 : index
    %c48_128 = arith.constant 48 : index
    %101 = vector.load %arg13[%c0_127, %c48_128] : memref<2x310xf32, #tpu.memory_space<vmem>>, vector<2x251xf32>
    %c96 = arith.constant 96 : index
    %c0_129 = arith.constant 0 : index
    %102 = vector.load %arg16[%c96, %c0_129] : memref<120x251xf32, #tpu.memory_space<vmem>>, vector<2x251xf32>
    tpu.vector_store %arg16[%c96, %c0_129], %101 {strides = array<i32>} : memref<120x251xf32, #tpu.memory_space<vmem>>, vector<2x251xf32>,
    %c0_130 = arith.constant 0 : index
    %c49 = arith.constant 49 : index
    %103 = vector.load %arg13[%c0_130, %c49] : memref<2x310xf32, #tpu.memory_space<vmem>>, vector<2x251xf32>
    %c98 = arith.constant 98 : index
    %c0_131 = arith.constant 0 : index
    %104 = vector.load %arg16[%c98, %c0_131] : memref<120x251xf32, #tpu.memory_space<vmem>>, vector<2x251xf32>
    tpu.vector_store %arg16[%c98, %c0_131], %103 {strides = array<i32>} : memref<120x251xf32, #tpu.memory_space<vmem>>, vector<2x251xf32>,
    %c0_132 = arith.constant 0 : index
    %c50_133 = arith.constant 50 : index
    %105 = vector.load %arg13[%c0_132, %c50_133] : memref<2x310xf32, #tpu.memory_space<vmem>>, vector<2x251xf32>
    %c100 = arith.constant 100 : index
    %c0_134 = arith.constant 0 : index
    %106 = vector.load %arg16[%c100, %c0_134] : memref<120x251xf32, #tpu.memory_space<vmem>>, vector<2x251xf32>
    tpu.vector_store %arg16[%c100, %c0_134], %105 {strides = array<i32>} : memref<120x251xf32, #tpu.memory_space<vmem>>, vector<2x251xf32>,
    %c0_135 = arith.constant 0 : index
    %c51 = arith.constant 51 : index
    %107 = vector.load %arg13[%c0_135, %c51] : memref<2x310xf32, #tpu.memory_space<vmem>>, vector<2x251xf32>
    %c102 = arith.constant 102 : index
    %c0_136 = arith.constant 0 : index
    %108 = vector.load %arg16[%c102, %c0_136] : memref<120x251xf32, #tpu.memory_space<vmem>>, vector<2x251xf32>
    tpu.vector_store %arg16[%c102, %c0_136], %107 {strides = array<i32>} : memref<120x251xf32, #tpu.memory_space<vmem>>, vector<2x251xf32>,
    %c0_137 = arith.constant 0 : index
    %c52_138 = arith.constant 52 : index
    %109 = vector.load %arg13[%c0_137, %c52_138] : memref<2x310xf32, #tpu.memory_space<vmem>>, vector<2x251xf32>
    %c104 = arith.constant 104 : index
    %c0_139 = arith.constant 0 : index
    %110 = vector.load %arg16[%c104, %c0_139] : memref<120x251xf32, #tpu.memory_space<vmem>>, vector<2x251xf32>
    tpu.vector_store %arg16[%c104, %c0_139], %109 {strides = array<i32>} : memref<120x251xf32, #tpu.memory_space<vmem>>, vector<2x251xf32>,
    %c0_140 = arith.constant 0 : index
    %c53 = arith.constant 53 : index
    %111 = vector.load %arg13[%c0_140, %c53] : memref<2x310xf32, #tpu.memory_space<vmem>>, vector<2x251xf32>
    %c106 = arith.constant 106 : index
    %c0_141 = arith.constant 0 : index
    %112 = vector.load %arg16[%c106, %c0_141] : memref<120x251xf32, #tpu.memory_space<vmem>>, vector<2x251xf32>
    tpu.vector_store %arg16[%c106, %c0_141], %111 {strides = array<i32>} : memref<120x251xf32, #tpu.memory_space<vmem>>, vector<2x251xf32>,
    %c0_142 = arith.constant 0 : index
    %c54_143 = arith.constant 54 : index
    %113 = vector.load %arg13[%c0_142, %c54_143] : memref<2x310xf32, #tpu.memory_space<vmem>>, vector<2x251xf32>
    %c108 = arith.constant 108 : index
    %c0_144 = arith.constant 0 : index
    %114 = vector.load %arg16[%c108, %c0_144] : memref<120x251xf32, #tpu.memory_space<vmem>>, vector<2x251xf32>
    tpu.vector_store %arg16[%c108, %c0_144], %113 {strides = array<i32>} : memref<120x251xf32, #tpu.memory_space<vmem>>, vector<2x251xf32>,
    %c0_145 = arith.constant 0 : index
    %c55 = arith.constant 55 : index
    %115 = vector.load %arg13[%c0_145, %c55] : memref<2x310xf32, #tpu.memory_space<vmem>>, vector<2x251xf32>
    %c110 = arith.constant 110 : index
    %c0_146 = arith.constant 0 : index
    %116 = vector.load %arg16[%c110, %c0_146] : memref<120x251xf32, #tpu.memory_space<vmem>>, vector<2x251xf32>
    tpu.vector_store %arg16[%c110, %c0_146], %115 {strides = array<i32>} : memref<120x251xf32, #tpu.memory_space<vmem>>, vector<2x251xf32>,
    %c0_147 = arith.constant 0 : index
    %c56_148 = arith.constant 56 : index
    %117 = vector.load %arg13[%c0_147, %c56_148] : memref<2x310xf32, #tpu.memory_space<vmem>>, vector<2x251xf32>
    %c112 = arith.constant 112 : index
    %c0_149 = arith.constant 0 : index
    %118 = vector.load %arg16[%c112, %c0_149] : memref<120x251xf32, #tpu.memory_space<vmem>>, vector<2x251xf32>
    tpu.vector_store %arg16[%c112, %c0_149], %117 {strides = array<i32>} : memref<120x251xf32, #tpu.memory_space<vmem>>, vector<2x251xf32>,
    %c0_150 = arith.constant 0 : index
    %c57 = arith.constant 57 : index
    %119 = vector.load %arg13[%c0_150, %c57] : memref<2x310xf32, #tpu.memory_space<vmem>>, vector<2x251xf32>
    %c114 = arith.constant 114 : index
    %c0_151 = arith.constant 0 : index
    %120 = vector.load %arg16[%c114, %c0_151] : memref<120x251xf32, #tpu.memory_space<vmem>>, vector<2x251xf32>
    tpu.vector_store %arg16[%c114, %c0_151], %119 {strides = array<i32>} : memref<120x251xf32, #tpu.memory_space<vmem>>, vector<2x251xf32>,
    %c0_152 = arith.constant 0 : index
    %c58_153 = arith.constant 58 : index
    %121 = vector.load %arg13[%c0_152, %c58_153] : memref<2x310xf32, #tpu.memory_space<vmem>>, vector<2x251xf32>
    %c116 = arith.constant 116 : index
    %c0_154 = arith.constant 0 : index
    %122 = vector.load %arg16[%c116, %c0_154] : memref<120x251xf32, #tpu.memory_space<vmem>>, vector<2x251xf32>
    tpu.vector_store %arg16[%c116, %c0_154], %121 {strides = array<i32>} : memref<120x251xf32, #tpu.memory_space<vmem>>, vector<2x251xf32>,
    %c0_155 = arith.constant 0 : index
    %c59 = arith.constant 59 : index
    %123 = vector.load %arg13[%c0_155, %c59] : memref<2x310xf32, #tpu.memory_space<vmem>>, vector<2x251xf32>
    %c118 = arith.constant 118 : index
    %c0_156 = arith.constant 0 : index
    %124 = vector.load %arg16[%c118, %c0_156] : memref<120x251xf32, #tpu.memory_space<vmem>>, vector<2x251xf32>
    tpu.vector_store %arg16[%c118, %c0_156], %123 {strides = array<i32>} : memref<120x251xf32, #tpu.memory_space<vmem>>, vector<2x251xf32>,
    %c0_157 = arith.constant 0 : index
    %c0_158 = arith.constant 0 : index
    %125 = vector.load %arg2[%c0_157, %c0_158] : memref<5x120xf32, #tpu.memory_space<vmem>>, vector<5x120xf32>
    %c0_159 = arith.constant 0 : index
    %c0_160 = arith.constant 0 : index
    %126 = vector.load %arg16[%c0_159, %c0_160] : memref<120x251xf32, #tpu.memory_space<vmem>>, vector<120x251xf32>
    %cst_161 = arith.constant dense<0.000000e+00> : vector<5x251xf32>
    %127 = tpu.matmul %125, %126, %cst_161 {dimension_numbers = #tpu.dot_dimension_numbers<[1], [0], [0], [1], [0, 0, 1, 1], [], []>} : vector<5x120xf32>, vector<120x251xf32>, vector<5x251xf32> -> vector<5x251xf32>
    %c0_162 = arith.constant 0 : index
    %c0_163 = arith.constant 0 : index
    %128 = vector.load %arg3[%c0_162, %c0_163] : memref<5x1xf32, #tpu.memory_space<vmem>>, vector<5x1xf32>
    %129 = vector.broadcast %128 : vector<5x1xf32> to vector<5x251xf32>
    %130 = arith.addf %127, %129 : vector<5x251xf32>
    %cst_164 = arith.constant 0.000000e+00 : f32
    %131 = vector.broadcast %cst_164 : f32 to vector<5x311xf32>
    %c0_165 = arith.constant 0 : index
    %c0_166 = arith.constant 0 : index
    %132 = vector.load %arg14[%c0_165, %c0_166] : memref<5x311xf32, #tpu.memory_space<vmem>>, vector<5x311xf32>
    tpu.vector_store %arg14[%c0_165, %c0_166], %131 {strides = array<i32>} : memref<5x311xf32, #tpu.memory_space<vmem>>, vector<5x311xf32>,
    %cst_167 = arith.constant 0.000000e+00 : f32
    %133 = vector.broadcast %cst_167 : f32 to vector<5x251xf32>
    %134 = arith.maximumf %130, %133 : vector<5x251xf32>
    %c0_168 = arith.constant 0 : index
    %c30_169 = arith.constant 30 : index
    %135 = vector.load %arg14[%c0_168, %c30_169] : memref<5x311xf32, #tpu.memory_space<vmem>>, vector<5x251xf32>
    tpu.vector_store %arg14[%c0_168, %c30_169], %134 {strides = array<i32>} : memref<5x311xf32, #tpu.memory_space<vmem>>, vector<5x251xf32>,
    %c0_170 = arith.constant 0 : index
    %c0_171 = arith.constant 0 : index
    %136 = vector.load %arg14[%c0_170, %c0_171] : memref<5x311xf32, #tpu.memory_space<vmem>>, vector<5x282xf32>
    %c0_172 = arith.constant 0 : index
    %c0_173 = arith.constant 0 : index
    %137 = vector.load %arg17[%c0_172, %c0_173] : memref<150x282xf32, #tpu.memory_space<vmem>>, vector<5x282xf32>
    tpu.vector_store %arg17[%c0_172, %c0_173], %136 {strides = array<i32>} : memref<150x282xf32, #tpu.memory_space<vmem>>, vector<5x282xf32>,
    %c0_174 = arith.constant 0 : index
    %c1_175 = arith.constant 1 : index
    %138 = vector.load %arg14[%c0_174, %c1_175] : memref<5x311xf32, #tpu.memory_space<vmem>>, vector<5x282xf32>
    %c5_176 = arith.constant 5 : index
    %c0_177 = arith.constant 0 : index
    %139 = vector.load %arg17[%c5_176, %c0_177] : memref<150x282xf32, #tpu.memory_space<vmem>>, vector<5x282xf32>
    tpu.vector_store %arg17[%c5_176, %c0_177], %138 {strides = array<i32>} : memref<150x282xf32, #tpu.memory_space<vmem>>, vector<5x282xf32>,
    %c0_178 = arith.constant 0 : index
    %c2_179 = arith.constant 2 : index
    %140 = vector.load %arg14[%c0_178, %c2_179] : memref<5x311xf32, #tpu.memory_space<vmem>>, vector<5x282xf32>
    %c10_180 = arith.constant 10 : index
    %c0_181 = arith.constant 0 : index
    %141 = vector.load %arg17[%c10_180, %c0_181] : memref<150x282xf32, #tpu.memory_space<vmem>>, vector<5x282xf32>
    tpu.vector_store %arg17[%c10_180, %c0_181], %140 {strides = array<i32>} : memref<150x282xf32, #tpu.memory_space<vmem>>, vector<5x282xf32>,
    %c0_182 = arith.constant 0 : index
    %c3_183 = arith.constant 3 : index
    %142 = vector.load %arg14[%c0_182, %c3_183] : memref<5x311xf32, #tpu.memory_space<vmem>>, vector<5x282xf32>
    %c15_184 = arith.constant 15 : index
    %c0_185 = arith.constant 0 : index
    %143 = vector.load %arg17[%c15_184, %c0_185] : memref<150x282xf32, #tpu.memory_space<vmem>>, vector<5x282xf32>
    tpu.vector_store %arg17[%c15_184, %c0_185], %142 {strides = array<i32>} : memref<150x282xf32, #tpu.memory_space<vmem>>, vector<5x282xf32>,
    %c0_186 = arith.constant 0 : index
    %c4_187 = arith.constant 4 : index
    %144 = vector.load %arg14[%c0_186, %c4_187] : memref<5x311xf32, #tpu.memory_space<vmem>>, vector<5x282xf32>
    %c20_188 = arith.constant 20 : index
    %c0_189 = arith.constant 0 : index
    %145 = vector.load %arg17[%c20_188, %c0_189] : memref<150x282xf32, #tpu.memory_space<vmem>>, vector<5x282xf32>
    tpu.vector_store %arg17[%c20_188, %c0_189], %144 {strides = array<i32>} : memref<150x282xf32, #tpu.memory_space<vmem>>, vector<5x282xf32>,
    %c0_190 = arith.constant 0 : index
    %c5_191 = arith.constant 5 : index
    %146 = vector.load %arg14[%c0_190, %c5_191] : memref<5x311xf32, #tpu.memory_space<vmem>>, vector<5x282xf32>
    %c25_192 = arith.constant 25 : index
    %c0_193 = arith.constant 0 : index
    %147 = vector.load %arg17[%c25_192, %c0_193] : memref<150x282xf32, #tpu.memory_space<vmem>>, vector<5x282xf32>
    tpu.vector_store %arg17[%c25_192, %c0_193], %146 {strides = array<i32>} : memref<150x282xf32, #tpu.memory_space<vmem>>, vector<5x282xf32>,
    %c0_194 = arith.constant 0 : index
    %c6_195 = arith.constant 6 : index
    %148 = vector.load %arg14[%c0_194, %c6_195] : memref<5x311xf32, #tpu.memory_space<vmem>>, vector<5x282xf32>
    %c30_196 = arith.constant 30 : index
    %c0_197 = arith.constant 0 : index
    %149 = vector.load %arg17[%c30_196, %c0_197] : memref<150x282xf32, #tpu.memory_space<vmem>>, vector<5x282xf32>
    tpu.vector_store %arg17[%c30_196, %c0_197], %148 {strides = array<i32>} : memref<150x282xf32, #tpu.memory_space<vmem>>, vector<5x282xf32>,
    %c0_198 = arith.constant 0 : index
    %c7_199 = arith.constant 7 : index
    %150 = vector.load %arg14[%c0_198, %c7_199] : memref<5x311xf32, #tpu.memory_space<vmem>>, vector<5x282xf32>
    %c35_200 = arith.constant 35 : index
    %c0_201 = arith.constant 0 : index
    %151 = vector.load %arg17[%c35_200, %c0_201] : memref<150x282xf32, #tpu.memory_space<vmem>>, vector<5x282xf32>
    tpu.vector_store %arg17[%c35_200, %c0_201], %150 {strides = array<i32>} : memref<150x282xf32, #tpu.memory_space<vmem>>, vector<5x282xf32>,
    %c0_202 = arith.constant 0 : index
    %c8_203 = arith.constant 8 : index
    %152 = vector.load %arg14[%c0_202, %c8_203] : memref<5x311xf32, #tpu.memory_space<vmem>>, vector<5x282xf32>
    %c40_204 = arith.constant 40 : index
    %c0_205 = arith.constant 0 : index
    %153 = vector.load %arg17[%c40_204, %c0_205] : memref<150x282xf32, #tpu.memory_space<vmem>>, vector<5x282xf32>
    tpu.vector_store %arg17[%c40_204, %c0_205], %152 {strides = array<i32>} : memref<150x282xf32, #tpu.memory_space<vmem>>, vector<5x282xf32>,
    %c0_206 = arith.constant 0 : index
    %c9_207 = arith.constant 9 : index
    %154 = vector.load %arg14[%c0_206, %c9_207] : memref<5x311xf32, #tpu.memory_space<vmem>>, vector<5x282xf32>
    %c45_208 = arith.constant 45 : index
    %c0_209 = arith.constant 0 : index
    %155 = vector.load %arg17[%c45_208, %c0_209] : memref<150x282xf32, #tpu.memory_space<vmem>>, vector<5x282xf32>
    tpu.vector_store %arg17[%c45_208, %c0_209], %154 {strides = array<i32>} : memref<150x282xf32, #tpu.memory_space<vmem>>, vector<5x282xf32>,
    %c0_210 = arith.constant 0 : index
    %c10_211 = arith.constant 10 : index
    %156 = vector.load %arg14[%c0_210, %c10_211] : memref<5x311xf32, #tpu.memory_space<vmem>>, vector<5x282xf32>
    %c50_212 = arith.constant 50 : index
    %c0_213 = arith.constant 0 : index
    %157 = vector.load %arg17[%c50_212, %c0_213] : memref<150x282xf32, #tpu.memory_space<vmem>>, vector<5x282xf32>
    tpu.vector_store %arg17[%c50_212, %c0_213], %156 {strides = array<i32>} : memref<150x282xf32, #tpu.memory_space<vmem>>, vector<5x282xf32>,
    %c0_214 = arith.constant 0 : index
    %c11_215 = arith.constant 11 : index
    %158 = vector.load %arg14[%c0_214, %c11_215] : memref<5x311xf32, #tpu.memory_space<vmem>>, vector<5x282xf32>
    %c55_216 = arith.constant 55 : index
    %c0_217 = arith.constant 0 : index
    %159 = vector.load %arg17[%c55_216, %c0_217] : memref<150x282xf32, #tpu.memory_space<vmem>>, vector<5x282xf32>
    tpu.vector_store %arg17[%c55_216, %c0_217], %158 {strides = array<i32>} : memref<150x282xf32, #tpu.memory_space<vmem>>, vector<5x282xf32>,
    %c0_218 = arith.constant 0 : index
    %c12_219 = arith.constant 12 : index
    %160 = vector.load %arg14[%c0_218, %c12_219] : memref<5x311xf32, #tpu.memory_space<vmem>>, vector<5x282xf32>
    %c60_220 = arith.constant 60 : index
    %c0_221 = arith.constant 0 : index
    %161 = vector.load %arg17[%c60_220, %c0_221] : memref<150x282xf32, #tpu.memory_space<vmem>>, vector<5x282xf32>
    tpu.vector_store %arg17[%c60_220, %c0_221], %160 {strides = array<i32>} : memref<150x282xf32, #tpu.memory_space<vmem>>, vector<5x282xf32>,
    %c0_222 = arith.constant 0 : index
    %c13_223 = arith.constant 13 : index
    %162 = vector.load %arg14[%c0_222, %c13_223] : memref<5x311xf32, #tpu.memory_space<vmem>>, vector<5x282xf32>
    %c65 = arith.constant 65 : index
    %c0_224 = arith.constant 0 : index
    %163 = vector.load %arg17[%c65, %c0_224] : memref<150x282xf32, #tpu.memory_space<vmem>>, vector<5x282xf32>
    tpu.vector_store %arg17[%c65, %c0_224], %162 {strides = array<i32>} : memref<150x282xf32, #tpu.memory_space<vmem>>, vector<5x282xf32>,
    %c0_225 = arith.constant 0 : index
    %c14_226 = arith.constant 14 : index
    %164 = vector.load %arg14[%c0_225, %c14_226] : memref<5x311xf32, #tpu.memory_space<vmem>>, vector<5x282xf32>
    %c70_227 = arith.constant 70 : index
    %c0_228 = arith.constant 0 : index
    %165 = vector.load %arg17[%c70_227, %c0_228] : memref<150x282xf32, #tpu.memory_space<vmem>>, vector<5x282xf32>
    tpu.vector_store %arg17[%c70_227, %c0_228], %164 {strides = array<i32>} : memref<150x282xf32, #tpu.memory_space<vmem>>, vector<5x282xf32>,
    %c0_229 = arith.constant 0 : index
    %c15_230 = arith.constant 15 : index
    %166 = vector.load %arg14[%c0_229, %c15_230] : memref<5x311xf32, #tpu.memory_space<vmem>>, vector<5x282xf32>
    %c75 = arith.constant 75 : index
    %c0_231 = arith.constant 0 : index
    %167 = vector.load %arg17[%c75, %c0_231] : memref<150x282xf32, #tpu.memory_space<vmem>>, vector<5x282xf32>
    tpu.vector_store %arg17[%c75, %c0_231], %166 {strides = array<i32>} : memref<150x282xf32, #tpu.memory_space<vmem>>, vector<5x282xf32>,
    %c0_232 = arith.constant 0 : index
    %c16_233 = arith.constant 16 : index
    %168 = vector.load %arg14[%c0_232, %c16_233] : memref<5x311xf32, #tpu.memory_space<vmem>>, vector<5x282xf32>
    %c80_234 = arith.constant 80 : index
    %c0_235 = arith.constant 0 : index
    %169 = vector.load %arg17[%c80_234, %c0_235] : memref<150x282xf32, #tpu.memory_space<vmem>>, vector<5x282xf32>
    tpu.vector_store %arg17[%c80_234, %c0_235], %168 {strides = array<i32>} : memref<150x282xf32, #tpu.memory_space<vmem>>, vector<5x282xf32>,
    %c0_236 = arith.constant 0 : index
    %c17_237 = arith.constant 17 : index
    %170 = vector.load %arg14[%c0_236, %c17_237] : memref<5x311xf32, #tpu.memory_space<vmem>>, vector<5x282xf32>
    %c85 = arith.constant 85 : index
    %c0_238 = arith.constant 0 : index
    %171 = vector.load %arg17[%c85, %c0_238] : memref<150x282xf32, #tpu.memory_space<vmem>>, vector<5x282xf32>
    tpu.vector_store %arg17[%c85, %c0_238], %170 {strides = array<i32>} : memref<150x282xf32, #tpu.memory_space<vmem>>, vector<5x282xf32>,
    %c0_239 = arith.constant 0 : index
    %c18_240 = arith.constant 18 : index
    %172 = vector.load %arg14[%c0_239, %c18_240] : memref<5x311xf32, #tpu.memory_space<vmem>>, vector<5x282xf32>
    %c90_241 = arith.constant 90 : index
    %c0_242 = arith.constant 0 : index
    %173 = vector.load %arg17[%c90_241, %c0_242] : memref<150x282xf32, #tpu.memory_space<vmem>>, vector<5x282xf32>
    tpu.vector_store %arg17[%c90_241, %c0_242], %172 {strides = array<i32>} : memref<150x282xf32, #tpu.memory_space<vmem>>, vector<5x282xf32>,
    %c0_243 = arith.constant 0 : index
    %c19_244 = arith.constant 19 : index
    %174 = vector.load %arg14[%c0_243, %c19_244] : memref<5x311xf32, #tpu.memory_space<vmem>>, vector<5x282xf32>
    %c95 = arith.constant 95 : index
    %c0_245 = arith.constant 0 : index
    %175 = vector.load %arg17[%c95, %c0_245] : memref<150x282xf32, #tpu.memory_space<vmem>>, vector<5x282xf32>
    tpu.vector_store %arg17[%c95, %c0_245], %174 {strides = array<i32>} : memref<150x282xf32, #tpu.memory_space<vmem>>, vector<5x282xf32>,
    %c0_246 = arith.constant 0 : index
    %c20_247 = arith.constant 20 : index
    %176 = vector.load %arg14[%c0_246, %c20_247] : memref<5x311xf32, #tpu.memory_space<vmem>>, vector<5x282xf32>
    %c100_248 = arith.constant 100 : index
    %c0_249 = arith.constant 0 : index
    %177 = vector.load %arg17[%c100_248, %c0_249] : memref<150x282xf32, #tpu.memory_space<vmem>>, vector<5x282xf32>
    tpu.vector_store %arg17[%c100_248, %c0_249], %176 {strides = array<i32>} : memref<150x282xf32, #tpu.memory_space<vmem>>, vector<5x282xf32>,
    %c0_250 = arith.constant 0 : index
    %c21_251 = arith.constant 21 : index
    %178 = vector.load %arg14[%c0_250, %c21_251] : memref<5x311xf32, #tpu.memory_space<vmem>>, vector<5x282xf32>
    %c105 = arith.constant 105 : index
    %c0_252 = arith.constant 0 : index
    %179 = vector.load %arg17[%c105, %c0_252] : memref<150x282xf32, #tpu.memory_space<vmem>>, vector<5x282xf32>
    tpu.vector_store %arg17[%c105, %c0_252], %178 {strides = array<i32>} : memref<150x282xf32, #tpu.memory_space<vmem>>, vector<5x282xf32>,
    %c0_253 = arith.constant 0 : index
    %c22_254 = arith.constant 22 : index
    %180 = vector.load %arg14[%c0_253, %c22_254] : memref<5x311xf32, #tpu.memory_space<vmem>>, vector<5x282xf32>
    %c110_255 = arith.constant 110 : index
    %c0_256 = arith.constant 0 : index
    %181 = vector.load %arg17[%c110_255, %c0_256] : memref<150x282xf32, #tpu.memory_space<vmem>>, vector<5x282xf32>
    tpu.vector_store %arg17[%c110_255, %c0_256], %180 {strides = array<i32>} : memref<150x282xf32, #tpu.memory_space<vmem>>, vector<5x282xf32>,
    %c0_257 = arith.constant 0 : index
    %c23_258 = arith.constant 23 : index
    %182 = vector.load %arg14[%c0_257, %c23_258] : memref<5x311xf32, #tpu.memory_space<vmem>>, vector<5x282xf32>
    %c115 = arith.constant 115 : index
    %c0_259 = arith.constant 0 : index
    %183 = vector.load %arg17[%c115, %c0_259] : memref<150x282xf32, #tpu.memory_space<vmem>>, vector<5x282xf32>
    tpu.vector_store %arg17[%c115, %c0_259], %182 {strides = array<i32>} : memref<150x282xf32, #tpu.memory_space<vmem>>, vector<5x282xf32>,
    %c0_260 = arith.constant 0 : index
    %c24_261 = arith.constant 24 : index
    %184 = vector.load %arg14[%c0_260, %c24_261] : memref<5x311xf32, #tpu.memory_space<vmem>>, vector<5x282xf32>
    %c120 = arith.constant 120 : index
    %c0_262 = arith.constant 0 : index
    %185 = vector.load %arg17[%c120, %c0_262] : memref<150x282xf32, #tpu.memory_space<vmem>>, vector<5x282xf32>
    tpu.vector_store %arg17[%c120, %c0_262], %184 {strides = array<i32>} : memref<150x282xf32, #tpu.memory_space<vmem>>, vector<5x282xf32>,
    %c0_263 = arith.constant 0 : index
    %c25_264 = arith.constant 25 : index
    %186 = vector.load %arg14[%c0_263, %c25_264] : memref<5x311xf32, #tpu.memory_space<vmem>>, vector<5x282xf32>
    %c125 = arith.constant 125 : index
    %c0_265 = arith.constant 0 : index
    %187 = vector.load %arg17[%c125, %c0_265] : memref<150x282xf32, #tpu.memory_space<vmem>>, vector<5x282xf32>
    tpu.vector_store %arg17[%c125, %c0_265], %186 {strides = array<i32>} : memref<150x282xf32, #tpu.memory_space<vmem>>, vector<5x282xf32>,
    %c0_266 = arith.constant 0 : index
    %c26_267 = arith.constant 26 : index
    %188 = vector.load %arg14[%c0_266, %c26_267] : memref<5x311xf32, #tpu.memory_space<vmem>>, vector<5x282xf32>
    %c130 = arith.constant 130 : index
    %c0_268 = arith.constant 0 : index
    %189 = vector.load %arg17[%c130, %c0_268] : memref<150x282xf32, #tpu.memory_space<vmem>>, vector<5x282xf32>
    tpu.vector_store %arg17[%c130, %c0_268], %188 {strides = array<i32>} : memref<150x282xf32, #tpu.memory_space<vmem>>, vector<5x282xf32>,
    %c0_269 = arith.constant 0 : index
    %c27_270 = arith.constant 27 : index
    %190 = vector.load %arg14[%c0_269, %c27_270] : memref<5x311xf32, #tpu.memory_space<vmem>>, vector<5x282xf32>
    %c135 = arith.constant 135 : index
    %c0_271 = arith.constant 0 : index
    %191 = vector.load %arg17[%c135, %c0_271] : memref<150x282xf32, #tpu.memory_space<vmem>>, vector<5x282xf32>
    tpu.vector_store %arg17[%c135, %c0_271], %190 {strides = array<i32>} : memref<150x282xf32, #tpu.memory_space<vmem>>, vector<5x282xf32>,
    %c0_272 = arith.constant 0 : index
    %c28_273 = arith.constant 28 : index
    %192 = vector.load %arg14[%c0_272, %c28_273] : memref<5x311xf32, #tpu.memory_space<vmem>>, vector<5x282xf32>
    %c140 = arith.constant 140 : index
    %c0_274 = arith.constant 0 : index
    %193 = vector.load %arg17[%c140, %c0_274] : memref<150x282xf32, #tpu.memory_space<vmem>>, vector<5x282xf32>
    tpu.vector_store %arg17[%c140, %c0_274], %192 {strides = array<i32>} : memref<150x282xf32, #tpu.memory_space<vmem>>, vector<5x282xf32>,
    %c0_275 = arith.constant 0 : index
    %c29_276 = arith.constant 29 : index
    %194 = vector.load %arg14[%c0_275, %c29_276] : memref<5x311xf32, #tpu.memory_space<vmem>>, vector<5x282xf32>
    %c145 = arith.constant 145 : index
    %c0_277 = arith.constant 0 : index
    %195 = vector.load %arg17[%c145, %c0_277] : memref<150x282xf32, #tpu.memory_space<vmem>>, vector<5x282xf32>
    tpu.vector_store %arg17[%c145, %c0_277], %194 {strides = array<i32>} : memref<150x282xf32, #tpu.memory_space<vmem>>, vector<5x282xf32>,
    %c0_278 = arith.constant 0 : index
    %c0_279 = arith.constant 0 : index
    %196 = vector.load %arg4[%c0_278, %c0_279] : memref<10x150xf32, #tpu.memory_space<vmem>>, vector<10x150xf32>
    %c0_280 = arith.constant 0 : index
    %c0_281 = arith.constant 0 : index
    %197 = vector.load %arg17[%c0_280, %c0_281] : memref<150x282xf32, #tpu.memory_space<vmem>>, vector<150x282xf32>
    %cst_282 = arith.constant dense<0.000000e+00> : vector<10x282xf32>
    %198 = tpu.matmul %196, %197, %cst_282 {dimension_numbers = #tpu.dot_dimension_numbers<[1], [0], [0], [1], [0, 0, 1, 1], [], []>} : vector<10x150xf32>, vector<150x282xf32>, vector<10x282xf32> -> vector<10x282xf32>
    %c0_283 = arith.constant 0 : index
    %c0_284 = arith.constant 0 : index
    %199 = vector.load %arg5[%c0_283, %c0_284] : memref<10x1xf32, #tpu.memory_space<vmem>>, vector<10x1xf32>
    %200 = vector.broadcast %199 : vector<10x1xf32> to vector<10x282xf32>
    %201 = arith.addf %198, %200 : vector<10x282xf32>
    %202 = tpu.iota {dimensions = array<i32: 0>} : vector<282x70xi32>
    %203 = tpu.iota {dimensions = array<i32: 1>} : vector<282x70xi32>
    %c4_i32 = arith.constant 4 : i32
    %204 = vector.broadcast %c4_i32 : i32 to vector<282x70xi32>
    %205 = arith.muli %204, %203 : vector<282x70xi32>
    %c0_i32 = arith.constant 0 : i32
    %206 = vector.broadcast %c0_i32 : i32 to vector<282x70xi32>
    %207 = arith.addi %205, %206 : vector<282x70xi32>
    %208 = arith.cmpi eq, %202, %207 : vector<282x70xi32>
    %209 = arith.extui %208 : vector<282x70xi1> to vector<282x70xi32>
    %210 = arith.sitofp %209 : vector<282x70xi32> to vector<282x70xf32>
    %cst_285 = arith.constant dense<0.000000e+00> : vector<10x70xf32>
    %211 = tpu.matmul %201, %210, %cst_285 {dimension_numbers = #tpu.dot_dimension_numbers<[1], [0], [0], [1], [0, 0, 1, 1], [], []>} : vector<10x282xf32>, vector<282x70xf32>, vector<10x70xf32> -> vector<10x70xf32>
    %212 = tpu.iota {dimensions = array<i32: 0>} : vector<282x70xi32>
    %213 = tpu.iota {dimensions = array<i32: 1>} : vector<282x70xi32>
    %c4_i32_286 = arith.constant 4 : i32
    %214 = vector.broadcast %c4_i32_286 : i32 to vector<282x70xi32>
    %215 = arith.muli %214, %213 : vector<282x70xi32>
    %c2_i32 = arith.constant 2 : i32
    %216 = vector.broadcast %c2_i32 : i32 to vector<282x70xi32>
    %217 = arith.addi %215, %216 : vector<282x70xi32>
    %218 = arith.cmpi eq, %212, %217 : vector<282x70xi32>
    %219 = arith.extui %218 : vector<282x70xi1> to vector<282x70xi32>
    %220 = arith.sitofp %219 : vector<282x70xi32> to vector<282x70xf32>
    %cst_287 = arith.constant dense<0.000000e+00> : vector<10x70xf32>
    %221 = tpu.matmul %201, %220, %cst_287 {dimension_numbers = #tpu.dot_dimension_numbers<[1], [0], [0], [1], [0, 0, 1, 1], [], []>} : vector<10x282xf32>, vector<282x70xf32>, vector<10x70xf32> -> vector<10x70xf32>
    %222 = arith.maximumf %211, %221 : vector<10x70xf32>
    %cst_288 = arith.constant 0.000000e+00 : f32
    %223 = vector.broadcast %cst_288 : f32 to vector<10x130xf32>
    %c0_289 = arith.constant 0 : index
    %c0_290 = arith.constant 0 : index
    %224 = vector.load %arg15[%c0_289, %c0_290] : memref<10x130xf32, #tpu.memory_space<vmem>>, vector<10x130xf32>
    tpu.vector_store %arg15[%c0_289, %c0_290], %223 {strides = array<i32>} : memref<10x130xf32, #tpu.memory_space<vmem>>, vector<10x130xf32>,
    %cst_291 = arith.constant 0.000000e+00 : f32
    %225 = vector.broadcast %cst_291 : f32 to vector<10x70xf32>
    %226 = arith.maximumf %222, %225 : vector<10x70xf32>
    %c0_292 = arith.constant 0 : index
    %c30_293 = arith.constant 30 : index
    %227 = vector.load %arg15[%c0_292, %c30_293] : memref<10x130xf32, #tpu.memory_space<vmem>>, vector<10x70xf32>
    tpu.vector_store %arg15[%c0_292, %c30_293], %226 {strides = array<i32>} : memref<10x130xf32, #tpu.memory_space<vmem>>, vector<10x70xf32>,
    %c0_294 = arith.constant 0 : index
    %c0_295 = arith.constant 0 : index
    %228 = vector.load %arg15[%c0_294, %c0_295] : memref<10x130xf32, #tpu.memory_space<vmem>>, vector<10x116xf32>
    %c0_296 = arith.constant 0 : index
    %c0_297 = arith.constant 0 : index
    %229 = vector.load %arg18[%c0_296, %c0_297] : memref<150x116xf32, #tpu.memory_space<vmem>>, vector<10x116xf32>
    tpu.vector_store %arg18[%c0_296, %c0_297], %228 {strides = array<i32>} : memref<150x116xf32, #tpu.memory_space<vmem>>, vector<10x116xf32>,
    %c0_298 = arith.constant 0 : index
    %c1_299 = arith.constant 1 : index
    %230 = vector.load %arg15[%c0_298, %c1_299] : memref<10x130xf32, #tpu.memory_space<vmem>>, vector<10x116xf32>
    %c10_300 = arith.constant 10 : index
    %c0_301 = arith.constant 0 : index
    %231 = vector.load %arg18[%c10_300, %c0_301] : memref<150x116xf32, #tpu.memory_space<vmem>>, vector<10x116xf32>
    tpu.vector_store %arg18[%c10_300, %c0_301], %230 {strides = array<i32>} : memref<150x116xf32, #tpu.memory_space<vmem>>, vector<10x116xf32>,
    %c0_302 = arith.constant 0 : index
    %c2_303 = arith.constant 2 : index
    %232 = vector.load %arg15[%c0_302, %c2_303] : memref<10x130xf32, #tpu.memory_space<vmem>>, vector<10x116xf32>
    %c20_304 = arith.constant 20 : index
    %c0_305 = arith.constant 0 : index
    %233 = vector.load %arg18[%c20_304, %c0_305] : memref<150x116xf32, #tpu.memory_space<vmem>>, vector<10x116xf32>
    tpu.vector_store %arg18[%c20_304, %c0_305], %232 {strides = array<i32>} : memref<150x116xf32, #tpu.memory_space<vmem>>, vector<10x116xf32>,
    %c0_306 = arith.constant 0 : index
    %c3_307 = arith.constant 3 : index
    %234 = vector.load %arg15[%c0_306, %c3_307] : memref<10x130xf32, #tpu.memory_space<vmem>>, vector<10x116xf32>
    %c30_308 = arith.constant 30 : index
    %c0_309 = arith.constant 0 : index
    %235 = vector.load %arg18[%c30_308, %c0_309] : memref<150x116xf32, #tpu.memory_space<vmem>>, vector<10x116xf32>
    tpu.vector_store %arg18[%c30_308, %c0_309], %234 {strides = array<i32>} : memref<150x116xf32, #tpu.memory_space<vmem>>, vector<10x116xf32>,
    %c0_310 = arith.constant 0 : index
    %c4_311 = arith.constant 4 : index
    %236 = vector.load %arg15[%c0_310, %c4_311] : memref<10x130xf32, #tpu.memory_space<vmem>>, vector<10x116xf32>
    %c40_312 = arith.constant 40 : index
    %c0_313 = arith.constant 0 : index
    %237 = vector.load %arg18[%c40_312, %c0_313] : memref<150x116xf32, #tpu.memory_space<vmem>>, vector<10x116xf32>
    tpu.vector_store %arg18[%c40_312, %c0_313], %236 {strides = array<i32>} : memref<150x116xf32, #tpu.memory_space<vmem>>, vector<10x116xf32>,
    %c0_314 = arith.constant 0 : index
    %c5_315 = arith.constant 5 : index
    %238 = vector.load %arg15[%c0_314, %c5_315] : memref<10x130xf32, #tpu.memory_space<vmem>>, vector<10x116xf32>
    %c50_316 = arith.constant 50 : index
    %c0_317 = arith.constant 0 : index
    %239 = vector.load %arg18[%c50_316, %c0_317] : memref<150x116xf32, #tpu.memory_space<vmem>>, vector<10x116xf32>
    tpu.vector_store %arg18[%c50_316, %c0_317], %238 {strides = array<i32>} : memref<150x116xf32, #tpu.memory_space<vmem>>, vector<10x116xf32>,
    %c0_318 = arith.constant 0 : index
    %c6_319 = arith.constant 6 : index
    %240 = vector.load %arg15[%c0_318, %c6_319] : memref<10x130xf32, #tpu.memory_space<vmem>>, vector<10x116xf32>
    %c60_320 = arith.constant 60 : index
    %c0_321 = arith.constant 0 : index
    %241 = vector.load %arg18[%c60_320, %c0_321] : memref<150x116xf32, #tpu.memory_space<vmem>>, vector<10x116xf32>
    tpu.vector_store %arg18[%c60_320, %c0_321], %240 {strides = array<i32>} : memref<150x116xf32, #tpu.memory_space<vmem>>, vector<10x116xf32>,
    %c0_322 = arith.constant 0 : index
    %c7_323 = arith.constant 7 : index
    %242 = vector.load %arg15[%c0_322, %c7_323] : memref<10x130xf32, #tpu.memory_space<vmem>>, vector<10x116xf32>
    %c70_324 = arith.constant 70 : index
    %c0_325 = arith.constant 0 : index
    %243 = vector.load %arg18[%c70_324, %c0_325] : memref<150x116xf32, #tpu.memory_space<vmem>>, vector<10x116xf32>
    tpu.vector_store %arg18[%c70_324, %c0_325], %242 {strides = array<i32>} : memref<150x116xf32, #tpu.memory_space<vmem>>, vector<10x116xf32>,
    %c0_326 = arith.constant 0 : index
    %c8_327 = arith.constant 8 : index
    %244 = vector.load %arg15[%c0_326, %c8_327] : memref<10x130xf32, #tpu.memory_space<vmem>>, vector<10x116xf32>
    %c80_328 = arith.constant 80 : index
    %c0_329 = arith.constant 0 : index
    %245 = vector.load %arg18[%c80_328, %c0_329] : memref<150x116xf32, #tpu.memory_space<vmem>>, vector<10x116xf32>
    tpu.vector_store %arg18[%c80_328, %c0_329], %244 {strides = array<i32>} : memref<150x116xf32, #tpu.memory_space<vmem>>, vector<10x116xf32>,
    %c0_330 = arith.constant 0 : index
    %c9_331 = arith.constant 9 : index
    %246 = vector.load %arg15[%c0_330, %c9_331] : memref<10x130xf32, #tpu.memory_space<vmem>>, vector<10x116xf32>
    %c90_332 = arith.constant 90 : index
    %c0_333 = arith.constant 0 : index
    %247 = vector.load %arg18[%c90_332, %c0_333] : memref<150x116xf32, #tpu.memory_space<vmem>>, vector<10x116xf32>
    tpu.vector_store %arg18[%c90_332, %c0_333], %246 {strides = array<i32>} : memref<150x116xf32, #tpu.memory_space<vmem>>, vector<10x116xf32>,
    %c0_334 = arith.constant 0 : index
    %c10_335 = arith.constant 10 : index
    %248 = vector.load %arg15[%c0_334, %c10_335] : memref<10x130xf32, #tpu.memory_space<vmem>>, vector<10x116xf32>
    %c100_336 = arith.constant 100 : index
    %c0_337 = arith.constant 0 : index
    %249 = vector.load %arg18[%c100_336, %c0_337] : memref<150x116xf32, #tpu.memory_space<vmem>>, vector<10x116xf32>
    tpu.vector_store %arg18[%c100_336, %c0_337], %248 {strides = array<i32>} : memref<150x116xf32, #tpu.memory_space<vmem>>, vector<10x116xf32>,
    %c0_338 = arith.constant 0 : index
    %c11_339 = arith.constant 11 : index
    %250 = vector.load %arg15[%c0_338, %c11_339] : memref<10x130xf32, #tpu.memory_space<vmem>>, vector<10x116xf32>
    %c110_340 = arith.constant 110 : index
    %c0_341 = arith.constant 0 : index
    %251 = vector.load %arg18[%c110_340, %c0_341] : memref<150x116xf32, #tpu.memory_space<vmem>>, vector<10x116xf32>
    tpu.vector_store %arg18[%c110_340, %c0_341], %250 {strides = array<i32>} : memref<150x116xf32, #tpu.memory_space<vmem>>, vector<10x116xf32>,
    %c0_342 = arith.constant 0 : index
    %c12_343 = arith.constant 12 : index
    %252 = vector.load %arg15[%c0_342, %c12_343] : memref<10x130xf32, #tpu.memory_space<vmem>>, vector<10x116xf32>
    %c120_344 = arith.constant 120 : index
    %c0_345 = arith.constant 0 : index
    %253 = vector.load %arg18[%c120_344, %c0_345] : memref<150x116xf32, #tpu.memory_space<vmem>>, vector<10x116xf32>
    tpu.vector_store %arg18[%c120_344, %c0_345], %252 {strides = array<i32>} : memref<150x116xf32, #tpu.memory_space<vmem>>, vector<10x116xf32>,
    %c0_346 = arith.constant 0 : index
    %c13_347 = arith.constant 13 : index
    %254 = vector.load %arg15[%c0_346, %c13_347] : memref<10x130xf32, #tpu.memory_space<vmem>>, vector<10x116xf32>
    %c130_348 = arith.constant 130 : index
    %c0_349 = arith.constant 0 : index
    %255 = vector.load %arg18[%c130_348, %c0_349] : memref<150x116xf32, #tpu.memory_space<vmem>>, vector<10x116xf32>
    tpu.vector_store %arg18[%c130_348, %c0_349], %254 {strides = array<i32>} : memref<150x116xf32, #tpu.memory_space<vmem>>, vector<10x116xf32>,
    %c0_350 = arith.constant 0 : index
    %c14_351 = arith.constant 14 : index
    %256 = vector.load %arg15[%c0_350, %c14_351] : memref<10x130xf32, #tpu.memory_space<vmem>>, vector<10x116xf32>
    %c140_352 = arith.constant 140 : index
    %c0_353 = arith.constant 0 : index
    %257 = vector.load %arg18[%c140_352, %c0_353] : memref<150x116xf32, #tpu.memory_space<vmem>>, vector<10x116xf32>
    tpu.vector_store %arg18[%c140_352, %c0_353], %256 {strides = array<i32>} : memref<150x116xf32, #tpu.memory_space<vmem>>, vector<10x116xf32>,
    %c0_354 = arith.constant 0 : index
    %c0_355 = arith.constant 0 : index
    %258 = vector.load %arg6[%c0_354, %c0_355] : memref<20x150xf32, #tpu.memory_space<vmem>>, vector<20x150xf32>
    %c0_356 = arith.constant 0 : index
    %c0_357 = arith.constant 0 : index
    %259 = vector.load %arg18[%c0_356, %c0_357] : memref<150x116xf32, #tpu.memory_space<vmem>>, vector<150x116xf32>
    %cst_358 = arith.constant dense<0.000000e+00> : vector<20x116xf32>
    %260 = tpu.matmul %258, %259, %cst_358 {dimension_numbers = #tpu.dot_dimension_numbers<[1], [0], [0], [1], [0, 0, 1, 1], [], []>} : vector<20x150xf32>, vector<150x116xf32>, vector<20x116xf32> -> vector<20x116xf32>
    %c0_359 = arith.constant 0 : index
    %c0_360 = arith.constant 0 : index
    %261 = vector.load %arg7[%c0_359, %c0_360] : memref<20x1xf32, #tpu.memory_space<vmem>>, vector<20x1xf32>
    %262 = vector.broadcast %261 : vector<20x1xf32> to vector<20x116xf32>
    %263 = arith.addf %260, %262 : vector<20x116xf32>
    %264 = tpu.iota {dimensions = array<i32: 0>} : vector<116x29xi32>
    %265 = tpu.iota {dimensions = array<i32: 1>} : vector<116x29xi32>
    %c4_i32_361 = arith.constant 4 : i32
    %266 = vector.broadcast %c4_i32_361 : i32 to vector<116x29xi32>
    %267 = arith.muli %266, %265 : vector<116x29xi32>
    %c0_i32_362 = arith.constant 0 : i32
    %268 = vector.broadcast %c0_i32_362 : i32 to vector<116x29xi32>
    %269 = arith.addi %267, %268 : vector<116x29xi32>
    %270 = arith.cmpi eq, %264, %269 : vector<116x29xi32>
    %271 = arith.extui %270 : vector<116x29xi1> to vector<116x29xi32>
    %272 = arith.sitofp %271 : vector<116x29xi32> to vector<116x29xf32>
    %cst_363 = arith.constant dense<0.000000e+00> : vector<20x29xf32>
    %273 = tpu.matmul %263, %272, %cst_363 {dimension_numbers = #tpu.dot_dimension_numbers<[1], [0], [0], [1], [0, 0, 1, 1], [], []>} : vector<20x116xf32>, vector<116x29xf32>, vector<20x29xf32> -> vector<20x29xf32>
    %274 = tpu.iota {dimensions = array<i32: 0>} : vector<116x29xi32>
    %275 = tpu.iota {dimensions = array<i32: 1>} : vector<116x29xi32>
    %c4_i32_364 = arith.constant 4 : i32
    %276 = vector.broadcast %c4_i32_364 : i32 to vector<116x29xi32>
    %277 = arith.muli %276, %275 : vector<116x29xi32>
    %c2_i32_365 = arith.constant 2 : i32
    %278 = vector.broadcast %c2_i32_365 : i32 to vector<116x29xi32>
    %279 = arith.addi %277, %278 : vector<116x29xi32>
    %280 = arith.cmpi eq, %274, %279 : vector<116x29xi32>
    %281 = arith.extui %280 : vector<116x29xi1> to vector<116x29xi32>
    %282 = arith.sitofp %281 : vector<116x29xi32> to vector<116x29xf32>
    %cst_366 = arith.constant dense<0.000000e+00> : vector<20x29xf32>
    %283 = tpu.matmul %263, %282, %cst_366 {dimension_numbers = #tpu.dot_dimension_numbers<[1], [0], [0], [1], [0, 0, 1, 1], [], []>} : vector<20x116xf32>, vector<116x29xf32>, vector<20x29xf32> -> vector<20x29xf32>
    %284 = arith.maximumf %273, %283 : vector<20x29xf32>
    %cst_367 = arith.constant 0.000000e+00 : f32
    %285 = vector.broadcast %cst_367 : f32 to vector<20x29xf32>
    %286 = arith.maximumf %284, %285 : vector<20x29xf32>
    %287 = vector.extract_strided_slice %286 {offsets = [0, 0], sizes = [1, 29], strides = [1, 1]} : vector<20x29xf32> to vector<1x29xf32>
    %288 = vector.extract_strided_slice %286 {offsets = [1, 0], sizes = [1, 29], strides = [1, 1]} : vector<20x29xf32> to vector<1x29xf32>
    %289 = vector.extract_strided_slice %286 {offsets = [2, 0], sizes = [1, 29], strides = [1, 1]} : vector<20x29xf32> to vector<1x29xf32>
    %290 = vector.extract_strided_slice %286 {offsets = [3, 0], sizes = [1, 29], strides = [1, 1]} : vector<20x29xf32> to vector<1x29xf32>
    %291 = vector.extract_strided_slice %286 {offsets = [4, 0], sizes = [1, 29], strides = [1, 1]} : vector<20x29xf32> to vector<1x29xf32>
    %292 = vector.extract_strided_slice %286 {offsets = [5, 0], sizes = [1, 29], strides = [1, 1]} : vector<20x29xf32> to vector<1x29xf32>
    %293 = vector.extract_strided_slice %286 {offsets = [6, 0], sizes = [1, 29], strides = [1, 1]} : vector<20x29xf32> to vector<1x29xf32>
    %294 = vector.extract_strided_slice %286 {offsets = [7, 0], sizes = [1, 29], strides = [1, 1]} : vector<20x29xf32> to vector<1x29xf32>
    %295 = vector.extract_strided_slice %286 {offsets = [8, 0], sizes = [1, 29], strides = [1, 1]} : vector<20x29xf32> to vector<1x29xf32>
    %296 = vector.extract_strided_slice %286 {offsets = [9, 0], sizes = [1, 29], strides = [1, 1]} : vector<20x29xf32> to vector<1x29xf32>
    %297 = vector.extract_strided_slice %286 {offsets = [10, 0], sizes = [1, 29], strides = [1, 1]} : vector<20x29xf32> to vector<1x29xf32>
    %298 = vector.extract_strided_slice %286 {offsets = [11, 0], sizes = [1, 29], strides = [1, 1]} : vector<20x29xf32> to vector<1x29xf32>
    %299 = vector.extract_strided_slice %286 {offsets = [12, 0], sizes = [1, 29], strides = [1, 1]} : vector<20x29xf32> to vector<1x29xf32>
    %300 = vector.extract_strided_slice %286 {offsets = [13, 0], sizes = [1, 29], strides = [1, 1]} : vector<20x29xf32> to vector<1x29xf32>
    %301 = vector.extract_strided_slice %286 {offsets = [14, 0], sizes = [1, 29], strides = [1, 1]} : vector<20x29xf32> to vector<1x29xf32>
    %302 = vector.extract_strided_slice %286 {offsets = [15, 0], sizes = [1, 29], strides = [1, 1]} : vector<20x29xf32> to vector<1x29xf32>
    %303 = vector.extract_strided_slice %286 {offsets = [16, 0], sizes = [1, 29], strides = [1, 1]} : vector<20x29xf32> to vector<1x29xf32>
    %304 = vector.extract_strided_slice %286 {offsets = [17, 0], sizes = [1, 29], strides = [1, 1]} : vector<20x29xf32> to vector<1x29xf32>
    %305 = vector.extract_strided_slice %286 {offsets = [18, 0], sizes = [1, 29], strides = [1, 1]} : vector<20x29xf32> to vector<1x29xf32>
    %306 = vector.extract_strided_slice %286 {offsets = [19, 0], sizes = [1, 29], strides = [1, 1]} : vector<20x29xf32> to vector<1x29xf32>
    %307 = tpu.concatenate %287, %288, %289, %290, %291, %292, %293, %294, %295, %296, %297, %298, %299, %300, %301, %302 in 1 : vector<1x29xf32>, vector<1x29xf32>, vector<1x29xf32>, vector<1x29xf32>, vector<1x29xf32>, vector<1x29xf32>, vector<1x29xf32>, vector<1x29xf32>, vector<1x29xf32>, vector<1x29xf32>, vector<1x29xf32>, vector<1x29xf32>, vector<1x29xf32>, vector<1x29xf32>, vector<1x29xf32>, vector<1x29xf32> -> vector<1x464xf32>
    %308 = tpu.concatenate %303, %304, %305, %306 in 1 : vector<1x29xf32>, vector<1x29xf32>, vector<1x29xf32>, vector<1x29xf32> -> vector<1x116xf32>
    %309 = tpu.concatenate %307, %308 in 1 : vector<1x464xf32>, vector<1x116xf32> -> vector<1x580xf32>
    %c0_368 = arith.constant 0 : index
    %c0_369 = arith.constant 0 : index
    %310 = vector.load %arg8[%c0_368, %c0_369] : memref<580x100xf32, #tpu.memory_space<vmem>>, vector<580x100xf32>
    %cst_370 = arith.constant dense<0.000000e+00> : vector<1x100xf32>
    %311 = tpu.matmul %309, %310, %cst_370 {dimension_numbers = #tpu.dot_dimension_numbers<[1], [0], [0], [1], [0, 0, 1, 1], [], []>} : vector<1x580xf32>, vector<580x100xf32>, vector<1x100xf32> -> vector<1x100xf32>
    %c0_371 = arith.constant 0 : index
    %c0_372 = arith.constant 0 : index
    %312 = vector.load %arg9[%c0_371, %c0_372] : memref<1x100xf32, #tpu.memory_space<vmem>>, vector<1x100xf32>
    %313 = arith.addf %311, %312 : vector<1x100xf32>
    %314 = math.tanh %313 : vector<1x100xf32>
    %c0_373 = arith.constant 0 : index
    %c0_374 = arith.constant 0 : index
    %315 = vector.load %arg10[%c0_373, %c0_374] : memref<100x2xf32, #tpu.memory_space<vmem>>, vector<100x2xf32>
    %cst_375 = arith.constant dense<0.000000e+00> : vector<1x2xf32>
    %316 = tpu.matmul %314, %315, %cst_375 {dimension_numbers = #tpu.dot_dimension_numbers<[1], [0], [0], [1], [0, 0, 1, 1], [], []>} : vector<1x100xf32>, vector<100x2xf32>, vector<1x2xf32> -> vector<1x2xf32>
    %c0_376 = arith.constant 0 : index
    %c0_377 = arith.constant 0 : index
    %317 = vector.load %arg11[%c0_376, %c0_377] : memref<1x2xf32, #tpu.memory_space<vmem>>, vector<1x2xf32>
    %318 = arith.addf %316, %317 : vector<1x2xf32>
    %c0_378 = arith.constant 0 : index
    %c0_379 = arith.constant 0 : index
    %c0_380 = arith.constant 0 : index
    %319 = vector.load %arg12[%c0_378, %c0_379, %c0_380] : memref<1x1x2xf32, #tpu.memory_space<vmem>>, vector<1x1x2xf32>
    %320 = vector.shape_cast %319 : vector<1x1x2xf32> to vector<1x2xf32>
    %321 = vector.shape_cast %318 : vector<1x2xf32> to vector<1x1x2xf32>
    tpu.vector_store %arg12[%c0_378, %c0_379, %c0_380], %321 {strides = array<i32>} : memref<1x1x2xf32, #tpu.memory_space<vmem>>, vector<1x1x2xf32>,
    return
  }
  func.func @transform_0(%arg0: i32) -> (i32, i32, i32) {
    %c0_i32 = arith.constant 0 : i32
    %c0_i32_0 = arith.constant 0 : i32
    %c0_i32_1 = arith.constant 0 : i32
    return %arg0, %c0_i32, %c0_i32_0 : i32, i32, i32
  }
  func.func @transform_1(%arg0: i32) -> (i32, i32) {
    %c0_i32 = arith.constant 0 : i32
    %c0_i32_0 = arith.constant 0 : i32
    %c0_i32_1 = arith.constant 0 : i32
    return %c0_i32, %c0_i32_0 : i32, i32
  }
  func.func @transform_2(%arg0: i32) -> (i32, i32) {
    %c0_i32 = arith.constant 0 : i32
    %c0_i32_0 = arith.constant 0 : i32
    %c0_i32_1 = arith.constant 0 : i32
    return %c0_i32, %c0_i32_0 : i32, i32
  }
  func.func @transform_3(%arg0: i32) -> (i32, i32) {
    %c0_i32 = arith.constant 0 : i32
    %c0_i32_0 = arith.constant 0 : i32
    %c0_i32_1 = arith.constant 0 : i32
    return %c0_i32, %c0_i32_0 : i32, i32
  }
  func.func @transform_4(%arg0: i32) -> (i32, i32) {
    %c0_i32 = arith.constant 0 : i32
    %c0_i32_0 = arith.constant 0 : i32
    %c0_i32_1 = arith.constant 0 : i32
    return %c0_i32, %c0_i32_0 : i32, i32
  }
  func.func @transform_5(%arg0: i32) -> (i32, i32) {
    %c0_i32 = arith.constant 0 : i32
    %c0_i32_0 = arith.constant 0 : i32
    %c0_i32_1 = arith.constant 0 : i32
    return %c0_i32, %c0_i32_0 : i32, i32
  }
  func.func @transform_6(%arg0: i32) -> (i32, i32) {
    %c0_i32 = arith.constant 0 : i32
    %c0_i32_0 = arith.constant 0 : i32
    %c0_i32_1 = arith.constant 0 : i32
    return %c0_i32, %c0_i32_0 : i32, i32
  }
  func.func @transform_7(%arg0: i32) -> (i32, i32) {
    %c0_i32 = arith.constant 0 : i32
    %c0_i32_0 = arith.constant 0 : i32
    %c0_i32_1 = arith.constant 0 : i32
    return %c0_i32, %c0_i32_0 : i32, i32
  }
  func.func @transform_8(%arg0: i32) -> (i32, i32) {
    %c0_i32 = arith.constant 0 : i32
    %c0_i32_0 = arith.constant 0 : i32
    %c0_i32_1 = arith.constant 0 : i32
    return %c0_i32, %c0_i32_0 : i32, i32
  }
  func.func @transform_9(%arg0: i32) -> (i32, i32) {
    %c0_i32 = arith.constant 0 : i32
    %c0_i32_0 = arith.constant 0 : i32
    %c0_i32_1 = arith.constant 0 : i32
    return %c0_i32, %c0_i32_0 : i32, i32
  }
  func.func @transform_10(%arg0: i32) -> (i32, i32) {
    %c0_i32 = arith.constant 0 : i32
    %c0_i32_0 = arith.constant 0 : i32
    %c0_i32_1 = arith.constant 0 : i32
    return %c0_i32, %c0_i32_0 : i32, i32
  }
  func.func @transform_11(%arg0: i32) -> (i32, i32, i32) {
    %c0_i32 = arith.constant 0 : i32
    %c0_i32_0 = arith.constant 0 : i32
    %c0_i32_1 = arith.constant 0 : i32
    return %arg0, %c0_i32, %c0_i32_0 : i32, i32, i32
  }
}

</mosaic_0001>

<llo_original>
// kernel: forward.1
$region0: #{forward.1}
  #allocation0 [shape = 'u32[]', space=smem, size = 0x4, offset = 0x4, fixed_abs, tag = 'smem constant byte address 0x4 - core index']
  #allocation1 [shape = 'u32[144,128]{1,0:T(1,128)}', space=vmem, size = 0x12000, scoped, tag = 'internal scratch']
  #allocation2 [shape = 'f32[2,310]{1,0:T(2,128)}', space=vmem, size = 0xc00, scoped, tag = 'scratch operand']
  #allocation3 [shape = 'f32[5,311]{1,0:T(8,128)}', space=vmem, size = 0x3000, scoped, tag = 'scratch operand']
  #allocation4 [shape = 'f32[10,130]{1,0:T(8,128)}', space=vmem, size = 0x4000, scoped, tag = 'scratch operand']
  #allocation5 [shape = 'f32[120,251]{1,0:T(8,128)}', space=vmem, size = 0x1e000, scoped, tag = 'scratch operand']
  #allocation6 [shape = 'f32[150,282]{1,0:T(8,128)}', space=vmem, size = 0x39000, scoped, tag = 'scratch operand']
  #allocation7 [shape = 'f32[150,116]{1,0:T(8,128)}', space=vmem, size = 0x13000, scoped, tag = 'scratch operand']
  %s0 = inlined_call_operand.vmem [shape: f32[2,2,250], index: 0, kind: input, shape index: {}]
  %s1 = inlined_call_operand.vmem [shape: f32[5,120], index: 1, kind: input, shape index: {}]
  %s2 = inlined_call_operand.vmem [shape: f32[5,1], index: 2, kind: input, shape index: {}]
  %s3 = inlined_call_operand.vmem [shape: f32[10,150], index: 3, kind: input, shape index: {}]
  %s4 = inlined_call_operand.vmem [shape: f32[10,1], index: 4, kind: input, shape index: {}]
  %s5 = inlined_call_operand.vmem [shape: f32[20,150], index: 5, kind: input, shape index: {}]
  %s6 = inlined_call_operand.vmem [shape: f32[20,1], index: 6, kind: input, shape index: {}]
  %s7 = inlined_call_operand.vmem [shape: f32[580,100], index: 7, kind: input, shape index: {}]
  %s8 = inlined_call_operand.vmem [shape: f32[1,100], index: 8, kind: input, shape index: {}]
  %s9 = inlined_call_operand.vmem [shape: f32[100,2], index: 9, kind: input, shape index: {}]
  %s10 = inlined_call_operand.vmem [shape: f32[1,2], index: 10, kind: input, shape index: {}]
  %s11 = inlined_call_operand.hbm [shape: f32[2,1,2], index: 11, kind: output, shape index: {}]
  %s12 = sld [smem:[#allocation0]]
  $region77: #{forward.1} parent=0
    _
  %s14 = ssub.s32 1, %s12
  %s15 = scalar_select 0, %s14, %s12
  $region1: #{forward.1} parent=0
    #allocation8 [shape = 'u8[1024]{0}', space=vmem, size = 0x400, scoped, tag = 'output window, operand 0']
    #allocation9 [shape = 's32[2]{0}', space=sflag, size = 0x8, scoped, tag = 'scoped memory for forward.1']
    %16 = vsyncpa [#allocation9], 0
    %s17 = scalar_lea.sflag [#allocation9], 1
    %18 = vsyncpa %s17, 0
    loop: start=0, step=1, limit=4
    $region2: #{forward.1} parent=1 // loop_pre_header
      _
    $region3: #{forward.1} parent=1 // loop_header
      %s20 = sphi 0, %s24
      %p21 = scmp.ge.s32.totalorder %s20, 4
      %s30 = sphi 0, %s32
      %s33 = sphi 0, %s30
      %s34 = sphi 0, %s33
      %s50 = sphi 0, %s34
      %s54 = sphi 0, %s54
      %s56 = sphi 0, %s54
      %s57 = sphi 0, %s56
      %s71 = sphi 0, %s57
      %s75 = sphi 0, %s75
      %s77 = sphi 0, %s75
      %s78 = sphi 0, %s77
      %s92 = sphi 0, %s78
      %s96 = sphi 0, %s96
      %s98 = sphi 0, %s96
      %s99 = sphi 0, %s98
      %s113 = sphi 0, %s99
      %s117 = sphi 0, %s117
      %s119 = sphi 0, %s117
      %s120 = sphi 0, %s119
      %s134 = sphi 0, %s120
      %s138 = sphi 0, %s138
      %s140 = sphi 0, %s138
      %s141 = sphi 0, %s140
      %s155 = sphi 0, %s141
      %s159 = sphi 0, %s159
      %s161 = sphi 0, %s159
      %s162 = sphi 0, %s161
      %s176 = sphi 0, %s162
      %s180 = sphi 0, %s180
      %s182 = sphi 0, %s180
      %s183 = sphi 0, %s182
      %s197 = sphi 0, %s183
      %s201 = sphi 0, %s201
      %s203 = sphi 0, %s201
      %s204 = sphi 0, %s203
      %s218 = sphi 0, %s204
      %s222 = sphi 0, %s222
      %s224 = sphi 0, %s222
      %s225 = sphi 0, %s224
      %s239 = sphi 0, %s225
      %s243 = sphi 0, %s243
      %s245 = sphi 0, %s243
      %s246 = sphi 0, %s245
      %s260 = sphi 0, %s246
      %s266 = sphi 0, %s268
      %s269 = sphi 0, %s266
      %s270 = sphi 0, %s269
      %s286 = sphi 0, %s270
    $region4: #{forward.1} parent=1 // loop_header_branch
      %23 = sbr.rel (%p21) target = $region8
    $region5: #{forward.1} parent=1 // loop_body
      %s25 = ssub.s32 %s20, 1
      %s26 = ssub.s32 %s20, 2
      %s27 = sadd.s32 %s20, 1
      %s28 = ssub.s32 %s20, %s27
      %p29 = scmp.eq.s32.totalorder %s28, 0
      %s31 = sadd.s32 %s30, 1
      %s32 = scalar_select %p29, %s30, %s31
      %p35 = pneg %p29
      %p36 = scmp.eq.s32.totalorder %s20, 1
      %p37 = por %p35, %p36
      %p38 = scmp.ne.s32.totalorder %s30, %s33
      %p39 = scmp.eq.s32.totalorder %s20, 0
      %p40 = por %p38, %p39
      %p41 = scmp.ne.s32.totalorder %s30, %s33
      %p42 = scmp.eq.s32.totalorder %s25, 1
      %p43 = por %p41, %p42
      %p44 = scmp.ne.s32.totalorder %s33, %s34
      %p45 = scmp.eq.s32.totalorder %s25, 0
      %p46 = por %p44, %p45
      %p47 = scmp.ne.s32.totalorder %s33, %s34
      %p48 = scmp.eq.s32.totalorder %s26, 1
      %p49 = por %p47, %p48
      %p51 = scmp.ne.s32.totalorder %s34, %s50
      %p52 = scmp.eq.s32.totalorder %s26, 0
      %p53 = por %p51, %p52
      %s55 = sadd.s32 %s54, 1
      %p58 = scmp.eq.s32.totalorder %s20, 1
      %p59 = scmp.ne.s32.totalorder %s54, %s56
      %p60 = scmp.eq.s32.totalorder %s20, 0
      %p61 = por %p59, %p60
      %p62 = scmp.ne.s32.totalorder %s54, %s56
      %p63 = scmp.eq.s32.totalorder %s25, 1
      %p64 = por %p62, %p63
      %p65 = scmp.ne.s32.totalorder %s56, %s57
      %p66 = scmp.eq.s32.totalorder %s25, 0
      %p67 = por %p65, %p66
      %p68 = scmp.ne.s32.totalorder %s56, %s57
      %p69 = scmp.eq.s32.totalorder %s26, 1
      %p70 = por %p68, %p69
      %p72 = scmp.ne.s32.totalorder %s57, %s71
      %p73 = scmp.eq.s32.totalorder %s26, 0
      %p74 = por %p72, %p73
      %s76 = sadd.s32 %s75, 1
      %p79 = scmp.eq.s32.totalorder %s20, 1
      %p80 = scmp.ne.s32.totalorder %s75, %s77
      %p81 = scmp.eq.s32.totalorder %s20, 0
      %p82 = por %p80, %p81
      %p83 = scmp.ne.s32.totalorder %s75, %s77
      %p84 = scmp.eq.s32.totalorder %s25, 1
      %p85 = por %p83, %p84
      %p86 = scmp.ne.s32.totalorder %s77, %s78
      %p87 = scmp.eq.s32.totalorder %s25, 0
      %p88 = por %p86, %p87
      %p89 = scmp.ne.s32.totalorder %s77, %s78
      %p90 = scmp.eq.s32.totalorder %s26, 1
      %p91 = por %p89, %p90
      %p93 = scmp.ne.s32.totalorder %s78, %s92
      %p94 = scmp.eq.s32.totalorder %s26, 0
      %p95 = por %p93, %p94
      %s97 = sadd.s32 %s96, 1
      %p100 = scmp.eq.s32.totalorder %s20, 1
      %p101 = scmp.ne.s32.totalorder %s96, %s98
      %p102 = scmp.eq.s32.totalorder %s20, 0
      %p103 = por %p101, %p102
      %p104 = scmp.ne.s32.totalorder %s96, %s98
      %p105 = scmp.eq.s32.totalorder %s25, 1
      %p106 = por %p104, %p105
      %p107 = scmp.ne.s32.totalorder %s98, %s99
      %p108 = scmp.eq.s32.totalorder %s25, 0
      %p109 = por %p107, %p108
      %p110 = scmp.ne.s32.totalorder %s98, %s99
      %p111 = scmp.eq.s32.totalorder %s26, 1
      %p112 = por %p110, %p111
      %p114 = scmp.ne.s32.totalorder %s99, %s113
      %p115 = scmp.eq.s32.totalorder %s26, 0
      %p116 = por %p114, %p115
      %s118 = sadd.s32 %s117, 1
      %p121 = scmp.eq.s32.totalorder %s20, 1
      %p122 = scmp.ne.s32.totalorder %s117, %s119
      %p123 = scmp.eq.s32.totalorder %s20, 0
      %p124 = por %p122, %p123
      %p125 = scmp.ne.s32.totalorder %s117, %s119
      %p126 = scmp.eq.s32.totalorder %s25, 1
      %p127 = por %p125, %p126
      %p128 = scmp.ne.s32.totalorder %s119, %s120
      %p129 = scmp.eq.s32.totalorder %s25, 0
      %p130 = por %p128, %p129
      %p131 = scmp.ne.s32.totalorder %s119, %s120
      %p132 = scmp.eq.s32.totalorder %s26, 1
      %p133 = por %p131, %p132
      %p135 = scmp.ne.s32.totalorder %s120, %s134
      %p136 = scmp.eq.s32.totalorder %s26, 0
      %p137 = por %p135, %p136
      %s139 = sadd.s32 %s138, 1
      %p142 = scmp.eq.s32.totalorder %s20, 1
      %p143 = scmp.ne.s32.totalorder %s138, %s140
      %p144 = scmp.eq.s32.totalorder %s20, 0
      %p145 = por %p143, %p144
      %p146 = scmp.ne.s32.totalorder %s138, %s140
      %p147 = scmp.eq.s32.totalorder %s25, 1
      %p148 = por %p146, %p147
      %p149 = scmp.ne.s32.totalorder %s140, %s141
      %p150 = scmp.eq.s32.totalorder %s25, 0
      %p151 = por %p149, %p150
      %p152 = scmp.ne.s32.totalorder %s140, %s141
      %p153 = scmp.eq.s32.totalorder %s26, 1
      %p154 = por %p152, %p153
      %p156 = scmp.ne.s32.totalorder %s141, %s155
      %p157 = scmp.eq.s32.totalorder %s26, 0
      %p158 = por %p156, %p157
      %s160 = sadd.s32 %s159, 1
      %p163 = scmp.eq.s32.totalorder %s20, 1
      %p164 = scmp.ne.s32.totalorder %s159, %s161
      %p165 = scmp.eq.s32.totalorder %s20, 0
      %p166 = por %p164, %p165
      %p167 = scmp.ne.s32.totalorder %s159, %s161
      %p168 = scmp.eq.s32.totalorder %s25, 1
      %p169 = por %p167, %p168
      %p170 = scmp.ne.s32.totalorder %s161, %s162
      %p171 = scmp.eq.s32.totalorder %s25, 0
      %p172 = por %p170, %p171
      %p173 = scmp.ne.s32.totalorder %s161, %s162
      %p174 = scmp.eq.s32.totalorder %s26, 1
      %p175 = por %p173, %p174
      %p177 = scmp.ne.s32.totalorder %s162, %s176
      %p178 = scmp.eq.s32.totalorder %s26, 0
      %p179 = por %p177, %p178
      %s181 = sadd.s32 %s180, 1
      %p184 = scmp.eq.s32.totalorder %s20, 1
      %p185 = scmp.ne.s32.totalorder %s180, %s182
      %p186 = scmp.eq.s32.totalorder %s20, 0
      %p187 = por %p185, %p186
      %p188 = scmp.ne.s32.totalorder %s180, %s182
      %p189 = scmp.eq.s32.totalorder %s25, 1
      %p190 = por %p188, %p189
      %p191 = scmp.ne.s32.totalorder %s182, %s183
      %p192 = scmp.eq.s32.totalorder %s25, 0
      %p193 = por %p191, %p192
      %p194 = scmp.ne.s32.totalorder %s182, %s183
      %p195 = scmp.eq.s32.totalorder %s26, 1
      %p196 = por %p194, %p195
      %p198 = scmp.ne.s32.totalorder %s183, %s197
      %p199 = scmp.eq.s32.totalorder %s26, 0
      %p200 = por %p198, %p199
      %s202 = sadd.s32 %s201, 1
      %p205 = scmp.eq.s32.totalorder %s20, 1
      %p206 = scmp.ne.s32.totalorder %s201, %s203
      %p207 = scmp.eq.s32.totalorder %s20, 0
      %p208 = por %p206, %p207
      %p209 = scmp.ne.s32.totalorder %s201, %s203
      %p210 = scmp.eq.s32.totalorder %s25, 1
      %p211 = por %p209, %p210
      %p212 = scmp.ne.s32.totalorder %s203, %s204
      %p213 = scmp.eq.s32.totalorder %s25, 0
      %p214 = por %p212, %p213
      %p215 = scmp.ne.s32.totalorder %s203, %s204
      %p216 = scmp.eq.s32.totalorder %s26, 1
      %p217 = por %p215, %p216
      %p219 = scmp.ne.s32.totalorder %s204, %s218
      %p220 = scmp.eq.s32.totalorder %s26, 0
      %p221 = por %p219, %p220
      %s223 = sadd.s32 %s222, 1
      %p226 = scmp.eq.s32.totalorder %s20, 1
      %p227 = scmp.ne.s32.totalorder %s222, %s224
      %p228 = scmp.eq.s32.totalorder %s20, 0
      %p229 = por %p227, %p228
      %p230 = scmp.ne.s32.totalorder %s222, %s224
      %p231 = scmp.eq.s32.totalorder %s25, 1
      %p232 = por %p230, %p231
      %p233 = scmp.ne.s32.totalorder %s224, %s225
      %p234 = scmp.eq.s32.totalorder %s25, 0
      %p235 = por %p233, %p234
      %p236 = scmp.ne.s32.totalorder %s224, %s225
      %p237 = scmp.eq.s32.totalorder %s26, 1
      %p238 = por %p236, %p237
      %p240 = scmp.ne.s32.totalorder %s225, %s239
      %p241 = scmp.eq.s32.totalorder %s26, 0
      %p242 = por %p240, %p241
      %s244 = sadd.s32 %s243, 1
      %p247 = scmp.eq.s32.totalorder %s20, 1
      %p248 = scmp.ne.s32.totalorder %s243, %s245
      %p249 = scmp.eq.s32.totalorder %s20, 0
      %p250 = por %p248, %p249
      %p251 = scmp.ne.s32.totalorder %s243, %s245
      %p252 = scmp.eq.s32.totalorder %s25, 1
      %p253 = por %p251, %p252
      %p254 = scmp.ne.s32.totalorder %s245, %s246
      %p255 = scmp.eq.s32.totalorder %s25, 0
      %p256 = por %p254, %p255
      %p257 = scmp.ne.s32.totalorder %s245, %s246
      %p258 = scmp.eq.s32.totalorder %s26, 1
      %p259 = por %p257, %p258
      %p261 = scmp.ne.s32.totalorder %s246, %s260
      %p262 = scmp.eq.s32.totalorder %s26, 0
      %p263 = por %p261, %p262
      %s264 = ssub.s32 %s20, %s27
      %p265 = scmp.eq.s32.totalorder %s264, 0
      %s267 = sadd.s32 %s266, 1
      %s268 = scalar_select %p265, %s266, %s267
      %p271 = pneg %p265
      %p272 = scmp.eq.s32.totalorder %s20, 1
      %p273 = por %p271, %p272
      %p274 = scmp.ne.s32.totalorder %s266, %s269
      %p275 = scmp.eq.s32.totalorder %s20, 0
      %p276 = por %p274, %p275
      %p277 = scmp.ne.s32.totalorder %s266, %s269
      %p278 = scmp.eq.s32.totalorder %s25, 1
      %p279 = por %p277, %p278
      %p280 = scmp.ne.s32.totalorder %s269, %s270
      %p281 = scmp.eq.s32.totalorder %s25, 0
      %p282 = por %p280, %p281
      %p283 = scmp.ne.s32.totalorder %s269, %s270
      %p284 = scmp.eq.s32.totalorder %s26, 1
      %p285 = por %p283, %p284
      %p287 = scmp.ne.s32.totalorder %s270, %s286
      %p288 = scmp.eq.s32.totalorder %s26, 0
      %p289 = por %p287, %p288
      %p290 = scmp.le.s32.totalorder 1, %s20
      %p291 = scmp.lt.s32.totalorder %s20, 3
      %p292 = pnand %p290, %p291
      %p293 = pneg %p292
      // Predicated region
      $region9: #{forward.1} parent=5 // pred_check
        _
      $region10: #{forward.1} parent=5 // pred_check_branch
        %295 = sbr.rel (%p292) target = $region12
      $region11: #{forward.1} parent=5 // pred_region
        %s296 = ssub.s32 %s20, 1
        // Predicated region
        $region13: #{forward.1} parent=11 // pred_check
          %p297 = pneg %p67
        $region14: #{forward.1} parent=11 // pred_check_branch
          %299 = sbr.rel (%p297) target = $region16
        $region15: #{forward.1} parent=11 // pred_region
          _
        $region16: #{forward.1} parent=11 // pred_fallthru
          _
        // Predicated region
        $region17: #{forward.1} parent=11 // pred_check
          %p300 = pneg %p88
        $region18: #{forward.1} parent=11 // pred_check_branch
          %302 = sbr.rel (%p300) target = $region20
        $region19: #{forward.1} parent=11 // pred_region
          _
        $region20: #{forward.1} parent=11 // pred_fallthru
          _
        // Predicated region
        $region21: #{forward.1} parent=11 // pred_check
          %p303 = pneg %p109
        $region22: #{forward.1} parent=11 // pred_check_branch
          %305 = sbr.rel (%p303) target = $region24
        $region23: #{forward.1} parent=11 // pred_region
          _
        $region24: #{forward.1} parent=11 // pred_fallthru
          _
        // Predicated region
        $region25: #{forward.1} parent=11 // pred_check
          %p306 = pneg %p130
        $region26: #{forward.1} parent=11 // pred_check_branch
          %308 = sbr.rel (%p306) target = $region28
        $region27: #{forward.1} parent=11 // pred_region
          _
        $region28: #{forward.1} parent=11 // pred_fallthru
          _
        // Predicated region
        $region29: #{forward.1} parent=11 // pred_check
          %p309 = pneg %p151
        $region30: #{forward.1} parent=11 // pred_check_branch
          %311 = sbr.rel (%p309) target = $region32
        $region31: #{forward.1} parent=11 // pred_region
          _
        $region32: #{forward.1} parent=11 // pred_fallthru
          _
        // Predicated region
        $region33: #{forward.1} parent=11 // pred_check
          %p312 = pneg %p172
        $region34: #{forward.1} parent=11 // pred_check_branch
          %314 = sbr.rel (%p312) target = $region36
        $region35: #{forward.1} parent=11 // pred_region
          _
        $region36: #{forward.1} parent=11 // pred_fallthru
          _
        // Predicated region
        $region37: #{forward.1} parent=11 // pred_check
          %p315 = pneg %p193
        $region38: #{forward.1} parent=11 // pred_check_branch
          %317 = sbr.rel (%p315) target = $region40
        $region39: #{forward.1} parent=11 // pred_region
          _
        $region40: #{forward.1} parent=11 // pred_fallthru
          _
        // Predicated region
        $region41: #{forward.1} parent=11 // pred_check
          %p318 = pneg %p214
        $region42: #{forward.1} parent=11 // pred_check_branch
          %320 = sbr.rel (%p318) target = $region44
        $region43: #{forward.1} parent=11 // pred_region
          _
        $region44: #{forward.1} parent=11 // pred_fallthru
          _
        // Predicated region
        $region45: #{forward.1} parent=11 // pred_check
          %p321 = pneg %p235
        $region46: #{forward.1} parent=11 // pred_check_branch
          %323 = sbr.rel (%p321) target = $region48
        $region47: #{forward.1} parent=11 // pred_region
          _
        $region48: #{forward.1} parent=11 // pred_fallthru
          _
        // Predicated region
        $region49: #{forward.1} parent=11 // pred_check
          %p324 = pneg %p256
        $region50: #{forward.1} parent=11 // pred_check_branch
          %326 = sbr.rel (%p324) target = $region52
        $region51: #{forward.1} parent=11 // pred_region
          _
        $region52: #{forward.1} parent=11 // pred_fallthru
          _
      $region12: #{forward.1} parent=5 // pred_fallthru
        _
      %p327 = scmp.lt.s32.totalorder %s20, 2
      // Predicated region
      $region53: #{forward.1} parent=5 // pred_check
        %p328 = pneg %p327
      $region54: #{forward.1} parent=5 // pred_check_branch
        %330 = sbr.rel (%p328) target = $region56
      $region55: #{forward.1} parent=5 // pred_region
        // Predicated region
        $region57: #{forward.1} parent=55 // pred_check
          %p331 = pneg %p40
        $region58: #{forward.1} parent=55 // pred_check_branch
          %333 = sbr.rel (%p331) target = $region60
        $region59: #{forward.1} parent=55 // pred_region
          %p334 = scmp.lt.s32.totalorder %s20, 1
          %s335 = scalar_select %p334, %s20, 1
          %s336 = smul.addr %s335, 2
          %s337 = smul.addr %s336, 2
          %s338 = scalar_lea.vmem %s0, %s337
        $region60: #{forward.1} parent=55 // pred_fallthru
          _
      $region56: #{forward.1} parent=5 // pred_fallthru
        _
      %p339 = scmp.le.s32.totalorder 1, %s20
      %p340 = scmp.lt.s32.totalorder %s20, 3
      %p341 = pnand %p339, %p340
      %p342 = pneg %p341
      // Predicated region
      $region61: #{forward.1} parent=5 // pred_check
        _
      $region62: #{forward.1} parent=5 // pred_check_branch
        %344 = sbr.rel (%p341) target = $region64
      $region63: #{forward.1} parent=5 // pred_region
        %s345 = ssub.s32 %s20, 1
        %p346 = scmp.lt.s32.totalorder %s25, 1
        %s347 = scalar_select %p346, %s25, 1
        %s348 = smul.addr %s347, 2
        %s349 = smul.addr %s348, 2
        %s350 = scalar_lea.vmem %s0, %s349
        %p351 = pneg %p46
        %p352 = pneg %p43
        %p353 = pneg %p67
        %p354 = pneg %p64
        %p355 = pneg %p88
        %p356 = pneg %p85
        %p357 = pneg %p109
        %p358 = pneg %p106
        %p359 = pneg %p130
        %p360 = pneg %p127
        %p361 = pneg %p151
        %p362 = pneg %p148
        %p363 = pneg %p172
        %p364 = pneg %p169
        %p365 = pneg %p193
        %p366 = pneg %p190
        %p367 = pneg %p214
        %p368 = pneg %p211
        %p369 = pneg %p235
        %p370 = pneg %p232
        %p371 = pneg %p256
        %p372 = pneg %p253
        %p373 = pneg %p282
        %p374 = pneg %p279
        %s375 = sand.u32 %s269, 1
        %s376 = scalar_lea.sflag [#allocation9], %s375
        %s377 = sand.u32 %s269, 1
        %s378 = scalar_lea.vmem [#allocation8], %s377
        %p379 = scmp.lt.s32.totalorder %s25, 1
        %s380 = scalar_select %p379, %s25, 1
        %s381 = smul.addr %s380, 2
        %s382 = smul.addr %s381, 2
        %s383 = scalar_lea.vmem %s0, %s382
        %vm384 = vcmask 1041408
        %vm385 = vcmask 1043458
        %vm386 = vmor %vm385, %vm384
        %vm387 = vcmask 439300
        %vm388 = vmor %vm387, %vm386
        %389 = vst.msk [vmem:[#allocation2] sm:$0x3f] %vm388, 0.0
        %v390 = vld [vmem:[%s383] sm:$0xf]
        %392 = vrot.lane.b32.xlu0 %v390, 30
        %v393 = vpop.permute.xlu0 %392
        %v394 = vrot.slane %v393, 6
        %vm395 = vcmask 244736
        %v396 = vsel %vm395, %v394, %v393
        %vm398 = vcmask 1041648
        %vm399 = vmor %vm385, %vm398
        %vm400 = vcmask 193540
        %vm401 = vmor %vm400, %vm399
        %402 = vst.msk [vmem:[#allocation2] sm:$0x3f] %vm401, %v396
        %v403 = vld [vmem:[#allocation2] sm:$0xf]
        %v406 = vunpack.c.l.s4 1983009808
        %v407 = vunpack.c.0.s8 %v406
        %v408 = vlaneseq
        %v409 = vshrl.u32 %v408, 7
        %v410 = vsub.s32 %v407, %v409
        %v411 = vrot.slane %v403, %v410
        %v412 = vcombine.high %v411, %v411
        %415 = vst [vmem:[#allocation5] sm:$0x3] %v411
        %vm416 = vcmask 1000448
        %417 = vst.msk [vmem:[#allocation5 + $0x8] sm:$0x3] %vm416, %v412
        %v418 = vld [vmem:[#allocation2] sm:$0xf]
        %v420 = vcombine.low %v418, %v418
        %v422 = vunpack.c.l.s4 1983009808
        %v423 = vunpack.c.0.s8 %v422
        %v424 = vlaneseq
        %v425 = vshrl.u32 %v424, 7
        %v426 = vsub.s32 %v423, %v425
        %v427 = vrot.slane %v420, %v426
        %v428 = vcombine.high %v427, %v427
        %429 = vrot.lane.b32.xlu0 %v427, 127
        %v430 = vpop.permute.xlu0 %429
        %431 = vrot.lane.b32.xlu0 %v428, 127
        %v432 = vpop.permute.xlu0 %431
        %vm433 = vcmask 1039360
        %v434 = vsel %vm433, %v430, %v432
        %437 = vst [vmem:[#allocation5] sm:$0xc] %v434
        %vm438 = vcmask 1002498
        %439 = vst.msk [vmem:[#allocation5 + $0x8] sm:$0xc] %vm438, %v432
        %v440 = vld [vmem:[#allocation2] sm:$0xf]
        %v443 = vunpack.c.l.s4 1983009808
        %v444 = vunpack.c.0.s8 %v443
        %v445 = vlaneseq
        %v446 = vshrl.u32 %v445, 7
        %v447 = vsub.s32 %v444, %v446
        %v448 = vrot.slane %v440, %v447
        %v449 = vcombine.low %v448, %v448
        %450 = vrot.lane.b32.xlu0 %v449, 126
        %v451 = vpop.permute.xlu0 %450
        %452 = vrot.lane.b32.xlu0 %v448, 126
        %v453 = vpop.permute.xlu0 %452
        %vm454 = vcmask 1031168
        %v455 = vsel %vm454, %v451, %v453
        %458 = vst [vmem:[#allocation5] sm:$0x30] %v455
        %vm459 = vcmask 1004548
        %460 = vst.msk [vmem:[#allocation5 + $0x8] sm:$0x30] %vm459, %v453
        %v461 = vld [vmem:[#allocation2] sm:$0xf]
        %v463 = vcombine.low %v461, %v461
        %v465 = vunpack.c.l.s4 1983009808
        %v466 = vunpack.c.0.s8 %v465
        %v467 = vlaneseq
        %v468 = vshrl.u32 %v467, 7
        %v469 = vsub.s32 %v466, %v468
        %v470 = vrot.slane %v463, %v469
        %v471 = vcombine.low %v470, %v470
        %472 = vrot.lane.b32.xlu0 %v471, 125
        %v473 = vpop.permute.xlu0 %472
        %474 = vrot.lane.b32.xlu0 %v470, 125
        %v475 = vpop.permute.xlu0 %474
        %vm476 = vcmask 1022976
        %v477 = vsel %vm476, %v473, %v475
        %480 = vst [vmem:[#allocation5] sm:$0xc0] %v477
        %vm481 = vcmask 1006598
        %482 = vst.msk [vmem:[#allocation5 + $0x8] sm:$0xc0] %vm481, %v475
        %v483 = vld [vmem:[#allocation2] sm:$0xf]
        %v486 = vunpack.c.l.s4 1983009808
        %v487 = vunpack.c.0.s8 %v486
        %v488 = vlaneseq
        %v489 = vshrl.u32 %v488, 7
        %v490 = vsub.s32 %v487, %v489
        %v491 = vrot.slane %v483, %v490
        %v492 = vcombine.high %v491, %v491
        %493 = vrot.lane.b32.xlu0 %v491, 124
        %v494 = vpop.permute.xlu0 %493
        %495 = vrot.lane.b32.xlu0 %v492, 124
        %v496 = vpop.permute.xlu0 %495
        %vm497 = vcmask 1014784
        %v498 = vsel %vm497, %v494, %v496
        %501 = vst [vmem:[#allocation5 + $0x10] sm:$0x3] %v498
        %502 = vst.msk [vmem:[#allocation5 + $0x18] sm:$0x3] %vm416, %v496
        %v503 = vld [vmem:[#allocation2] sm:$0xf]
        %v505 = vcombine.low %v503, %v503
        %v507 = vunpack.c.l.s4 1983009808
        %v508 = vunpack.c.0.s8 %v507
        %v509 = vlaneseq
        %v510 = vshrl.u32 %v509, 7
        %v511 = vsub.s32 %v508, %v510
        %v512 = vrot.slane %v505, %v511
        %v513 = vcombine.high %v512, %v512
        %514 = vrot.lane.b32.xlu0 %v512, 123
        %v515 = vpop.permute.xlu0 %514
        %516 = vrot.lane.b32.xlu0 %v513, 123
        %v517 = vpop.permute.xlu0 %516
        %vm518 = vcmask 1006592
        %v519 = vsel %vm518, %v515, %v517
        %522 = vst [vmem:[#allocation5 + $0x10] sm:$0xc] %v519
        %523 = vst.msk [vmem:[#allocation5 + $0x18] sm:$0xc] %vm438, %v517
        %v524 = vld [vmem:[#allocation2] sm:$0x3f]
        %v526 = vcombine.high %v524, %v524
        %v528 = vunpack.c.l.s4 1983009808
        %v529 = vunpack.c.0.s8 %v528
        %v530 = vlaneseq
        %v531 = vshrl.u32 %v530, 7
        %v532 = vsub.s32 %v529, %v531
        %v533 = vrot.slane %v524, %v532
        %v535 = vunpack.c.l.s4 1983009808
        %v536 = vunpack.c.0.s8 %v535
        %v537 = vlaneseq
        %v538 = vshrl.u32 %v537, 7
        %v539 = vsub.s32 %v536, %v538
        %v540 = vrot.slane %v526, %v539
        %v541 = vcombine.low %v533, %v533
        %v542 = vcombine.low %v540, %v540
        %543 = vrot.lane.b32.xlu0 %v541, 122
        %v544 = vpop.permute.xlu0 %543
        %545 = vrot.lane.b32.xlu0 %v533, 122
        %v546 = vpop.permute.xlu0 %545
        %547 = vrot.lane.b32.xlu0 %v542, 122
        %v548 = vpop.permute.xlu0 %547
        %vm549 = vcmask 998400
        %v550 = vsel %vm549, %v544, %v546
        %v551 = vsel %vm549, %v546, %v548
        %554 = vst [vmem:[#allocation5 + $0x10] sm:$0x30] %v550
        %555 = vst.msk [vmem:[#allocation5 + $0x18] sm:$0x30] %vm459, %v551
        %v556 = vld [vmem:[#allocation2] sm:$0x3f]
        %v558 = vcombine.low %v556, %v556
        %v560 = vunpack.c.l.s4 1983009808
        %v561 = vunpack.c.0.s8 %v560
        %v562 = vlaneseq
        %v563 = vshrl.u32 %v562, 7
        %v564 = vsub.s32 %v561, %v563
        %v565 = vrot.slane %v558, %v564
        %v567 = vunpack.c.l.s4 1983009808
        %v568 = vunpack.c.0.s8 %v567
        %v569 = vlaneseq
        %v570 = vshrl.u32 %v569, 7
        %v571 = vsub.s32 %v568, %v570
        %v572 = vrot.slane %v556, %v571
        %v573 = vcombine.low %v565, %v565
        %v574 = vcombine.low %v572, %v572
        %575 = vrot.lane.b32.xlu0 %v573, 121
        %v576 = vpop.permute.xlu0 %575
        %577 = vrot.lane.b32.xlu0 %v565, 121
        %v578 = vpop.permute.xlu0 %577
        %579 = vrot.lane.b32.xlu0 %v574, 121
        %v580 = vpop.permute.xlu0 %579
        %vm581 = vcmask 990208
        %v582 = vsel %vm581, %v576, %v578
        %v583 = vsel %vm581, %v578, %v580
        %586 = vst [vmem:[#allocation5 + $0x10] sm:$0xc0] %v582
        %587 = vst.msk [vmem:[#allocation5 + $0x18] sm:$0xc0] %vm481, %v583
        %v588 = vld [vmem:[#allocation2] sm:$0x3f]
        %v590 = vcombine.high %v588, %v588
        %v592 = vunpack.c.l.s4 1983009808
        %v593 = vunpack.c.0.s8 %v592
        %v594 = vlaneseq
        %v595 = vshrl.u32 %v594, 7
        %v596 = vsub.s32 %v593, %v595
        %v597 = vrot.slane %v588, %v596
        %v599 = vunpack.c.l.s4 1983009808
        %v600 = vunpack.c.0.s8 %v599
        %v601 = vlaneseq
        %v602 = vshrl.u32 %v601, 7
        %v603 = vsub.s32 %v600, %v602
        %v604 = vrot.slane %v590, %v603
        %v605 = vcombine.high %v597, %v597
        %606 = vrot.lane.b32.xlu0 %v597, 120
        %v607 = vpop.permute.xlu0 %606
        %608 = vrot.lane.b32.xlu0 %v605, 120
        %v609 = vpop.permute.xlu0 %608
        %610 = vrot.lane.b32.xlu0 %v604, 120
        %v611 = vpop.permute.xlu0 %610
        %vm612 = vcmask 982016
        %v613 = vsel %vm612, %v607, %v609
        %v614 = vsel %vm612, %v609, %v611
        %617 = vst [vmem:[#allocation5 + $0x20] sm:$0x3] %v613
        %618 = vst.msk [vmem:[#allocation5 + $0x28] sm:$0x3] %vm416, %v614
        %v619 = vld [vmem:[#allocation2] sm:$0x3f]
        %v621 = vcombine.low %v619, %v619
        %v623 = vunpack.c.l.s4 1983009808
        %v624 = vunpack.c.0.s8 %v623
        %v625 = vlaneseq
        %v626 = vshrl.u32 %v625, 7
        %v627 = vsub.s32 %v624, %v626
        %v628 = vrot.slane %v621, %v627
        %v630 = vunpack.c.l.s4 1983009808
        %v631 = vunpack.c.0.s8 %v630
        %v632 = vlaneseq
        %v633 = vshrl.u32 %v632, 7
        %v634 = vsub.s32 %v631, %v633
        %v635 = vrot.slane %v619, %v634
        %v636 = vcombine.high %v628, %v628
        %637 = vrot.lane.b32.xlu0 %v628, 119
        %v638 = vpop.permute.xlu0 %637
        %639 = vrot.lane.b32.xlu0 %v636, 119
        %v640 = vpop.permute.xlu0 %639
        %641 = vrot.lane.b32.xlu0 %v635, 119
        %v642 = vpop.permute.xlu0 %641
        %vm643 = vcmask 973824
        %v644 = vsel %vm643, %v638, %v640
        %v645 = vsel %vm643, %v640, %v642
        %648 = vst [vmem:[#allocation5 + $0x20] sm:$0xc] %v644
        %649 = vst.msk [vmem:[#allocation5 + $0x28] sm:$0xc] %vm438, %v645
        %v650 = vld [vmem:[#allocation2] sm:$0x3f]
        %v652 = vcombine.high %v650, %v650
        %v654 = vunpack.c.l.s4 1983009808
        %v655 = vunpack.c.0.s8 %v654
        %v656 = vlaneseq
        %v657 = vshrl.u32 %v656, 7
        %v658 = vsub.s32 %v655, %v657
        %v659 = vrot.slane %v650, %v658
        %v661 = vunpack.c.l.s4 1983009808
        %v662 = vunpack.c.0.s8 %v661
        %v663 = vlaneseq
        %v664 = vshrl.u32 %v663, 7
        %v665 = vsub.s32 %v662, %v664
        %v666 = vrot.slane %v652, %v665
        %v667 = vcombine.low %v659, %v659
        %v668 = vcombine.low %v666, %v666
        %669 = vrot.lane.b32.xlu0 %v667, 118
        %v670 = vpop.permute.xlu0 %669
        %671 = vrot.lane.b32.xlu0 %v659, 118
        %v672 = vpop.permute.xlu0 %671
        %673 = vrot.lane.b32.xlu0 %v668, 118
        %v674 = vpop.permute.xlu0 %673
        %vm675 = vcmask 965632
        %v676 = vsel %vm675, %v670, %v672
        %v677 = vsel %vm675, %v672, %v674
        %680 = vst [vmem:[#allocation5 + $0x20] sm:$0x30] %v676
        %681 = vst.msk [vmem:[#allocation5 + $0x28] sm:$0x30] %vm459, %v677
        %v682 = vld [vmem:[#allocation2] sm:$0x3f]
        %v684 = vcombine.low %v682, %v682
        %v686 = vunpack.c.l.s4 1983009808
        %v687 = vunpack.c.0.s8 %v686
        %v688 = vlaneseq
        %v689 = vshrl.u32 %v688, 7
        %v690 = vsub.s32 %v687, %v689
        %v691 = vrot.slane %v684, %v690
        %v693 = vunpack.c.l.s4 1983009808
        %v694 = vunpack.c.0.s8 %v693
        %v695 = vlaneseq
        %v696 = vshrl.u32 %v695, 7
        %v697 = vsub.s32 %v694, %v696
        %v698 = vrot.slane %v682, %v697
        %v699 = vcombine.low %v691, %v691
        %v700 = vcombine.low %v698, %v698
        %701 = vrot.lane.b32.xlu0 %v699, 117
        %v702 = vpop.permute.xlu0 %701
        %703 = vrot.lane.b32.xlu0 %v691, 117
        %v704 = vpop.permute.xlu0 %703
        %705 = vrot.lane.b32.xlu0 %v700, 117
        %v706 = vpop.permute.xlu0 %705
        %vm707 = vcmask 957440
        %v708 = vsel %vm707, %v702, %v704
        %v709 = vsel %vm707, %v704, %v706
        %712 = vst [vmem:[#allocation5 + $0x20] sm:$0xc0] %v708
        %713 = vst.msk [vmem:[#allocation5 + $0x28] sm:$0xc0] %vm481, %v709
        %v714 = vld [vmem:[#allocation2] sm:$0x3f]
        %v716 = vcombine.high %v714, %v714
        %v718 = vunpack.c.l.s4 1983009808
        %v719 = vunpack.c.0.s8 %v718
        %v720 = vlaneseq
        %v721 = vshrl.u32 %v720, 7
        %v722 = vsub.s32 %v719, %v721
        %v723 = vrot.slane %v714, %v722
        %v725 = vunpack.c.l.s4 1983009808
        %v726 = vunpack.c.0.s8 %v725
        %v727 = vlaneseq
        %v728 = vshrl.u32 %v727, 7
        %v729 = vsub.s32 %v726, %v728
        %v730 = vrot.slane %v716, %v729
        %v731 = vcombine.high %v723, %v723
        %732 = vrot.lane.b32.xlu0 %v723, 116
        %v733 = vpop.permute.xlu0 %732
        %734 = vrot.lane.b32.xlu0 %v731, 116
        %v735 = vpop.permute.xlu0 %734
        %736 = vrot.lane.b32.xlu0 %v730, 116
        %v737 = vpop.permute.xlu0 %736
        %vm738 = vcmask 949248
        %v739 = vsel %vm738, %v733, %v735
        %v740 = vsel %vm738, %v735, %v737
        %743 = vst [vmem:[#allocation5 + $0x30] sm:$0x3] %v739
        %744 = vst.msk [vmem:[#allocation5 + $0x38] sm:$0x3] %vm416, %v740
        %v745 = vld [vmem:[#allocation2] sm:$0x3f]
        %v747 = vcombine.low %v745, %v745
        %v749 = vunpack.c.l.s4 1983009808
        %v750 = vunpack.c.0.s8 %v749
        %v751 = vlaneseq
        %v752 = vshrl.u32 %v751, 7
        %v753 = vsub.s32 %v750, %v752
        %v754 = vrot.slane %v747, %v753
        %v756 = vunpack.c.l.s4 1983009808
        %v757 = vunpack.c.0.s8 %v756
        %v758 = vlaneseq
        %v759 = vshrl.u32 %v758, 7
        %v760 = vsub.s32 %v757, %v759
        %v761 = vrot.slane %v745, %v760
        %v762 = vcombine.high %v754, %v754
        %763 = vrot.lane.b32.xlu0 %v754, 115
        %v764 = vpop.permute.xlu0 %763
        %765 = vrot.lane.b32.xlu0 %v762, 115
        %v766 = vpop.permute.xlu0 %765
        %767 = vrot.lane.b32.xlu0 %v761, 115
        %v768 = vpop.permute.xlu0 %767
        %vm769 = vcmask 941056
        %v770 = vsel %vm769, %v764, %v766
        %v771 = vsel %vm769, %v766, %v768
        %774 = vst [vmem:[#allocation5 + $0x30] sm:$0xc] %v770
        %775 = vst.msk [vmem:[#allocation5 + $0x38] sm:$0xc] %vm438, %v771
        %v776 = vld [vmem:[#allocation2] sm:$0x3f]
        %v778 = vcombine.high %v776, %v776
        %v780 = vunpack.c.l.s4 1983009808
        %v781 = vunpack.c.0.s8 %v780
        %v782 = vlaneseq
        %v783 = vshrl.u32 %v782, 7
        %v784 = vsub.s32 %v781, %v783
        %v785 = vrot.slane %v776, %v784
        %v787 = vunpack.c.l.s4 1983009808
        %v788 = vunpack.c.0.s8 %v787
        %v789 = vlaneseq
        %v790 = vshrl.u32 %v789, 7
        %v791 = vsub.s32 %v788, %v790
        %v792 = vrot.slane %v778, %v791
        %v793 = vcombine.low %v785, %v785
        %v794 = vcombine.low %v792, %v792
        %795 = vrot.lane.b32.xlu0 %v793, 114
        %v796 = vpop.permute.xlu0 %795
        %797 = vrot.lane.b32.xlu0 %v785, 114
        %v798 = vpop.permute.xlu0 %797
        %799 = vrot.lane.b32.xlu0 %v794, 114
        %v800 = vpop.permute.xlu0 %799
        %vm801 = vcmask 932864
        %v802 = vsel %vm801, %v796, %v798
        %v803 = vsel %vm801, %v798, %v800
        %806 = vst [vmem:[#allocation5 + $0x30] sm:$0x30] %v802
        %807 = vst.msk [vmem:[#allocation5 + $0x38] sm:$0x30] %vm459, %v803
        %v808 = vld [vmem:[#allocation2] sm:$0x3f]
        %v810 = vcombine.low %v808, %v808
        %v812 = vunpack.c.l.s4 1983009808
        %v813 = vunpack.c.0.s8 %v812
        %v814 = vlaneseq
        %v815 = vshrl.u32 %v814, 7
        %v816 = vsub.s32 %v813, %v815
        %v817 = vrot.slane %v810, %v816
        %v819 = vunpack.c.l.s4 1983009808
        %v820 = vunpack.c.0.s8 %v819
        %v821 = vlaneseq
        %v822 = vshrl.u32 %v821, 7
        %v823 = vsub.s32 %v820, %v822
        %v824 = vrot.slane %v808, %v823
        %v825 = vcombine.low %v817, %v817
        %v826 = vcombine.low %v824, %v824
        %827 = vrot.lane.b32.xlu0 %v825, 113
        %v828 = vpop.permute.xlu0 %827
        %829 = vrot.lane.b32.xlu0 %v817, 113
        %v830 = vpop.permute.xlu0 %829
        %831 = vrot.lane.b32.xlu0 %v826, 113
        %v832 = vpop.permute.xlu0 %831
        %vm833 = vcmask 924672
        %v834 = vsel %vm833, %v828, %v830
        %v835 = vsel %vm833, %v830, %v832
        %838 = vst [vmem:[#allocation5 + $0x30] sm:$0xc0] %v834
        %839 = vst.msk [vmem:[#allocation5 + $0x38] sm:$0xc0] %vm481, %v835
        %v840 = vld [vmem:[#allocation2] sm:$0x3f]
        %v842 = vcombine.high %v840, %v840
        %v844 = vunpack.c.l.s4 1983009808
        %v845 = vunpack.c.0.s8 %v844
        %v846 = vlaneseq
        %v847 = vshrl.u32 %v846, 7
        %v848 = vsub.s32 %v845, %v847
        %v849 = vrot.slane %v840, %v848
        %v851 = vunpack.c.l.s4 1983009808
        %v852 = vunpack.c.0.s8 %v851
        %v853 = vlaneseq
        %v854 = vshrl.u32 %v853, 7
        %v855 = vsub.s32 %v852, %v854
        %v856 = vrot.slane %v842, %v855
        %v857 = vcombine.high %v849, %v849
        %858 = vrot.lane.b32.xlu0 %v849, 112
        %v859 = vpop.permute.xlu0 %858
        %860 = vrot.lane.b32.xlu0 %v857, 112
        %v861 = vpop.permute.xlu0 %860
        %862 = vrot.lane.b32.xlu0 %v856, 112
        %v863 = vpop.permute.xlu0 %862
        %vm864 = vcmask 916480
        %v865 = vsel %vm864, %v859, %v861
        %v866 = vsel %vm864, %v861, %v863
        %869 = vst [vmem:[#allocation5 + $0x40] sm:$0x3] %v865
        %870 = vst.msk [vmem:[#allocation5 + $0x48] sm:$0x3] %vm416, %v866
        %v871 = vld [vmem:[#allocation2] sm:$0x3f]
        %v873 = vcombine.low %v871, %v871
        %v875 = vunpack.c.l.s4 1983009808
        %v876 = vunpack.c.0.s8 %v875
        %v877 = vlaneseq
        %v878 = vshrl.u32 %v877, 7
        %v879 = vsub.s32 %v876, %v878
        %v880 = vrot.slane %v873, %v879
        %v882 = vunpack.c.l.s4 1983009808
        %v883 = vunpack.c.0.s8 %v882
        %v884 = vlaneseq
        %v885 = vshrl.u32 %v884, 7
        %v886 = vsub.s32 %v883, %v885
        %v887 = vrot.slane %v871, %v886
        %v888 = vcombine.high %v880, %v880
        %889 = vrot.lane.b32.xlu0 %v880, 111
        %v890 = vpop.permute.xlu0 %889
        %891 = vrot.lane.b32.xlu0 %v888, 111
        %v892 = vpop.permute.xlu0 %891
        %893 = vrot.lane.b32.xlu0 %v887, 111
        %v894 = vpop.permute.xlu0 %893
        %vm895 = vcmask 908288
        %v896 = vsel %vm895, %v890, %v892
        %v897 = vsel %vm895, %v892, %v894
        %900 = vst [vmem:[#allocation5 + $0x40] sm:$0xc] %v896
        %901 = vst.msk [vmem:[#allocation5 + $0x48] sm:$0xc] %vm438, %v897
        %v902 = vld [vmem:[#allocation2] sm:$0x3f]
        %v904 = vcombine.high %v902, %v902
        %v906 = vunpack.c.l.s4 1983009808
        %v907 = vunpack.c.0.s8 %v906
        %v908 = vlaneseq
        %v909 = vshrl.u32 %v908, 7
        %v910 = vsub.s32 %v907, %v909
        %v911 = vrot.slane %v902, %v910
        %v913 = vunpack.c.l.s4 1983009808
        %v914 = vunpack.c.0.s8 %v913
        %v915 = vlaneseq
        %v916 = vshrl.u32 %v915, 7
        %v917 = vsub.s32 %v914, %v916
        %v918 = vrot.slane %v904, %v917
        %v919 = vcombine.low %v911, %v911
        %v920 = vcombine.low %v918, %v918
        %921 = vrot.lane.b32.xlu0 %v919, 110
        %v922 = vpop.permute.xlu0 %921
        %923 = vrot.lane.b32.xlu0 %v911, 110
        %v924 = vpop.permute.xlu0 %923
        %925 = vrot.lane.b32.xlu0 %v920, 110
        %v926 = vpop.permute.xlu0 %925
        %vm927 = vcmask 900096
        %v928 = vsel %vm927, %v922, %v924
        %v929 = vsel %vm927, %v924, %v926
        %932 = vst [vmem:[#allocation5 + $0x40] sm:$0x30] %v928
        %933 = vst.msk [vmem:[#allocation5 + $0x48] sm:$0x30] %vm459, %v929
        %v934 = vld [vmem:[#allocation2] sm:$0x3f]
        %v936 = vcombine.low %v934, %v934
        %v938 = vunpack.c.l.s4 1983009808
        %v939 = vunpack.c.0.s8 %v938
        %v940 = vlaneseq
        %v941 = vshrl.u32 %v940, 7
        %v942 = vsub.s32 %v939, %v941
        %v943 = vrot.slane %v936, %v942
        %v945 = vunpack.c.l.s4 1983009808
        %v946 = vunpack.c.0.s8 %v945
        %v947 = vlaneseq
        %v948 = vshrl.u32 %v947, 7
        %v949 = vsub.s32 %v946, %v948
        %v950 = vrot.slane %v934, %v949
        %v951 = vcombine.low %v943, %v943
        %v952 = vcombine.low %v950, %v950
        %953 = vrot.lane.b32.xlu0 %v951, 109
        %v954 = vpop.permute.xlu0 %953
        %955 = vrot.lane.b32.xlu0 %v943, 109
        %v956 = vpop.permute.xlu0 %955
        %957 = vrot.lane.b32.xlu0 %v952, 109
        %v958 = vpop.permute.xlu0 %957
        %vm959 = vcmask 891904
        %v960 = vsel %vm959, %v954, %v956
        %v961 = vsel %vm959, %v956, %v958
        %964 = vst [vmem:[#allocation5 + $0x40] sm:$0xc0] %v960
        %965 = vst.msk [vmem:[#allocation5 + $0x48] sm:$0xc0] %vm481, %v961
        %v966 = vld [vmem:[#allocation2] sm:$0x3f]
        %v968 = vcombine.high %v966, %v966
        %v970 = vunpack.c.l.s4 1983009808
        %v971 = vunpack.c.0.s8 %v970
        %v972 = vlaneseq
        %v973 = vshrl.u32 %v972, 7
        %v974 = vsub.s32 %v971, %v973
        %v975 = vrot.slane %v966, %v974
        %v977 = vunpack.c.l.s4 1983009808
        %v978 = vunpack.c.0.s8 %v977
        %v979 = vlaneseq
        %v980 = vshrl.u32 %v979, 7
        %v981 = vsub.s32 %v978, %v980
        %v982 = vrot.slane %v968, %v981
        %v983 = vcombine.high %v975, %v975
        %984 = vrot.lane.b32.xlu0 %v975, 108
        %v985 = vpop.permute.xlu0 %984
        %986 = vrot.lane.b32.xlu0 %v983, 108
        %v987 = vpop.permute.xlu0 %986
        %988 = vrot.lane.b32.xlu0 %v982, 108
        %v989 = vpop.permute.xlu0 %988
        %vm990 = vcmask 883712
        %v991 = vsel %vm990, %v985, %v987
        %v992 = vsel %vm990, %v987, %v989
        %995 = vst [vmem:[#allocation5 + $0x50] sm:$0x3] %v991
        %996 = vst.msk [vmem:[#allocation5 + $0x58] sm:$0x3] %vm416, %v992
        %v997 = vld [vmem:[#allocation2] sm:$0x3f]
        %v999 = vcombine.low %v997, %v997
        %v1001 = vunpack.c.l.s4 1983009808
        %v1002 = vunpack.c.0.s8 %v1001
        %v1003 = vlaneseq
        %v1004 = vshrl.u32 %v1003, 7
        %v1005 = vsub.s32 %v1002, %v1004
        %v1006 = vrot.slane %v999, %v1005
        %v1008 = vunpack.c.l.s4 1983009808
        %v1009 = vunpack.c.0.s8 %v1008
        %v1010 = vlaneseq
        %v1011 = vshrl.u32 %v1010, 7
        %v1012 = vsub.s32 %v1009, %v1011
        %v1013 = vrot.slane %v997, %v1012
        %v1014 = vcombine.high %v1006, %v1006
        %1015 = vrot.lane.b32.xlu0 %v1006, 107
        %v1016 = vpop.permute.xlu0 %1015
        %1017 = vrot.lane.b32.xlu0 %v1014, 107
        %v1018 = vpop.permute.xlu0 %1017
        %1019 = vrot.lane.b32.xlu0 %v1013, 107
        %v1020 = vpop.permute.xlu0 %1019
        %vm1021 = vcmask 875520
        %v1022 = vsel %vm1021, %v1016, %v1018
        %v1023 = vsel %vm1021, %v1018, %v1020
        %1026 = vst [vmem:[#allocation5 + $0x50] sm:$0xc] %v1022
        %1027 = vst.msk [vmem:[#allocation5 + $0x58] sm:$0xc] %vm438, %v1023
        %v1028 = vld [vmem:[#allocation2] sm:$0x3f]
        %v1030 = vcombine.high %v1028, %v1028
        %v1032 = vunpack.c.l.s4 1983009808
        %v1033 = vunpack.c.0.s8 %v1032
        %v1034 = vlaneseq
        %v1035 = vshrl.u32 %v1034, 7
        %v1036 = vsub.s32 %v1033, %v1035
        %v1037 = vrot.slane %v1028, %v1036
        %v1039 = vunpack.c.l.s4 1983009808
        %v1040 = vunpack.c.0.s8 %v1039
        %v1041 = vlaneseq
        %v1042 = vshrl.u32 %v1041, 7
        %v1043 = vsub.s32 %v1040, %v1042
        %v1044 = vrot.slane %v1030, %v1043
        %v1045 = vcombine.low %v1037, %v1037
        %v1046 = vcombine.low %v1044, %v1044
        %1047 = vrot.lane.b32.xlu0 %v1045, 106
        %v1048 = vpop.permute.xlu0 %1047
        %1049 = vrot.lane.b32.xlu0 %v1037, 106
        %v1050 = vpop.permute.xlu0 %1049
        %1051 = vrot.lane.b32.xlu0 %v1046, 106
        %v1052 = vpop.permute.xlu0 %1051
        %vm1053 = vcmask 867328
        %v1054 = vsel %vm1053, %v1048, %v1050
        %v1055 = vsel %vm1053, %v1050, %v1052
        %1058 = vst [vmem:[#allocation5 + $0x50] sm:$0x30] %v1054
        %1059 = vst.msk [vmem:[#allocation5 + $0x58] sm:$0x30] %vm459, %v1055
        %v1060 = vld [vmem:[#allocation2] sm:$0x3f]
        %v1062 = vcombine.low %v1060, %v1060
        %v1064 = vunpack.c.l.s4 1983009808
        %v1065 = vunpack.c.0.s8 %v1064
        %v1066 = vlaneseq
        %v1067 = vshrl.u32 %v1066, 7
        %v1068 = vsub.s32 %v1065, %v1067
        %v1069 = vrot.slane %v1062, %v1068
        %v1071 = vunpack.c.l.s4 1983009808
        %v1072 = vunpack.c.0.s8 %v1071
        %v1073 = vlaneseq
        %v1074 = vshrl.u32 %v1073, 7
        %v1075 = vsub.s32 %v1072, %v1074
        %v1076 = vrot.slane %v1060, %v1075
        %v1077 = vcombine.low %v1069, %v1069
        %v1078 = vcombine.low %v1076, %v1076
        %1079 = vrot.lane.b32.xlu0 %v1077, 105
        %v1080 = vpop.permute.xlu0 %1079
        %1081 = vrot.lane.b32.xlu0 %v1069, 105
        %v1082 = vpop.permute.xlu0 %1081
        %1083 = vrot.lane.b32.xlu0 %v1078, 105
        %v1084 = vpop.permute.xlu0 %1083
        %vm1085 = vcmask 859136
        %v1086 = vsel %vm1085, %v1080, %v1082
        %v1087 = vsel %vm1085, %v1082, %v1084
        %1090 = vst [vmem:[#allocation5 + $0x50] sm:$0xc0] %v1086
        %1091 = vst.msk [vmem:[#allocation5 + $0x58] sm:$0xc0] %vm481, %v1087
        %v1092 = vld [vmem:[#allocation2] sm:$0x3f]
        %v1094 = vcombine.high %v1092, %v1092
        %v1096 = vunpack.c.l.s4 1983009808
        %v1097 = vunpack.c.0.s8 %v1096
        %v1098 = vlaneseq
        %v1099 = vshrl.u32 %v1098, 7
        %v1100 = vsub.s32 %v1097, %v1099
        %v1101 = vrot.slane %v1092, %v1100
        %v1103 = vunpack.c.l.s4 1983009808
        %v1104 = vunpack.c.0.s8 %v1103
        %v1105 = vlaneseq
        %v1106 = vshrl.u32 %v1105, 7
        %v1107 = vsub.s32 %v1104, %v1106
        %v1108 = vrot.slane %v1094, %v1107
        %v1109 = vcombine.high %v1101, %v1101
        %1110 = vrot.lane.b32.xlu0 %v1101, 104
        %v1111 = vpop.permute.xlu0 %1110
        %1112 = vrot.lane.b32.xlu0 %v1109, 104
        %v1113 = vpop.permute.xlu0 %1112
        %1114 = vrot.lane.b32.xlu0 %v1108, 104
        %v1115 = vpop.permute.xlu0 %1114
        %vm1116 = vcmask 850944
        %v1117 = vsel %vm1116, %v1111, %v1113
        %v1118 = vsel %vm1116, %v1113, %v1115
        %1121 = vst [vmem:[#allocation5 + $0x60] sm:$0x3] %v1117
        %1122 = vst.msk [vmem:[#allocation5 + $0x68] sm:$0x3] %vm416, %v1118
        %v1123 = vld [vmem:[#allocation2] sm:$0x3f]
        %v1125 = vcombine.low %v1123, %v1123
        %v1127 = vunpack.c.l.s4 1983009808
        %v1128 = vunpack.c.0.s8 %v1127
        %v1129 = vlaneseq
        %v1130 = vshrl.u32 %v1129, 7
        %v1131 = vsub.s32 %v1128, %v1130
        %v1132 = vrot.slane %v1125, %v1131
        %v1134 = vunpack.c.l.s4 1983009808
        %v1135 = vunpack.c.0.s8 %v1134
        %v1136 = vlaneseq
        %v1137 = vshrl.u32 %v1136, 7
        %v1138 = vsub.s32 %v1135, %v1137
        %v1139 = vrot.slane %v1123, %v1138
        %v1140 = vcombine.high %v1132, %v1132
        %1141 = vrot.lane.b32.xlu0 %v1132, 103
        %v1142 = vpop.permute.xlu0 %1141
        %1143 = vrot.lane.b32.xlu0 %v1140, 103
        %v1144 = vpop.permute.xlu0 %1143
        %1145 = vrot.lane.b32.xlu0 %v1139, 103
        %v1146 = vpop.permute.xlu0 %1145
        %vm1147 = vcmask 842752
        %v1148 = vsel %vm1147, %v1142, %v1144
        %v1149 = vsel %vm1147, %v1144, %v1146
        %1152 = vst [vmem:[#allocation5 + $0x60] sm:$0xc] %v1148
        %1153 = vst.msk [vmem:[#allocation5 + $0x68] sm:$0xc] %vm438, %v1149
        %v1154 = vld [vmem:[#allocation2] sm:$0x3f]
        %v1156 = vcombine.high %v1154, %v1154
        %v1158 = vunpack.c.l.s4 1983009808
        %v1159 = vunpack.c.0.s8 %v1158
        %v1160 = vlaneseq
        %v1161 = vshrl.u32 %v1160, 7
        %v1162 = vsub.s32 %v1159, %v1161
        %v1163 = vrot.slane %v1154, %v1162
        %v1165 = vunpack.c.l.s4 1983009808
        %v1166 = vunpack.c.0.s8 %v1165
        %v1167 = vlaneseq
        %v1168 = vshrl.u32 %v1167, 7
        %v1169 = vsub.s32 %v1166, %v1168
        %v1170 = vrot.slane %v1156, %v1169
        %v1171 = vcombine.low %v1163, %v1163
        %v1172 = vcombine.low %v1170, %v1170
        %1173 = vrot.lane.b32.xlu0 %v1171, 102
        %v1174 = vpop.permute.xlu0 %1173
        %1175 = vrot.lane.b32.xlu0 %v1163, 102
        %v1176 = vpop.permute.xlu0 %1175
        %1177 = vrot.lane.b32.xlu0 %v1172, 102
        %v1178 = vpop.permute.xlu0 %1177
        %vm1179 = vcmask 834560
        %v1180 = vsel %vm1179, %v1174, %v1176
        %v1181 = vsel %vm1179, %v1176, %v1178
        %1184 = vst [vmem:[#allocation5 + $0x60] sm:$0x30] %v1180
        %1185 = vst.msk [vmem:[#allocation5 + $0x68] sm:$0x30] %vm459, %v1181
        %v1186 = vld [vmem:[#allocation2] sm:$0x3f]
        %v1188 = vcombine.low %v1186, %v1186
        %v1190 = vunpack.c.l.s4 1983009808
        %v1191 = vunpack.c.0.s8 %v1190
        %v1192 = vlaneseq
        %v1193 = vshrl.u32 %v1192, 7
        %v1194 = vsub.s32 %v1191, %v1193
        %v1195 = vrot.slane %v1188, %v1194
        %v1197 = vunpack.c.l.s4 1983009808
        %v1198 = vunpack.c.0.s8 %v1197
        %v1199 = vlaneseq
        %v1200 = vshrl.u32 %v1199, 7
        %v1201 = vsub.s32 %v1198, %v1200
        %v1202 = vrot.slane %v1186, %v1201
        %v1203 = vcombine.low %v1195, %v1195
        %v1204 = vcombine.low %v1202, %v1202
        %1205 = vrot.lane.b32.xlu0 %v1203, 101
        %v1206 = vpop.permute.xlu0 %1205
        %1207 = vrot.lane.b32.xlu0 %v1195, 101
        %v1208 = vpop.permute.xlu0 %1207
        %1209 = vrot.lane.b32.xlu0 %v1204, 101
        %v1210 = vpop.permute.xlu0 %1209
        %vm1211 = vcmask 826368
        %v1212 = vsel %vm1211, %v1206, %v1208
        %v1213 = vsel %vm1211, %v1208, %v1210
        %1216 = vst [vmem:[#allocation5 + $0x60] sm:$0xc0] %v1212
        %1217 = vst.msk [vmem:[#allocation5 + $0x68] sm:$0xc0] %vm481, %v1213
        %v1218 = vld [vmem:[#allocation2] sm:$0x3f]
        %v1220 = vcombine.high %v1218, %v1218
        %v1222 = vunpack.c.l.s4 1983009808
        %v1223 = vunpack.c.0.s8 %v1222
        %v1224 = vlaneseq
        %v1225 = vshrl.u32 %v1224, 7
        %v1226 = vsub.s32 %v1223, %v1225
        %v1227 = vrot.slane %v1218, %v1226
        %v1229 = vunpack.c.l.s4 1983009808
        %v1230 = vunpack.c.0.s8 %v1229
        %v1231 = vlaneseq
        %v1232 = vshrl.u32 %v1231, 7
        %v1233 = vsub.s32 %v1230, %v1232
        %v1234 = vrot.slane %v1220, %v1233
        %v1235 = vcombine.high %v1227, %v1227
        %1236 = vrot.lane.b32.xlu0 %v1227, 100
        %v1237 = vpop.permute.xlu0 %1236
        %1238 = vrot.lane.b32.xlu0 %v1235, 100
        %v1239 = vpop.permute.xlu0 %1238
        %1240 = vrot.lane.b32.xlu0 %v1234, 100
        %v1241 = vpop.permute.xlu0 %1240
        %vm1242 = vcmask 818176
        %v1243 = vsel %vm1242, %v1237, %v1239
        %v1244 = vsel %vm1242, %v1239, %v1241
        %1247 = vst [vmem:[#allocation5 + $0x70] sm:$0x3] %v1243
        %1248 = vst.msk [vmem:[#allocation5 + $0x78] sm:$0x3] %vm416, %v1244
        %v1249 = vld [vmem:[#allocation2] sm:$0x3f]
        %v1251 = vcombine.low %v1249, %v1249
        %v1253 = vunpack.c.l.s4 1983009808
        %v1254 = vunpack.c.0.s8 %v1253
        %v1255 = vlaneseq
        %v1256 = vshrl.u32 %v1255, 7
        %v1257 = vsub.s32 %v1254, %v1256
        %v1258 = vrot.slane %v1251, %v1257
        %v1260 = vunpack.c.l.s4 1983009808
        %v1261 = vunpack.c.0.s8 %v1260
        %v1262 = vlaneseq
        %v1263 = vshrl.u32 %v1262, 7
        %v1264 = vsub.s32 %v1261, %v1263
        %v1265 = vrot.slane %v1249, %v1264
        %v1266 = vcombine.high %v1258, %v1258
        %1267 = vrot.lane.b32.xlu0 %v1258, 99
        %v1268 = vpop.permute.xlu0 %1267
        %1269 = vrot.lane.b32.xlu0 %v1266, 99
        %v1270 = vpop.permute.xlu0 %1269
        %1271 = vrot.lane.b32.xlu0 %v1265, 99
        %v1272 = vpop.permute.xlu0 %1271
        %vm1273 = vcmask 809984
        %v1274 = vsel %vm1273, %v1268, %v1270
        %v1275 = vsel %vm1273, %v1270, %v1272
        %1278 = vst [vmem:[#allocation5 + $0x70] sm:$0xc] %v1274
        %1279 = vst.msk [vmem:[#allocation5 + $0x78] sm:$0xc] %vm438, %v1275
        %v1280 = vld [vmem:[#allocation2] sm:$0x3f]
        %v1282 = vcombine.high %v1280, %v1280
        %v1284 = vunpack.c.l.s4 1983009808
        %v1285 = vunpack.c.0.s8 %v1284
        %v1286 = vlaneseq
        %v1287 = vshrl.u32 %v1286, 7
        %v1288 = vsub.s32 %v1285, %v1287
        %v1289 = vrot.slane %v1280, %v1288
        %v1291 = vunpack.c.l.s4 1983009808
        %v1292 = vunpack.c.0.s8 %v1291
        %v1293 = vlaneseq
        %v1294 = vshrl.u32 %v1293, 7
        %v1295 = vsub.s32 %v1292, %v1294
        %v1296 = vrot.slane %v1282, %v1295
        %v1297 = vcombine.low %v1289, %v1289
        %v1298 = vcombine.low %v1296, %v1296
        %1299 = vrot.lane.b32.xlu0 %v1297, 98
        %v1300 = vpop.permute.xlu0 %1299
        %1301 = vrot.lane.b32.xlu0 %v1289, 98
        %v1302 = vpop.permute.xlu0 %1301
        %1303 = vrot.lane.b32.xlu0 %v1298, 98
        %v1304 = vpop.permute.xlu0 %1303
        %vm1305 = vcmask 801792
        %v1306 = vsel %vm1305, %v1300, %v1302
        %v1307 = vsel %vm1305, %v1302, %v1304
        %1310 = vst [vmem:[#allocation5 + $0x70] sm:$0x30] %v1306
        %1311 = vst.msk [vmem:[#allocation5 + $0x78] sm:$0x30] %vm459, %v1307
        %v1312 = vld [vmem:[#allocation2] sm:$0x3f]
        %v1314 = vcombine.low %v1312, %v1312
        %v1316 = vunpack.c.l.s4 1983009808
        %v1317 = vunpack.c.0.s8 %v1316
        %v1318 = vlaneseq
        %v1319 = vshrl.u32 %v1318, 7
        %v1320 = vsub.s32 %v1317, %v1319
        %v1321 = vrot.slane %v1314, %v1320
        %v1323 = vunpack.c.l.s4 1983009808
        %v1324 = vunpack.c.0.s8 %v1323
        %v1325 = vlaneseq
        %v1326 = vshrl.u32 %v1325, 7
        %v1327 = vsub.s32 %v1324, %v1326
        %v1328 = vrot.slane %v1312, %v1327
        %v1329 = vcombine.low %v1321, %v1321
        %v1330 = vcombine.low %v1328, %v1328
        %1331 = vrot.lane.b32.xlu0 %v1329, 97
        %v1332 = vpop.permute.xlu0 %1331
        %1333 = vrot.lane.b32.xlu0 %v1321, 97
        %v1334 = vpop.permute.xlu0 %1333
        %1335 = vrot.lane.b32.xlu0 %v1330, 97
        %v1336 = vpop.permute.xlu0 %1335
        %vm1337 = vcmask 793600
        %v1338 = vsel %vm1337, %v1332, %v1334
        %v1339 = vsel %vm1337, %v1334, %v1336
        %1342 = vst [vmem:[#allocation5 + $0x70] sm:$0xc0] %v1338
        %1343 = vst.msk [vmem:[#allocation5 + $0x78] sm:$0xc0] %vm481, %v1339
        %v1344 = vld [vmem:[#allocation2] sm:$0x3f]
        %v1346 = vcombine.high %v1344, %v1344
        %v1348 = vunpack.c.l.s4 1983009808
        %v1349 = vunpack.c.0.s8 %v1348
        %v1350 = vlaneseq
        %v1351 = vshrl.u32 %v1350, 7
        %v1352 = vsub.s32 %v1349, %v1351
        %v1353 = vrot.slane %v1344, %v1352
        %v1355 = vunpack.c.l.s4 1983009808
        %v1356 = vunpack.c.0.s8 %v1355
        %v1357 = vlaneseq
        %v1358 = vshrl.u32 %v1357, 7
        %v1359 = vsub.s32 %v1356, %v1358
        %v1360 = vrot.slane %v1346, %v1359
        %v1361 = vcombine.high %v1353, %v1353
        %1362 = vrot.lane.b32.xlu0 %v1353, 96
        %v1363 = vpop.permute.xlu0 %1362
        %1364 = vrot.lane.b32.xlu0 %v1361, 96
        %v1365 = vpop.permute.xlu0 %1364
        %1366 = vrot.lane.b32.xlu0 %v1360, 96
        %v1367 = vpop.permute.xlu0 %1366
        %vm1368 = vcmask 785408
        %v1369 = vsel %vm1368, %v1363, %v1365
        %v1370 = vsel %vm1368, %v1365, %v1367
        %1373 = vst [vmem:[#allocation5 + $0x80] sm:$0x3] %v1369
        %1374 = vst.msk [vmem:[#allocation5 + $0x88] sm:$0x3] %vm416, %v1370
        %v1375 = vld [vmem:[#allocation2] sm:$0x3f]
        %v1377 = vcombine.low %v1375, %v1375
        %v1379 = vunpack.c.l.s4 1983009808
        %v1380 = vunpack.c.0.s8 %v1379
        %v1381 = vlaneseq
        %v1382 = vshrl.u32 %v1381, 7
        %v1383 = vsub.s32 %v1380, %v1382
        %v1384 = vrot.slane %v1377, %v1383
        %v1386 = vunpack.c.l.s4 1983009808
        %v1387 = vunpack.c.0.s8 %v1386
        %v1388 = vlaneseq
        %v1389 = vshrl.u32 %v1388, 7
        %v1390 = vsub.s32 %v1387, %v1389
        %v1391 = vrot.slane %v1375, %v1390
        %v1392 = vcombine.high %v1384, %v1384
        %1393 = vrot.lane.b32.xlu0 %v1384, 95
        %v1394 = vpop.permute.xlu0 %1393
        %1395 = vrot.lane.b32.xlu0 %v1392, 95
        %v1396 = vpop.permute.xlu0 %1395
        %1397 = vrot.lane.b32.xlu0 %v1391, 95
        %v1398 = vpop.permute.xlu0 %1397
        %vm1399 = vcmask 777216
        %v1400 = vsel %vm1399, %v1394, %v1396
        %v1401 = vsel %vm1399, %v1396, %v1398
        %1404 = vst [vmem:[#allocation5 + $0x80] sm:$0xc] %v1400
        %1405 = vst.msk [vmem:[#allocation5 + $0x88] sm:$0xc] %vm438, %v1401
        %v1406 = vld [vmem:[#allocation2] sm:$0x3f]
        %v1408 = vcombine.high %v1406, %v1406
        %v1410 = vunpack.c.l.s4 1983009808
        %v1411 = vunpack.c.0.s8 %v1410
        %v1412 = vlaneseq
        %v1413 = vshrl.u32 %v1412, 7
        %v1414 = vsub.s32 %v1411, %v1413
        %v1415 = vrot.slane %v1406, %v1414
        %v1417 = vunpack.c.l.s4 1983009808
        %v1418 = vunpack.c.0.s8 %v1417
        %v1419 = vlaneseq
        %v1420 = vshrl.u32 %v1419, 7
        %v1421 = vsub.s32 %v1418, %v1420
        %v1422 = vrot.slane %v1408, %v1421
        %v1423 = vcombine.low %v1415, %v1415
        %v1424 = vcombine.low %v1422, %v1422
        %1425 = vrot.lane.b32.xlu0 %v1423, 94
        %v1426 = vpop.permute.xlu0 %1425
        %1427 = vrot.lane.b32.xlu0 %v1415, 94
        %v1428 = vpop.permute.xlu0 %1427
        %1429 = vrot.lane.b32.xlu0 %v1424, 94
        %v1430 = vpop.permute.xlu0 %1429
        %vm1431 = vcmask 769024
        %v1432 = vsel %vm1431, %v1426, %v1428
        %v1433 = vsel %vm1431, %v1428, %v1430
        %1436 = vst [vmem:[#allocation5 + $0x80] sm:$0x30] %v1432
        %1437 = vst.msk [vmem:[#allocation5 + $0x88] sm:$0x30] %vm459, %v1433
        %v1438 = vld [vmem:[#allocation2] sm:$0x3f]
        %v1440 = vcombine.low %v1438, %v1438
        %v1442 = vunpack.c.l.s4 1983009808
        %v1443 = vunpack.c.0.s8 %v1442
        %v1444 = vlaneseq
        %v1445 = vshrl.u32 %v1444, 7
        %v1446 = vsub.s32 %v1443, %v1445
        %v1447 = vrot.slane %v1440, %v1446
        %v1449 = vunpack.c.l.s4 1983009808
        %v1450 = vunpack.c.0.s8 %v1449
        %v1451 = vlaneseq
        %v1452 = vshrl.u32 %v1451, 7
        %v1453 = vsub.s32 %v1450, %v1452
        %v1454 = vrot.slane %v1438, %v1453
        %v1455 = vcombine.low %v1447, %v1447
        %v1456 = vcombine.low %v1454, %v1454
        %1457 = vrot.lane.b32.xlu0 %v1455, 93
        %v1458 = vpop.permute.xlu0 %1457
        %1459 = vrot.lane.b32.xlu0 %v1447, 93
        %v1460 = vpop.permute.xlu0 %1459
        %1461 = vrot.lane.b32.xlu0 %v1456, 93
        %v1462 = vpop.permute.xlu0 %1461
        %vm1463 = vcmask 760832
        %v1464 = vsel %vm1463, %v1458, %v1460
        %v1465 = vsel %vm1463, %v1460, %v1462
        %1468 = vst [vmem:[#allocation5 + $0x80] sm:$0xc0] %v1464
        %1469 = vst.msk [vmem:[#allocation5 + $0x88] sm:$0xc0] %vm481, %v1465
        %v1470 = vld [vmem:[#allocation2] sm:$0x3f]
        %v1472 = vcombine.high %v1470, %v1470
        %v1474 = vunpack.c.l.s4 1983009808
        %v1475 = vunpack.c.0.s8 %v1474
        %v1476 = vlaneseq
        %v1477 = vshrl.u32 %v1476, 7
        %v1478 = vsub.s32 %v1475, %v1477
        %v1479 = vrot.slane %v1470, %v1478
        %v1481 = vunpack.c.l.s4 1983009808
        %v1482 = vunpack.c.0.s8 %v1481
        %v1483 = vlaneseq
        %v1484 = vshrl.u32 %v1483, 7
        %v1485 = vsub.s32 %v1482, %v1484
        %v1486 = vrot.slane %v1472, %v1485
        %v1487 = vcombine.high %v1479, %v1479
        %1488 = vrot.lane.b32.xlu0 %v1479, 92
        %v1489 = vpop.permute.xlu0 %1488
        %1490 = vrot.lane.b32.xlu0 %v1487, 92
        %v1491 = vpop.permute.xlu0 %1490
        %1492 = vrot.lane.b32.xlu0 %v1486, 92
        %v1493 = vpop.permute.xlu0 %1492
        %vm1494 = vcmask 752640
        %v1495 = vsel %vm1494, %v1489, %v1491
        %v1496 = vsel %vm1494, %v1491, %v1493
        %1499 = vst [vmem:[#allocation5 + $0x90] sm:$0x3] %v1495
        %1500 = vst.msk [vmem:[#allocation5 + $0x98] sm:$0x3] %vm416, %v1496
        %v1501 = vld [vmem:[#allocation2] sm:$0x3f]
        %v1503 = vcombine.low %v1501, %v1501
        %v1505 = vunpack.c.l.s4 1983009808
        %v1506 = vunpack.c.0.s8 %v1505
        %v1507 = vlaneseq
        %v1508 = vshrl.u32 %v1507, 7
        %v1509 = vsub.s32 %v1506, %v1508
        %v1510 = vrot.slane %v1503, %v1509
        %v1512 = vunpack.c.l.s4 1983009808
        %v1513 = vunpack.c.0.s8 %v1512
        %v1514 = vlaneseq
        %v1515 = vshrl.u32 %v1514, 7
        %v1516 = vsub.s32 %v1513, %v1515
        %v1517 = vrot.slane %v1501, %v1516
        %v1518 = vcombine.high %v1510, %v1510
        %1519 = vrot.lane.b32.xlu0 %v1510, 91
        %v1520 = vpop.permute.xlu0 %1519
        %1521 = vrot.lane.b32.xlu0 %v1518, 91
        %v1522 = vpop.permute.xlu0 %1521
        %1523 = vrot.lane.b32.xlu0 %v1517, 91
        %v1524 = vpop.permute.xlu0 %1523
        %vm1525 = vcmask 744448
        %v1526 = vsel %vm1525, %v1520, %v1522
        %v1527 = vsel %vm1525, %v1522, %v1524
        %1530 = vst [vmem:[#allocation5 + $0x90] sm:$0xc] %v1526
        %1531 = vst.msk [vmem:[#allocation5 + $0x98] sm:$0xc] %vm438, %v1527
        %v1532 = vld [vmem:[#allocation2] sm:$0x3f]
        %v1534 = vcombine.high %v1532, %v1532
        %v1536 = vunpack.c.l.s4 1983009808
        %v1537 = vunpack.c.0.s8 %v1536
        %v1538 = vlaneseq
        %v1539 = vshrl.u32 %v1538, 7
        %v1540 = vsub.s32 %v1537, %v1539
        %v1541 = vrot.slane %v1532, %v1540
        %v1543 = vunpack.c.l.s4 1983009808
        %v1544 = vunpack.c.0.s8 %v1543
        %v1545 = vlaneseq
        %v1546 = vshrl.u32 %v1545, 7
        %v1547 = vsub.s32 %v1544, %v1546
        %v1548 = vrot.slane %v1534, %v1547
        %v1549 = vcombine.low %v1541, %v1541
        %v1550 = vcombine.low %v1548, %v1548
        %1551 = vrot.lane.b32.xlu0 %v1549, 90
        %v1552 = vpop.permute.xlu0 %1551
        %1553 = vrot.lane.b32.xlu0 %v1541, 90
        %v1554 = vpop.permute.xlu0 %1553
        %1555 = vrot.lane.b32.xlu0 %v1550, 90
        %v1556 = vpop.permute.xlu0 %1555
        %vm1557 = vcmask 736256
        %v1558 = vsel %vm1557, %v1552, %v1554
        %v1559 = vsel %vm1557, %v1554, %v1556
        %1562 = vst [vmem:[#allocation5 + $0x90] sm:$0x30] %v1558
        %1563 = vst.msk [vmem:[#allocation5 + $0x98] sm:$0x30] %vm459, %v1559
        %v1564 = vld [vmem:[#allocation2] sm:$0x3f]
        %v1566 = vcombine.low %v1564, %v1564
        %v1568 = vunpack.c.l.s4 1983009808
        %v1569 = vunpack.c.0.s8 %v1568
        %v1570 = vlaneseq
        %v1571 = vshrl.u32 %v1570, 7
        %v1572 = vsub.s32 %v1569, %v1571
        %v1573 = vrot.slane %v1566, %v1572
        %v1575 = vunpack.c.l.s4 1983009808
        %v1576 = vunpack.c.0.s8 %v1575
        %v1577 = vlaneseq
        %v1578 = vshrl.u32 %v1577, 7
        %v1579 = vsub.s32 %v1576, %v1578
        %v1580 = vrot.slane %v1564, %v1579
        %v1581 = vcombine.low %v1573, %v1573
        %v1582 = vcombine.low %v1580, %v1580
        %1583 = vrot.lane.b32.xlu0 %v1581, 89
        %v1584 = vpop.permute.xlu0 %1583
        %1585 = vrot.lane.b32.xlu0 %v1573, 89
        %v1586 = vpop.permute.xlu0 %1585
        %1587 = vrot.lane.b32.xlu0 %v1582, 89
        %v1588 = vpop.permute.xlu0 %1587
        %vm1589 = vcmask 728064
        %v1590 = vsel %vm1589, %v1584, %v1586
        %v1591 = vsel %vm1589, %v1586, %v1588
        %1594 = vst [vmem:[#allocation5 + $0x90] sm:$0xc0] %v1590
        %1595 = vst.msk [vmem:[#allocation5 + $0x98] sm:$0xc0] %vm481, %v1591
        %v1596 = vld [vmem:[#allocation2] sm:$0x3f]
        %v1598 = vcombine.high %v1596, %v1596
        %v1600 = vunpack.c.l.s4 1983009808
        %v1601 = vunpack.c.0.s8 %v1600
        %v1602 = vlaneseq
        %v1603 = vshrl.u32 %v1602, 7
        %v1604 = vsub.s32 %v1601, %v1603
        %v1605 = vrot.slane %v1596, %v1604
        %v1607 = vunpack.c.l.s4 1983009808
        %v1608 = vunpack.c.0.s8 %v1607
        %v1609 = vlaneseq
        %v1610 = vshrl.u32 %v1609, 7
        %v1611 = vsub.s32 %v1608, %v1610
        %v1612 = vrot.slane %v1598, %v1611
        %v1613 = vcombine.high %v1605, %v1605
        %1614 = vrot.lane.b32.xlu0 %v1605, 88
        %v1615 = vpop.permute.xlu0 %1614
        %1616 = vrot.lane.b32.xlu0 %v1613, 88
        %v1617 = vpop.permute.xlu0 %1616
        %1618 = vrot.lane.b32.xlu0 %v1612, 88
        %v1619 = vpop.permute.xlu0 %1618
        %vm1620 = vcmask 719872
        %v1621 = vsel %vm1620, %v1615, %v1617
        %v1622 = vsel %vm1620, %v1617, %v1619
        %1625 = vst [vmem:[#allocation5 + $0xa0] sm:$0x3] %v1621
        %1626 = vst.msk [vmem:[#allocation5 + $0xa8] sm:$0x3] %vm416, %v1622
        %v1627 = vld [vmem:[#allocation2] sm:$0x3f]
        %v1629 = vcombine.low %v1627, %v1627
        %v1631 = vunpack.c.l.s4 1983009808
        %v1632 = vunpack.c.0.s8 %v1631
        %v1633 = vlaneseq
        %v1634 = vshrl.u32 %v1633, 7
        %v1635 = vsub.s32 %v1632, %v1634
        %v1636 = vrot.slane %v1629, %v1635
        %v1638 = vunpack.c.l.s4 1983009808
        %v1639 = vunpack.c.0.s8 %v1638
        %v1640 = vlaneseq
        %v1641 = vshrl.u32 %v1640, 7
        %v1642 = vsub.s32 %v1639, %v1641
        %v1643 = vrot.slane %v1627, %v1642
        %v1644 = vcombine.high %v1636, %v1636
        %1645 = vrot.lane.b32.xlu0 %v1636, 87
        %v1646 = vpop.permute.xlu0 %1645
        %1647 = vrot.lane.b32.xlu0 %v1644, 87
        %v1648 = vpop.permute.xlu0 %1647
        %1649 = vrot.lane.b32.xlu0 %v1643, 87
        %v1650 = vpop.permute.xlu0 %1649
        %vm1651 = vcmask 711680
        %v1652 = vsel %vm1651, %v1646, %v1648
        %v1653 = vsel %vm1651, %v1648, %v1650
        %1656 = vst [vmem:[#allocation5 + $0xa0] sm:$0xc] %v1652
        %1657 = vst.msk [vmem:[#allocation5 + $0xa8] sm:$0xc] %vm438, %v1653
        %v1658 = vld [vmem:[#allocation2] sm:$0x3f]
        %v1660 = vcombine.high %v1658, %v1658
        %v1662 = vunpack.c.l.s4 1983009808
        %v1663 = vunpack.c.0.s8 %v1662
        %v1664 = vlaneseq
        %v1665 = vshrl.u32 %v1664, 7
        %v1666 = vsub.s32 %v1663, %v1665
        %v1667 = vrot.slane %v1658, %v1666
        %v1669 = vunpack.c.l.s4 1983009808
        %v1670 = vunpack.c.0.s8 %v1669
        %v1671 = vlaneseq
        %v1672 = vshrl.u32 %v1671, 7
        %v1673 = vsub.s32 %v1670, %v1672
        %v1674 = vrot.slane %v1660, %v1673
        %v1675 = vcombine.low %v1667, %v1667
        %v1676 = vcombine.low %v1674, %v1674
        %1677 = vrot.lane.b32.xlu0 %v1675, 86
        %v1678 = vpop.permute.xlu0 %1677
        %1679 = vrot.lane.b32.xlu0 %v1667, 86
        %v1680 = vpop.permute.xlu0 %1679
        %1681 = vrot.lane.b32.xlu0 %v1676, 86
        %v1682 = vpop.permute.xlu0 %1681
        %vm1683 = vcmask 703488
        %v1684 = vsel %vm1683, %v1678, %v1680
        %v1685 = vsel %vm1683, %v1680, %v1682
        %1688 = vst [vmem:[#allocation5 + $0xa0] sm:$0x30] %v1684
        %1689 = vst.msk [vmem:[#allocation5 + $0xa8] sm:$0x30] %vm459, %v1685
        %v1690 = vld [vmem:[#allocation2] sm:$0x3f]
        %v1692 = vcombine.low %v1690, %v1690
        %v1694 = vunpack.c.l.s4 1983009808
        %v1695 = vunpack.c.0.s8 %v1694
        %v1696 = vlaneseq
        %v1697 = vshrl.u32 %v1696, 7
        %v1698 = vsub.s32 %v1695, %v1697
        %v1699 = vrot.slane %v1692, %v1698
        %v1701 = vunpack.c.l.s4 1983009808
        %v1702 = vunpack.c.0.s8 %v1701
        %v1703 = vlaneseq
        %v1704 = vshrl.u32 %v1703, 7
        %v1705 = vsub.s32 %v1702, %v1704
        %v1706 = vrot.slane %v1690, %v1705
        %v1707 = vcombine.low %v1699, %v1699
        %v1708 = vcombine.low %v1706, %v1706
        %1709 = vrot.lane.b32.xlu0 %v1707, 85
        %v1710 = vpop.permute.xlu0 %1709
        %1711 = vrot.lane.b32.xlu0 %v1699, 85
        %v1712 = vpop.permute.xlu0 %1711
        %1713 = vrot.lane.b32.xlu0 %v1708, 85
        %v1714 = vpop.permute.xlu0 %1713
        %vm1715 = vcmask 695296
        %v1716 = vsel %vm1715, %v1710, %v1712
        %v1717 = vsel %vm1715, %v1712, %v1714
        %1720 = vst [vmem:[#allocation5 + $0xa0] sm:$0xc0] %v1716
        %1721 = vst.msk [vmem:[#allocation5 + $0xa8] sm:$0xc0] %vm481, %v1717
        %v1722 = vld [vmem:[#allocation2] sm:$0x3f]
        %v1724 = vcombine.high %v1722, %v1722
        %v1726 = vunpack.c.l.s4 1983009808
        %v1727 = vunpack.c.0.s8 %v1726
        %v1728 = vlaneseq
        %v1729 = vshrl.u32 %v1728, 7
        %v1730 = vsub.s32 %v1727, %v1729
        %v1731 = vrot.slane %v1722, %v1730
        %v1733 = vunpack.c.l.s4 1983009808
        %v1734 = vunpack.c.0.s8 %v1733
        %v1735 = vlaneseq
        %v1736 = vshrl.u32 %v1735, 7
        %v1737 = vsub.s32 %v1734, %v1736
        %v1738 = vrot.slane %v1724, %v1737
        %v1739 = vcombine.high %v1731, %v1731
        %1740 = vrot.lane.b32.xlu0 %v1731, 84
        %v1741 = vpop.permute.xlu0 %1740
        %1742 = vrot.lane.b32.xlu0 %v1739, 84
        %v1743 = vpop.permute.xlu0 %1742
        %1744 = vrot.lane.b32.xlu0 %v1738, 84
        %v1745 = vpop.permute.xlu0 %1744
        %vm1746 = vcmask 687104
        %v1747 = vsel %vm1746, %v1741, %v1743
        %v1748 = vsel %vm1746, %v1743, %v1745
        %1751 = vst [vmem:[#allocation5 + $0xb0] sm:$0x3] %v1747
        %1752 = vst.msk [vmem:[#allocation5 + $0xb8] sm:$0x3] %vm416, %v1748
        %v1753 = vld [vmem:[#allocation2] sm:$0x3f]
        %v1755 = vcombine.low %v1753, %v1753
        %v1757 = vunpack.c.l.s4 1983009808
        %v1758 = vunpack.c.0.s8 %v1757
        %v1759 = vlaneseq
        %v1760 = vshrl.u32 %v1759, 7
        %v1761 = vsub.s32 %v1758, %v1760
        %v1762 = vrot.slane %v1755, %v1761
        %v1764 = vunpack.c.l.s4 1983009808
        %v1765 = vunpack.c.0.s8 %v1764
        %v1766 = vlaneseq
        %v1767 = vshrl.u32 %v1766, 7
        %v1768 = vsub.s32 %v1765, %v1767
        %v1769 = vrot.slane %v1753, %v1768
        %v1770 = vcombine.high %v1762, %v1762
        %1771 = vrot.lane.b32.xlu0 %v1762, 83
        %v1772 = vpop.permute.xlu0 %1771
        %1773 = vrot.lane.b32.xlu0 %v1770, 83
        %v1774 = vpop.permute.xlu0 %1773
        %1775 = vrot.lane.b32.xlu0 %v1769, 83
        %v1776 = vpop.permute.xlu0 %1775
        %vm1777 = vcmask 678912
        %v1778 = vsel %vm1777, %v1772, %v1774
        %v1779 = vsel %vm1777, %v1774, %v1776
        %1782 = vst [vmem:[#allocation5 + $0xb0] sm:$0xc] %v1778
        %1783 = vst.msk [vmem:[#allocation5 + $0xb8] sm:$0xc] %vm438, %v1779
        %v1784 = vld [vmem:[#allocation2] sm:$0x3f]
        %v1786 = vcombine.high %v1784, %v1784
        %v1788 = vunpack.c.l.s4 1983009808
        %v1789 = vunpack.c.0.s8 %v1788
        %v1790 = vlaneseq
        %v1791 = vshrl.u32 %v1790, 7
        %v1792 = vsub.s32 %v1789, %v1791
        %v1793 = vrot.slane %v1784, %v1792
        %v1795 = vunpack.c.l.s4 1983009808
        %v1796 = vunpack.c.0.s8 %v1795
        %v1797 = vlaneseq
        %v1798 = vshrl.u32 %v1797, 7
        %v1799 = vsub.s32 %v1796, %v1798
        %v1800 = vrot.slane %v1786, %v1799
        %v1801 = vcombine.low %v1793, %v1793
        %v1802 = vcombine.low %v1800, %v1800
        %1803 = vrot.lane.b32.xlu0 %v1801, 82
        %v1804 = vpop.permute.xlu0 %1803
        %1805 = vrot.lane.b32.xlu0 %v1793, 82
        %v1806 = vpop.permute.xlu0 %1805
        %1807 = vrot.lane.b32.xlu0 %v1802, 82
        %v1808 = vpop.permute.xlu0 %1807
        %vm1809 = vcmask 670720
        %v1810 = vsel %vm1809, %v1804, %v1806
        %v1811 = vsel %vm1809, %v1806, %v1808
        %1814 = vst [vmem:[#allocation5 + $0xb0] sm:$0x30] %v1810
        %1815 = vst.msk [vmem:[#allocation5 + $0xb8] sm:$0x30] %vm459, %v1811
        %v1816 = vld [vmem:[#allocation2] sm:$0x3f]
        %v1818 = vcombine.low %v1816, %v1816
        %v1820 = vunpack.c.l.s4 1983009808
        %v1821 = vunpack.c.0.s8 %v1820
        %v1822 = vlaneseq
        %v1823 = vshrl.u32 %v1822, 7
        %v1824 = vsub.s32 %v1821, %v1823
        %v1825 = vrot.slane %v1818, %v1824
        %v1827 = vunpack.c.l.s4 1983009808
        %v1828 = vunpack.c.0.s8 %v1827
        %v1829 = vlaneseq
        %v1830 = vshrl.u32 %v1829, 7
        %v1831 = vsub.s32 %v1828, %v1830
        %v1832 = vrot.slane %v1816, %v1831
        %v1833 = vcombine.low %v1825, %v1825
        %v1834 = vcombine.low %v1832, %v1832
        %1835 = vrot.lane.b32.xlu0 %v1833, 81
        %v1836 = vpop.permute.xlu0 %1835
        %1837 = vrot.lane.b32.xlu0 %v1825, 81
        %v1838 = vpop.permute.xlu0 %1837
        %1839 = vrot.lane.b32.xlu0 %v1834, 81
        %v1840 = vpop.permute.xlu0 %1839
        %vm1841 = vcmask 662528
        %v1842 = vsel %vm1841, %v1836, %v1838
        %v1843 = vsel %vm1841, %v1838, %v1840
        %1846 = vst [vmem:[#allocation5 + $0xb0] sm:$0xc0] %v1842
        %1847 = vst.msk [vmem:[#allocation5 + $0xb8] sm:$0xc0] %vm481, %v1843
        %v1848 = vld [vmem:[#allocation2] sm:$0x3f]
        %v1850 = vcombine.high %v1848, %v1848
        %v1852 = vunpack.c.l.s4 1983009808
        %v1853 = vunpack.c.0.s8 %v1852
        %v1854 = vlaneseq
        %v1855 = vshrl.u32 %v1854, 7
        %v1856 = vsub.s32 %v1853, %v1855
        %v1857 = vrot.slane %v1848, %v1856
        %v1859 = vunpack.c.l.s4 1983009808
        %v1860 = vunpack.c.0.s8 %v1859
        %v1861 = vlaneseq
        %v1862 = vshrl.u32 %v1861, 7
        %v1863 = vsub.s32 %v1860, %v1862
        %v1864 = vrot.slane %v1850, %v1863
        %v1865 = vcombine.high %v1857, %v1857
        %1866 = vrot.lane.b32.xlu0 %v1857, 80
        %v1867 = vpop.permute.xlu0 %1866
        %1868 = vrot.lane.b32.xlu0 %v1865, 80
        %v1869 = vpop.permute.xlu0 %1868
        %1870 = vrot.lane.b32.xlu0 %v1864, 80
        %v1871 = vpop.permute.xlu0 %1870
        %vm1872 = vcmask 654336
        %v1873 = vsel %vm1872, %v1867, %v1869
        %v1874 = vsel %vm1872, %v1869, %v1871
        %1877 = vst [vmem:[#allocation5 + $0xc0] sm:$0x3] %v1873
        %1878 = vst.msk [vmem:[#allocation5 + $0xc8] sm:$0x3] %vm416, %v1874
        %v1879 = vld [vmem:[#allocation2] sm:$0x3f]
        %v1881 = vcombine.low %v1879, %v1879
        %v1883 = vunpack.c.l.s4 1983009808
        %v1884 = vunpack.c.0.s8 %v1883
        %v1885 = vlaneseq
        %v1886 = vshrl.u32 %v1885, 7
        %v1887 = vsub.s32 %v1884, %v1886
        %v1888 = vrot.slane %v1881, %v1887
        %v1890 = vunpack.c.l.s4 1983009808
        %v1891 = vunpack.c.0.s8 %v1890
        %v1892 = vlaneseq
        %v1893 = vshrl.u32 %v1892, 7
        %v1894 = vsub.s32 %v1891, %v1893
        %v1895 = vrot.slane %v1879, %v1894
        %v1896 = vcombine.high %v1888, %v1888
        %1897 = vrot.lane.b32.xlu0 %v1888, 79
        %v1898 = vpop.permute.xlu0 %1897
        %1899 = vrot.lane.b32.xlu0 %v1896, 79
        %v1900 = vpop.permute.xlu0 %1899
        %1901 = vrot.lane.b32.xlu0 %v1895, 79
        %v1902 = vpop.permute.xlu0 %1901
        %vm1903 = vcmask 646144
        %v1904 = vsel %vm1903, %v1898, %v1900
        %v1905 = vsel %vm1903, %v1900, %v1902
        %1908 = vst [vmem:[#allocation5 + $0xc0] sm:$0xc] %v1904
        %1909 = vst.msk [vmem:[#allocation5 + $0xc8] sm:$0xc] %vm438, %v1905
        %v1910 = vld [vmem:[#allocation2] sm:$0x3f]
        %v1912 = vcombine.high %v1910, %v1910
        %v1914 = vunpack.c.l.s4 1983009808
        %v1915 = vunpack.c.0.s8 %v1914
        %v1916 = vlaneseq
        %v1917 = vshrl.u32 %v1916, 7
        %v1918 = vsub.s32 %v1915, %v1917
        %v1919 = vrot.slane %v1910, %v1918
        %v1921 = vunpack.c.l.s4 1983009808
        %v1922 = vunpack.c.0.s8 %v1921
        %v1923 = vlaneseq
        %v1924 = vshrl.u32 %v1923, 7
        %v1925 = vsub.s32 %v1922, %v1924
        %v1926 = vrot.slane %v1912, %v1925
        %v1927 = vcombine.low %v1919, %v1919
        %v1928 = vcombine.low %v1926, %v1926
        %1929 = vrot.lane.b32.xlu0 %v1927, 78
        %v1930 = vpop.permute.xlu0 %1929
        %1931 = vrot.lane.b32.xlu0 %v1919, 78
        %v1932 = vpop.permute.xlu0 %1931
        %1933 = vrot.lane.b32.xlu0 %v1928, 78
        %v1934 = vpop.permute.xlu0 %1933
        %vm1935 = vcmask 637952
        %v1936 = vsel %vm1935, %v1930, %v1932
        %v1937 = vsel %vm1935, %v1932, %v1934
        %1940 = vst [vmem:[#allocation5 + $0xc0] sm:$0x30] %v1936
        %1941 = vst.msk [vmem:[#allocation5 + $0xc8] sm:$0x30] %vm459, %v1937
        %v1942 = vld [vmem:[#allocation2] sm:$0x3f]
        %v1944 = vcombine.low %v1942, %v1942
        %v1946 = vunpack.c.l.s4 1983009808
        %v1947 = vunpack.c.0.s8 %v1946
        %v1948 = vlaneseq
        %v1949 = vshrl.u32 %v1948, 7
        %v1950 = vsub.s32 %v1947, %v1949
        %v1951 = vrot.slane %v1944, %v1950
        %v1953 = vunpack.c.l.s4 1983009808
        %v1954 = vunpack.c.0.s8 %v1953
        %v1955 = vlaneseq
        %v1956 = vshrl.u32 %v1955, 7
        %v1957 = vsub.s32 %v1954, %v1956
        %v1958 = vrot.slane %v1942, %v1957
        %v1959 = vcombine.low %v1951, %v1951
        %v1960 = vcombine.low %v1958, %v1958
        %1961 = vrot.lane.b32.xlu0 %v1959, 77
        %v1962 = vpop.permute.xlu0 %1961
        %1963 = vrot.lane.b32.xlu0 %v1951, 77
        %v1964 = vpop.permute.xlu0 %1963
        %1965 = vrot.lane.b32.xlu0 %v1960, 77
        %v1966 = vpop.permute.xlu0 %1965
        %vm1967 = vcmask 629760
        %v1968 = vsel %vm1967, %v1962, %v1964
        %v1969 = vsel %vm1967, %v1964, %v1966
        %1972 = vst [vmem:[#allocation5 + $0xc0] sm:$0xc0] %v1968
        %1973 = vst.msk [vmem:[#allocation5 + $0xc8] sm:$0xc0] %vm481, %v1969
        %v1974 = vld [vmem:[#allocation2] sm:$0x3f]
        %v1976 = vcombine.high %v1974, %v1974
        %v1978 = vunpack.c.l.s4 1983009808
        %v1979 = vunpack.c.0.s8 %v1978
        %v1980 = vlaneseq
        %v1981 = vshrl.u32 %v1980, 7
        %v1982 = vsub.s32 %v1979, %v1981
        %v1983 = vrot.slane %v1974, %v1982
        %v1985 = vunpack.c.l.s4 1983009808
        %v1986 = vunpack.c.0.s8 %v1985
        %v1987 = vlaneseq
        %v1988 = vshrl.u32 %v1987, 7
        %v1989 = vsub.s32 %v1986, %v1988
        %v1990 = vrot.slane %v1976, %v1989
        %v1991 = vcombine.high %v1983, %v1983
        %1992 = vrot.lane.b32.xlu0 %v1983, 76
        %v1993 = vpop.permute.xlu0 %1992
        %1994 = vrot.lane.b32.xlu0 %v1991, 76
        %v1995 = vpop.permute.xlu0 %1994
        %1996 = vrot.lane.b32.xlu0 %v1990, 76
        %v1997 = vpop.permute.xlu0 %1996
        %vm1998 = vcmask 621568
        %v1999 = vsel %vm1998, %v1993, %v1995
        %v2000 = vsel %vm1998, %v1995, %v1997
        %2003 = vst [vmem:[#allocation5 + $0xd0] sm:$0x3] %v1999
        %2004 = vst.msk [vmem:[#allocation5 + $0xd8] sm:$0x3] %vm416, %v2000
        %v2005 = vld [vmem:[#allocation2] sm:$0x3f]
        %v2007 = vcombine.low %v2005, %v2005
        %v2009 = vunpack.c.l.s4 1983009808
        %v2010 = vunpack.c.0.s8 %v2009
        %v2011 = vlaneseq
        %v2012 = vshrl.u32 %v2011, 7
        %v2013 = vsub.s32 %v2010, %v2012
        %v2014 = vrot.slane %v2007, %v2013
        %v2016 = vunpack.c.l.s4 1983009808
        %v2017 = vunpack.c.0.s8 %v2016
        %v2018 = vlaneseq
        %v2019 = vshrl.u32 %v2018, 7
        %v2020 = vsub.s32 %v2017, %v2019
        %v2021 = vrot.slane %v2005, %v2020
        %v2022 = vcombine.high %v2014, %v2014
        %2023 = vrot.lane.b32.xlu0 %v2014, 75
        %v2024 = vpop.permute.xlu0 %2023
        %2025 = vrot.lane.b32.xlu0 %v2022, 75
        %v2026 = vpop.permute.xlu0 %2025
        %2027 = vrot.lane.b32.xlu0 %v2021, 75
        %v2028 = vpop.permute.xlu0 %2027
        %vm2029 = vcmask 613376
        %v2030 = vsel %vm2029, %v2024, %v2026
        %v2031 = vsel %vm2029, %v2026, %v2028
        %2034 = vst [vmem:[#allocation5 + $0xd0] sm:$0xc] %v2030
        %2035 = vst.msk [vmem:[#allocation5 + $0xd8] sm:$0xc] %vm438, %v2031
        %v2036 = vld [vmem:[#allocation2] sm:$0x3f]
        %v2038 = vcombine.high %v2036, %v2036
        %v2040 = vunpack.c.l.s4 1983009808
        %v2041 = vunpack.c.0.s8 %v2040
        %v2042 = vlaneseq
        %v2043 = vshrl.u32 %v2042, 7
        %v2044 = vsub.s32 %v2041, %v2043
        %v2045 = vrot.slane %v2036, %v2044
        %v2047 = vunpack.c.l.s4 1983009808
        %v2048 = vunpack.c.0.s8 %v2047
        %v2049 = vlaneseq
        %v2050 = vshrl.u32 %v2049, 7
        %v2051 = vsub.s32 %v2048, %v2050
        %v2052 = vrot.slane %v2038, %v2051
        %v2053 = vcombine.low %v2045, %v2045
        %v2054 = vcombine.low %v2052, %v2052
        %2055 = vrot.lane.b32.xlu0 %v2053, 74
        %v2056 = vpop.permute.xlu0 %2055
        %2057 = vrot.lane.b32.xlu0 %v2045, 74
        %v2058 = vpop.permute.xlu0 %2057
        %2059 = vrot.lane.b32.xlu0 %v2054, 74
        %v2060 = vpop.permute.xlu0 %2059
        %vm2061 = vcmask 605184
        %v2062 = vsel %vm2061, %v2056, %v2058
        %v2063 = vsel %vm2061, %v2058, %v2060
        %2066 = vst [vmem:[#allocation5 + $0xd0] sm:$0x30] %v2062
        %2067 = vst.msk [vmem:[#allocation5 + $0xd8] sm:$0x30] %vm459, %v2063
        %v2068 = vld [vmem:[#allocation2] sm:$0x3f]
        %v2070 = vcombine.low %v2068, %v2068
        %v2072 = vunpack.c.l.s4 1983009808
        %v2073 = vunpack.c.0.s8 %v2072
        %v2074 = vlaneseq
        %v2075 = vshrl.u32 %v2074, 7
        %v2076 = vsub.s32 %v2073, %v2075
        %v2077 = vrot.slane %v2070, %v2076
        %v2079 = vunpack.c.l.s4 1983009808
        %v2080 = vunpack.c.0.s8 %v2079
        %v2081 = vlaneseq
        %v2082 = vshrl.u32 %v2081, 7
        %v2083 = vsub.s32 %v2080, %v2082
        %v2084 = vrot.slane %v2068, %v2083
        %v2085 = vcombine.low %v2077, %v2077
        %v2086 = vcombine.low %v2084, %v2084
        %2087 = vrot.lane.b32.xlu0 %v2085, 73
        %v2088 = vpop.permute.xlu0 %2087
        %2089 = vrot.lane.b32.xlu0 %v2077, 73
        %v2090 = vpop.permute.xlu0 %2089
        %2091 = vrot.lane.b32.xlu0 %v2086, 73
        %v2092 = vpop.permute.xlu0 %2091
        %vm2093 = vcmask 596992
        %v2094 = vsel %vm2093, %v2088, %v2090
        %v2095 = vsel %vm2093, %v2090, %v2092
        %2098 = vst [vmem:[#allocation5 + $0xd0] sm:$0xc0] %v2094
        %2099 = vst.msk [vmem:[#allocation5 + $0xd8] sm:$0xc0] %vm481, %v2095
        %v2100 = vld [vmem:[#allocation2] sm:$0x3f]
        %v2102 = vcombine.high %v2100, %v2100
        %v2104 = vunpack.c.l.s4 1983009808
        %v2105 = vunpack.c.0.s8 %v2104
        %v2106 = vlaneseq
        %v2107 = vshrl.u32 %v2106, 7
        %v2108 = vsub.s32 %v2105, %v2107
        %v2109 = vrot.slane %v2100, %v2108
        %v2111 = vunpack.c.l.s4 1983009808
        %v2112 = vunpack.c.0.s8 %v2111
        %v2113 = vlaneseq
        %v2114 = vshrl.u32 %v2113, 7
        %v2115 = vsub.s32 %v2112, %v2114
        %v2116 = vrot.slane %v2102, %v2115
        %v2117 = vcombine.high %v2109, %v2109
        %2118 = vrot.lane.b32.xlu0 %v2109, 72
        %v2119 = vpop.permute.xlu0 %2118
        %2120 = vrot.lane.b32.xlu0 %v2117, 72
        %v2121 = vpop.permute.xlu0 %2120
        %2122 = vrot.lane.b32.xlu0 %v2116, 72
        %v2123 = vpop.permute.xlu0 %2122
        %vm2124 = vcmask 588800
        %v2125 = vsel %vm2124, %v2119, %v2121
        %v2126 = vsel %vm2124, %v2121, %v2123
        %2129 = vst [vmem:[#allocation5 + $0xe0] sm:$0x3] %v2125
        %2130 = vst.msk [vmem:[#allocation5 + $0xe8] sm:$0x3] %vm416, %v2126
        %v2131 = vld [vmem:[#allocation2] sm:$0x3f]
        %v2133 = vcombine.low %v2131, %v2131
        %v2135 = vunpack.c.l.s4 1983009808
        %v2136 = vunpack.c.0.s8 %v2135
        %v2137 = vlaneseq
        %v2138 = vshrl.u32 %v2137, 7
        %v2139 = vsub.s32 %v2136, %v2138
        %v2140 = vrot.slane %v2133, %v2139
        %v2142 = vunpack.c.l.s4 1983009808
        %v2143 = vunpack.c.0.s8 %v2142
        %v2144 = vlaneseq
        %v2145 = vshrl.u32 %v2144, 7
        %v2146 = vsub.s32 %v2143, %v2145
        %v2147 = vrot.slane %v2131, %v2146
        %v2148 = vcombine.high %v2140, %v2140
        %2149 = vrot.lane.b32.xlu0 %v2140, 71
        %v2150 = vpop.permute.xlu0 %2149
        %2151 = vrot.lane.b32.xlu0 %v2148, 71
        %v2152 = vpop.permute.xlu0 %2151
        %2153 = vrot.lane.b32.xlu0 %v2147, 71
        %v2154 = vpop.permute.xlu0 %2153
        %vm2155 = vcmask 580608
        %v2156 = vsel %vm2155, %v2150, %v2152
        %v2157 = vsel %vm2155, %v2152, %v2154
        %2160 = vst [vmem:[#allocation5 + $0xe0] sm:$0xc] %v2156
        %2161 = vst.msk [vmem:[#allocation5 + $0xe8] sm:$0xc] %vm438, %v2157
        %v2162 = vld [vmem:[#allocation2] sm:$0x3f]
        %v2164 = vcombine.high %v2162, %v2162
        %v2166 = vunpack.c.l.s4 1983009808
        %v2167 = vunpack.c.0.s8 %v2166
        %v2168 = vlaneseq
        %v2169 = vshrl.u32 %v2168, 7
        %v2170 = vsub.s32 %v2167, %v2169
        %v2171 = vrot.slane %v2162, %v2170
        %v2173 = vunpack.c.l.s4 1983009808
        %v2174 = vunpack.c.0.s8 %v2173
        %v2175 = vlaneseq
        %v2176 = vshrl.u32 %v2175, 7
        %v2177 = vsub.s32 %v2174, %v2176
        %v2178 = vrot.slane %v2164, %v2177
        %v2179 = vcombine.low %v2171, %v2171
        %v2180 = vcombine.low %v2178, %v2178
        %2181 = vrot.lane.b32.xlu0 %v2179, 70
        %v2182 = vpop.permute.xlu0 %2181
        %2183 = vrot.lane.b32.xlu0 %v2171, 70
        %v2184 = vpop.permute.xlu0 %2183
        %2185 = vrot.lane.b32.xlu0 %v2180, 70
        %v2186 = vpop.permute.xlu0 %2185
        %vm2187 = vcmask 572416
        %v2188 = vsel %vm2187, %v2182, %v2184
        %v2189 = vsel %vm2187, %v2184, %v2186
        %2192 = vst [vmem:[#allocation5 + $0xe0] sm:$0x30] %v2188
        %2193 = vst.msk [vmem:[#allocation5 + $0xe8] sm:$0x30] %vm459, %v2189
        %v2194 = vld [vmem:[#allocation2] sm:$0x3f]
        %v2196 = vcombine.low %v2194, %v2194
        %v2198 = vunpack.c.l.s4 1983009808
        %v2199 = vunpack.c.0.s8 %v2198
        %v2200 = vlaneseq
        %v2201 = vshrl.u32 %v2200, 7
        %v2202 = vsub.s32 %v2199, %v2201
        %v2203 = vrot.slane %v2196, %v2202
        %v2205 = vunpack.c.l.s4 1983009808
        %v2206 = vunpack.c.0.s8 %v2205
        %v2207 = vlaneseq
        %v2208 = vshrl.u32 %v2207, 7
        %v2209 = vsub.s32 %v2206, %v2208
        %v2210 = vrot.slane %v2194, %v2209
        %v2211 = vcombine.low %v2203, %v2203
        %v2212 = vcombine.low %v2210, %v2210
        %2213 = vrot.lane.b32.xlu0 %v2211, 69
        %v2214 = vpop.permute.xlu0 %2213
        %2215 = vrot.lane.b32.xlu0 %v2203, 69
        %v2216 = vpop.permute.xlu0 %2215
        %2217 = vrot.lane.b32.xlu0 %v2212, 69
        %v2218 = vpop.permute.xlu0 %2217
        %vm2219 = vcmask 564224
        %v2220 = vsel %vm2219, %v2214, %v2216
        %v2221 = vsel %vm2219, %v2216, %v2218
        %2224 = vst [vmem:[#allocation5 + $0xe0] sm:$0xc0] %v2220
        %2225 = vst.msk [vmem:[#allocation5 + $0xe8] sm:$0xc0] %vm481, %v2221
        %v2226 = vld [vmem:[%s1] sm:$0x1f]
        %v2227 = vld [vmem:[#allocation5] sm:$0xff]
        %v2228 = vld [vmem:[#allocation5 + $0x8] sm:$0xff]
        %v2229 = vld [vmem:[#allocation5 + $0x10] sm:$0xff]
        %v2230 = vld [vmem:[#allocation5 + $0x18] sm:$0xff]
        %v2231 = vld [vmem:[#allocation5 + $0x20] sm:$0xff]
        %v2232 = vld [vmem:[#allocation5 + $0x28] sm:$0xff]
        %v2233 = vld [vmem:[#allocation5 + $0x30] sm:$0xff]
        %v2234 = vld [vmem:[#allocation5 + $0x38] sm:$0xff]
        %v2235 = vld [vmem:[#allocation5 + $0x40] sm:$0xff]
        %v2236 = vld [vmem:[#allocation5 + $0x48] sm:$0xff]
        %v2237 = vld [vmem:[#allocation5 + $0x50] sm:$0xff]
        %v2238 = vld [vmem:[#allocation5 + $0x58] sm:$0xff]
        %v2239 = vld [vmem:[#allocation5 + $0x60] sm:$0xff]
        %v2240 = vld [vmem:[#allocation5 + $0x68] sm:$0xff]
        %v2241 = vld [vmem:[#allocation5 + $0x70] sm:$0xff]
        %v2242 = vld [vmem:[#allocation5 + $0x78] sm:$0xff]
        %v2243 = vld [vmem:[#allocation5 + $0x80] sm:$0xff]
        %v2244 = vld [vmem:[#allocation5 + $0x88] sm:$0xff]
        %v2245 = vld [vmem:[#allocation5 + $0x90] sm:$0xff]
        %v2246 = vld [vmem:[#allocation5 + $0x98] sm:$0xff]
        %v2247 = vld [vmem:[#allocation5 + $0xa0] sm:$0xff]
        %v2248 = vld [vmem:[#allocation5 + $0xa8] sm:$0xff]
        %v2249 = vld [vmem:[#allocation5 + $0xb0] sm:$0xff]
        %v2250 = vld [vmem:[#allocation5 + $0xb8] sm:$0xff]
        %v2251 = vld [vmem:[#allocation5 + $0xc0] sm:$0xff]
        %v2252 = vld [vmem:[#allocation5 + $0xc8] sm:$0xff]
        %v2253 = vld [vmem:[#allocation5 + $0xd0] sm:$0xff]
        %v2254 = vld [vmem:[#allocation5 + $0xd8] sm:$0xff]
        %v2255 = vld [vmem:[#allocation5 + $0xe0] sm:$0xff]
        %v2256 = vld [vmem:[#allocation5 + $0xe8] sm:$0xff]
        %v2257 = vld [vmem:[%s2] sm:$0x1f]
        %2259 = vset.pattern.permute.xlu0 0
        %2260 = vperm.xlu0 %2259, %v2257
        %v2261 = vpop.permute.xlu0 %2260
        %v2264 = vsel %vm612, %v2226, 0
        %2266 = vmatprep.subr.mxu0 %v2228
        %2267 = vmatpush1.msra.mxu0 %v2227
        %2268 = vmatprep.subr.mxu0 %v2230
        %2269 = vmatpush1.msra.mxu0 %v2229
        %2270 = vmatprep.subr.mxu0 %v2232
        %2271 = vmatpush1.msra.mxu0 %v2231
        %2272 = vmatprep.subr.mxu0 %v2234
        %2273 = vmatpush1.msra.mxu0 %v2233
        %2274 = vmatprep.subr.mxu0 %v2236
        %2275 = vmatpush1.msra.mxu0 %v2235
        %2276 = vmatprep.subr.mxu0 %v2238
        %2277 = vmatpush1.msra.mxu0 %v2237
        %2278 = vmatprep.subr.mxu0 %v2240
        %2279 = vmatpush1.msra.mxu0 %v2239
        %2280 = vmatprep.subr.mxu0 %v2242
        %2281 = vmatpush1.msra.mxu0 %v2241
        %2282 = vmatprep.subr.mxu0 %v2244
        %2283 = vmatpush1.msra.mxu0 %v2243
        %2284 = vmatprep.subr.mxu0 %v2246
        %2285 = vmatpush1.msra.mxu0 %v2245
        %2286 = vmatprep.subr.mxu0 %v2248
        %2287 = vmatpush1.msra.mxu0 %v2247
        %2288 = vmatprep.subr.mxu0 %v2250
        %2289 = vmatpush1.msra.mxu0 %v2249
        %2290 = vmatprep.subr.mxu0 %v2252
        %2291 = vmatpush1.msra.mxu0 %v2251
        %2292 = vmatprep.subr.mxu0 %v2254
        %2293 = vmatpush1.msra.mxu0 %v2253
        %2294 = vmatprep.subr.mxu0 %v2256
        %2295 = vmatpush1.msra.mxu0 %v2255
        %2296 = vmatprep.subr.mxu0 0.0
        %2297 = vmatpush1.msra.mxu0 0.0
        %2298 = vmatprep.subr.mxu0 0.0
        %2299 = vmatpush1.msra.mxu0 0.0
        %2300 = vmatprep.subr.mxu0 0.0
        %2301 = vmatpush1.msra.mxu0 0.0
        %2302 = vmatprep.subr.mxu0 0.0
        %2303 = vmatpush1.msra.mxu0 0.0
        %2304 = vmatprep.subr.mxu0 0.0
        %2305 = vmatpush1.msra.mxu0 0.0
        %2306 = vmatprep.subr.mxu0 0.0
        %2307 = vmatpush1.msra.mxu0 0.0
        %2308 = vmatprep.subr.mxu0 0.0
        %2309 = vmatpush1.msra.mxu0 0.0
        %2310 = vmatprep.subr.mxu0 0.0
        %2311 = vmatpush1.msra.mxu0 0.0
        %2312 = vmatprep.subr.mxu0 0.0
        %2313 = vmatpush1.msra.mxu0 0.0
        %2314 = vmatprep.subr.mxu0 0.0
        %2315 = vmatpush1.msra.mxu0 0.0
        %2316 = vmatprep.subr.mxu0 0.0
        %2317 = vmatpush1.msra.mxu0 0.0
        %2318 = vmatprep.subr.mxu0 0.0
        %2319 = vmatpush1.msra.mxu0 0.0
        %2320 = vmatprep.subr.mxu0 0.0
        %2321 = vmatpush1.msra.mxu0 0.0
        %2322 = vmatprep.subr.mxu0 0.0
        %2323 = vmatpush1.msra.mxu0 0.0
        %2324 = vmatprep.subr.mxu0 0.0
        %2325 = vmatpush1.msra.mxu0 0.0
        %2326 = vmatprep.subr.mxu0 0.0
        %2327 = vmatpush1.msra.mxu0 0.0
        %2328 = vmatprep.subr.mxu0 0.0
        %2329 = vmatpush1.msra.mxu0 0.0
        %2330 = vmatprep.mubr.f32.mxu0 0.0
        %2331 = vmatmul.mubr.f32.gmra.mrb[0].mxu0 %v2264
        %v2332 = vpop.f32.mrb[0].mxu0
        %v2333 = vadd.f32 %v2261, %v2332
        %v2334 = vpop.f32.mrb[0].mxu0
        %v2335 = vadd.f32 %v2261, %v2334
        %2336 = vdwg.mxu0
        %2337 = vst [vmem:[#allocation3] sm:$0x1f] 0.0
        %2338 = vst [vmem:[#allocation3 + $0x8] sm:$0x1f] 0.0
        %vm2339 = vcmask 446464
        %2340 = vst.msk [vmem:[#allocation3 + $0x10] sm:$0x1f] %vm2339, 0.0
        %v2341 = vmax.f32 %v2333, 0.0
        %v2342 = vmax.f32 %v2335, 0.0
        %2345 = vrot.lane.b32.xlu0 %v2341, 30
        %v2346 = vpop.permute.xlu0 %2345
        %2347 = vrot.lane.b32.xlu0 %v2342, 30
        %v2348 = vpop.permute.xlu0 %2347
        %v2349 = vsel %vm395, %v2346, %v2348
        %vm2353 = vcmask 1044720
        %2354 = vst.msk [vmem:[#allocation3] sm:$0x1f] %vm2353, %v2346
        %2355 = vst [vmem:[#allocation3 + $0x8] sm:$0x1f] %v2349
        %vm2356 = vcmask 200704
        %2357 = vst.msk [vmem:[#allocation3 + $0x10] sm:$0x1f] %vm2356, %v2348
        %v2358 = vld [vmem:[#allocation3] sm:$0x1f]
        %v2359 = vld [vmem:[#allocation3 + $0x8] sm:$0x1f]
        %v2360 = vld [vmem:[#allocation3 + $0x10] sm:$0x1f]
        %2361 = vst [vmem:[#allocation6] sm:$0x1f] %v2358
        %2362 = vst [vmem:[#allocation6 + $0x8] sm:$0x1f] %v2359
        %vm2363 = vcmask 208896
        %2364 = vst.msk [vmem:[#allocation6 + $0x10] sm:$0x1f] %vm2363, %v2360
        %v2365 = vld [vmem:[#allocation3] sm:$0x1f]
        %v2366 = vld [vmem:[#allocation3 + $0x8] sm:$0x1f]
        %v2367 = vld [vmem:[#allocation3 + $0x10] sm:$0x1f]
        %v2371 = vrot.slane %v2365, 3
        %v2372 = vrot.slane %v2366, 3
        %v2373 = vrot.slane %v2367, 3
        %2374 = vrot.lane.b32.xlu0 %v2371, 127
        %v2375 = vpop.permute.xlu0 %2374
        %2376 = vrot.lane.b32.xlu0 %v2372, 127
        %v2377 = vpop.permute.xlu0 %2376
        %2378 = vrot.lane.b32.xlu0 %v2373, 127
        %v2379 = vpop.permute.xlu0 %2378
        %v2380 = vsel %vm433, %v2375, %v2377
        %v2381 = vsel %vm433, %v2377, %v2379
        %2385 = vst [vmem:[#allocation6] sm:$0xe0] %v2380
        %2386 = vst [vmem:[#allocation6 + $0x8] sm:$0xe0] %v2381
        %vm2387 = vcmask 211973
        %2388 = vst.msk [vmem:[#allocation6 + $0x10] sm:$0xe0] %vm2387, %v2379
        %2389 = vst [vmem:[#allocation6 + $0x18] sm:$0x3] %v2380
        %2390 = vst [vmem:[#allocation6 + $0x20] sm:$0x3] %v2381
        %vm2391 = vcmask 205824
        %2392 = vst.msk [vmem:[#allocation6 + $0x28] sm:$0x3] %vm2391, %v2379
        %v2393 = vld [vmem:[#allocation3] sm:$0x1f]
        %v2394 = vld [vmem:[#allocation3 + $0x8] sm:$0x1f]
        %v2395 = vld [vmem:[#allocation3 + $0x10] sm:$0x1f]
        %v2399 = vrot.slane %v2393, 6
        %v2400 = vrot.slane %v2394, 6
        %v2401 = vrot.slane %v2395, 6
        %2402 = vrot.lane.b32.xlu0 %v2399, 126
        %v2403 = vpop.permute.xlu0 %2402
        %2404 = vrot.lane.b32.xlu0 %v2400, 126
        %v2405 = vpop.permute.xlu0 %2404
        %2406 = vrot.lane.b32.xlu0 %v2401, 126
        %v2407 = vpop.permute.xlu0 %2406
        %v2408 = vsel %vm454, %v2403, %v2405
        %v2409 = vsel %vm454, %v2405, %v2407
        %2413 = vst [vmem:[#allocation6 + $0x18] sm:$0x7c] %v2408
        %2414 = vst [vmem:[#allocation6 + $0x20] sm:$0x7c] %v2409
        %vm2415 = vcmask 210946
        %2416 = vst.msk [vmem:[#allocation6 + $0x28] sm:$0x7c] %vm2415, %v2407
        %v2417 = vld [vmem:[#allocation3] sm:$0x1f]
        %v2418 = vld [vmem:[#allocation3 + $0x8] sm:$0x1f]
        %v2419 = vld [vmem:[#allocation3 + $0x10] sm:$0x1f]
        %v2423 = vrot.slane %v2417, 1
        %v2424 = vrot.slane %v2418, 1
        %v2425 = vrot.slane %v2419, 1
        %2426 = vrot.lane.b32.xlu0 %v2423, 125
        %v2427 = vpop.permute.xlu0 %2426
        %2428 = vrot.lane.b32.xlu0 %v2424, 125
        %v2429 = vpop.permute.xlu0 %2428
        %2430 = vrot.lane.b32.xlu0 %v2425, 125
        %v2431 = vpop.permute.xlu0 %2430
        %v2432 = vsel %vm476, %v2427, %v2429
        %v2433 = vsel %vm476, %v2429, %v2431
        %2437 = vst [vmem:[#allocation6 + $0x18] sm:$0x80] %v2432
        %2438 = vst [vmem:[#allocation6 + $0x20] sm:$0x80] %v2433
        %vm2439 = vcmask 211975
        %2440 = vst.msk [vmem:[#allocation6 + $0x28] sm:$0x80] %vm2439, %v2431
        %2441 = vst [vmem:[#allocation6 + $0x30] sm:$0xf] %v2432
        %2442 = vst [vmem:[#allocation6 + $0x38] sm:$0xf] %v2433
        %vm2443 = vcmask 207872
        %2444 = vst.msk [vmem:[#allocation6 + $0x40] sm:$0xf] %vm2443, %v2431
        %v2445 = vld [vmem:[#allocation3] sm:$0x1f]
        %v2446 = vld [vmem:[#allocation3 + $0x8] sm:$0x1f]
        %v2447 = vld [vmem:[#allocation3 + $0x10] sm:$0x1f]
        %v2451 = vrot.slane %v2445, 4
        %v2452 = vrot.slane %v2446, 4
        %v2453 = vrot.slane %v2447, 4
        %2454 = vrot.lane.b32.xlu0 %v2451, 124
        %v2455 = vpop.permute.xlu0 %2454
        %2456 = vrot.lane.b32.xlu0 %v2452, 124
        %v2457 = vpop.permute.xlu0 %2456
        %2458 = vrot.lane.b32.xlu0 %v2453, 124
        %v2459 = vpop.permute.xlu0 %2458
        %v2460 = vsel %vm497, %v2455, %v2457
        %v2461 = vsel %vm497, %v2457, %v2459
        %2465 = vst [vmem:[#allocation6 + $0x30] sm:$0xf0] %v2460
        %2466 = vst [vmem:[#allocation6 + $0x38] sm:$0xf0] %v2461
        %vm2467 = vcmask 211972
        %2468 = vst.msk [vmem:[#allocation6 + $0x40] sm:$0xf0] %vm2467, %v2459
        %2469 = vst [vmem:[#allocation6 + $0x48] sm:$0x1] %v2460
        %2470 = vst [vmem:[#allocation6 + $0x50] sm:$0x1] %v2461
        %vm2471 = vcmask 204800
        %2472 = vst.msk [vmem:[#allocation6 + $0x58] sm:$0x1] %vm2471, %v2459
        %v2473 = vld [vmem:[#allocation3] sm:$0x1f]
        %v2474 = vld [vmem:[#allocation3 + $0x8] sm:$0x1f]
        %v2475 = vld [vmem:[#allocation3 + $0x10] sm:$0x1f]
        %v2479 = vrot.slane %v2473, 7
        %v2480 = vrot.slane %v2474, 7
        %v2481 = vrot.slane %v2475, 7
        %2482 = vrot.lane.b32.xlu0 %v2479, 123
        %v2483 = vpop.permute.xlu0 %2482
        %2484 = vrot.lane.b32.xlu0 %v2480, 123
        %v2485 = vpop.permute.xlu0 %2484
        %2486 = vrot.lane.b32.xlu0 %v2481, 123
        %v2487 = vpop.permute.xlu0 %2486
        %v2488 = vsel %vm518, %v2483, %v2485
        %v2489 = vsel %vm518, %v2485, %v2487
        %2493 = vst [vmem:[#allocation6 + $0x48] sm:$0x3e] %v2488
        %2494 = vst [vmem:[#allocation6 + $0x50] sm:$0x3e] %v2489
        %vm2495 = vcmask 209921
        %2496 = vst.msk [vmem:[#allocation6 + $0x58] sm:$0x3e] %vm2495, %v2487
        %v2497 = vld [vmem:[#allocation3] sm:$0x1f]
        %v2498 = vld [vmem:[#allocation3 + $0x8] sm:$0x1f]
        %v2499 = vld [vmem:[#allocation3 + $0x10] sm:$0x1f]
        %v2503 = vrot.slane %v2497, 2
        %v2504 = vrot.slane %v2498, 2
        %v2505 = vrot.slane %v2499, 2
        %2506 = vrot.lane.b32.xlu0 %v2503, 122
        %v2507 = vpop.permute.xlu0 %2506
        %2508 = vrot.lane.b32.xlu0 %v2504, 122
        %v2509 = vpop.permute.xlu0 %2508
        %2510 = vrot.lane.b32.xlu0 %v2505, 122
        %v2511 = vpop.permute.xlu0 %2510
        %v2512 = vsel %vm549, %v2507, %v2509
        %v2513 = vsel %vm549, %v2509, %v2511
        %2517 = vst [vmem:[#allocation6 + $0x48] sm:$0xc0] %v2512
        %2518 = vst [vmem:[#allocation6 + $0x50] sm:$0xc0] %v2513
        %vm2519 = vcmask 211974
        %2520 = vst.msk [vmem:[#allocation6 + $0x58] sm:$0xc0] %vm2519, %v2511
        %2521 = vst [vmem:[#allocation6 + $0x60] sm:$0x7] %v2512
        %2522 = vst [vmem:[#allocation6 + $0x68] sm:$0x7] %v2513
        %vm2523 = vcmask 206848
        %2524 = vst.msk [vmem:[#allocation6 + $0x70] sm:$0x7] %vm2523, %v2511
        %v2525 = vld [vmem:[#allocation3] sm:$0x1f]
        %v2526 = vld [vmem:[#allocation3 + $0x8] sm:$0x1f]
        %v2527 = vld [vmem:[#allocation3 + $0x10] sm:$0x1f]
        %v2531 = vrot.slane %v2525, 5
        %v2532 = vrot.slane %v2526, 5
        %v2533 = vrot.slane %v2527, 5
        %2534 = vrot.lane.b32.xlu0 %v2531, 121
        %v2535 = vpop.permute.xlu0 %2534
        %2536 = vrot.lane.b32.xlu0 %v2532, 121
        %v2537 = vpop.permute.xlu0 %2536
        %2538 = vrot.lane.b32.xlu0 %v2533, 121
        %v2539 = vpop.permute.xlu0 %2538
        %v2540 = vsel %vm581, %v2535, %v2537
        %v2541 = vsel %vm581, %v2537, %v2539
        %2545 = vst [vmem:[#allocation6 + $0x60] sm:$0xf8] %v2540
        %2546 = vst [vmem:[#allocation6 + $0x68] sm:$0xf8] %v2541
        %vm2547 = vcmask 211971
        %2548 = vst.msk [vmem:[#allocation6 + $0x70] sm:$0xf8] %vm2547, %v2539
        %v2549 = vld [vmem:[#allocation3] sm:$0x1f]
        %v2550 = vld [vmem:[#allocation3 + $0x8] sm:$0x1f]
        %v2551 = vld [vmem:[#allocation3 + $0x10] sm:$0x1f]
        %2555 = vrot.lane.b32.xlu0 %v2549, 120
        %v2556 = vpop.permute.xlu0 %2555
        %2557 = vrot.lane.b32.xlu0 %v2550, 120
        %v2558 = vpop.permute.xlu0 %2557
        %2559 = vrot.lane.b32.xlu0 %v2551, 120
        %v2560 = vpop.permute.xlu0 %2559
        %v2561 = vsel %vm612, %v2556, %v2558
        %v2562 = vsel %vm612, %v2558, %v2560
        %2566 = vst [vmem:[#allocation6 + $0x78] sm:$0x1f] %v2561
        %2567 = vst [vmem:[#allocation6 + $0x80] sm:$0x1f] %v2562
        %2568 = vst.msk [vmem:[#allocation6 + $0x88] sm:$0x1f] %vm2363, %v2560
        %v2569 = vld [vmem:[#allocation3] sm:$0x1f]
        %v2570 = vld [vmem:[#allocation3 + $0x8] sm:$0x1f]
        %v2571 = vld [vmem:[#allocation3 + $0x10] sm:$0x1f]
        %v2575 = vrot.slane %v2569, 3
        %v2576 = vrot.slane %v2570, 3
        %v2577 = vrot.slane %v2571, 3
        %2578 = vrot.lane.b32.xlu0 %v2575, 119
        %v2579 = vpop.permute.xlu0 %2578
        %2580 = vrot.lane.b32.xlu0 %v2576, 119
        %v2581 = vpop.permute.xlu0 %2580
        %2582 = vrot.lane.b32.xlu0 %v2577, 119
        %v2583 = vpop.permute.xlu0 %2582
        %v2584 = vsel %vm643, %v2579, %v2581
        %v2585 = vsel %vm643, %v2581, %v2583
        %2589 = vst [vmem:[#allocation6 + $0x78] sm:$0xe0] %v2584
        %2590 = vst [vmem:[#allocation6 + $0x80] sm:$0xe0] %v2585
        %2591 = vst.msk [vmem:[#allocation6 + $0x88] sm:$0xe0] %vm2387, %v2583
        %2592 = vst [vmem:[#allocation6 + $0x90] sm:$0x3] %v2584
        %2593 = vst [vmem:[#allocation6 + $0x98] sm:$0x3] %v2585
        %2594 = vst.msk [vmem:[#allocation6 + $0xa0] sm:$0x3] %vm2391, %v2583
        %v2595 = vld [vmem:[#allocation3] sm:$0x1f]
        %v2596 = vld [vmem:[#allocation3 + $0x8] sm:$0x1f]
        %v2597 = vld [vmem:[#allocation3 + $0x10] sm:$0x1f]
        %v2601 = vrot.slane %v2595, 6
        %v2602 = vrot.slane %v2596, 6
        %v2603 = vrot.slane %v2597, 6
        %2604 = vrot.lane.b32.xlu0 %v2601, 118
        %v2605 = vpop.permute.xlu0 %2604
        %2606 = vrot.lane.b32.xlu0 %v2602, 118
        %v2607 = vpop.permute.xlu0 %2606
        %2608 = vrot.lane.b32.xlu0 %v2603, 118
        %v2609 = vpop.permute.xlu0 %2608
        %v2610 = vsel %vm675, %v2605, %v2607
        %v2611 = vsel %vm675, %v2607, %v2609
        %2615 = vst [vmem:[#allocation6 + $0x90] sm:$0x7c] %v2610
        %2616 = vst [vmem:[#allocation6 + $0x98] sm:$0x7c] %v2611
        %2617 = vst.msk [vmem:[#allocation6 + $0xa0] sm:$0x7c] %vm2415, %v2609
        %v2618 = vld [vmem:[#allocation3] sm:$0x1f]
        %v2619 = vld [vmem:[#allocation3 + $0x8] sm:$0x1f]
        %v2620 = vld [vmem:[#allocation3 + $0x10] sm:$0x1f]
        %v2624 = vrot.slane %v2618, 1
        %v2625 = vrot.slane %v2619, 1
        %v2626 = vrot.slane %v2620, 1
        %2627 = vrot.lane.b32.xlu0 %v2624, 117
        %v2628 = vpop.permute.xlu0 %2627
        %2629 = vrot.lane.b32.xlu0 %v2625, 117
        %v2630 = vpop.permute.xlu0 %2629
        %2631 = vrot.lane.b32.xlu0 %v2626, 117
        %v2632 = vpop.permute.xlu0 %2631
        %v2633 = vsel %vm707, %v2628, %v2630
        %v2634 = vsel %vm707, %v2630, %v2632
        %2638 = vst [vmem:[#allocation6 + $0x90] sm:$0x80] %v2633
        %2639 = vst [vmem:[#allocation6 + $0x98] sm:$0x80] %v2634
        %2640 = vst.msk [vmem:[#allocation6 + $0xa0] sm:$0x80] %vm2439, %v2632
        %2641 = vst [vmem:[#allocation6 + $0xa8] sm:$0xf] %v2633
        %2642 = vst [vmem:[#allocation6 + $0xb0] sm:$0xf] %v2634
        %2643 = vst.msk [vmem:[#allocation6 + $0xb8] sm:$0xf] %vm2443, %v2632
        %v2644 = vld [vmem:[#allocation3] sm:$0x1f]
        %v2645 = vld [vmem:[#allocation3 + $0x8] sm:$0x1f]
        %v2646 = vld [vmem:[#allocation3 + $0x10] sm:$0x1f]
        %v2650 = vrot.slane %v2644, 4
        %v2651 = vrot.slane %v2645, 4
        %v2652 = vrot.slane %v2646, 4
        %2653 = vrot.lane.b32.xlu0 %v2650, 116
        %v2654 = vpop.permute.xlu0 %2653
        %2655 = vrot.lane.b32.xlu0 %v2651, 116
        %v2656 = vpop.permute.xlu0 %2655
        %2657 = vrot.lane.b32.xlu0 %v2652, 116
        %v2658 = vpop.permute.xlu0 %2657
        %v2659 = vsel %vm738, %v2654, %v2656
        %v2660 = vsel %vm738, %v2656, %v2658
        %2664 = vst [vmem:[#allocation6 + $0xa8] sm:$0xf0] %v2659
        %2665 = vst [vmem:[#allocation6 + $0xb0] sm:$0xf0] %v2660
        %2666 = vst.msk [vmem:[#allocation6 + $0xb8] sm:$0xf0] %vm2467, %v2658
        %2667 = vst [vmem:[#allocation6 + $0xc0] sm:$0x1] %v2659
        %2668 = vst [vmem:[#allocation6 + $0xc8] sm:$0x1] %v2660
        %2669 = vst.msk [vmem:[#allocation6 + $0xd0] sm:$0x1] %vm2471, %v2658
        %v2670 = vld [vmem:[#allocation3] sm:$0x1f]
        %v2671 = vld [vmem:[#allocation3 + $0x8] sm:$0x1f]
        %v2672 = vld [vmem:[#allocation3 + $0x10] sm:$0x1f]
        %v2676 = vrot.slane %v2670, 7
        %v2677 = vrot.slane %v2671, 7
        %v2678 = vrot.slane %v2672, 7
        %2679 = vrot.lane.b32.xlu0 %v2676, 115
        %v2680 = vpop.permute.xlu0 %2679
        %2681 = vrot.lane.b32.xlu0 %v2677, 115
        %v2682 = vpop.permute.xlu0 %2681
        %2683 = vrot.lane.b32.xlu0 %v2678, 115
        %v2684 = vpop.permute.xlu0 %2683
        %v2685 = vsel %vm769, %v2680, %v2682
        %v2686 = vsel %vm769, %v2682, %v2684
        %2690 = vst [vmem:[#allocation6 + $0xc0] sm:$0x3e] %v2685
        %2691 = vst [vmem:[#allocation6 + $0xc8] sm:$0x3e] %v2686
        %2692 = vst.msk [vmem:[#allocation6 + $0xd0] sm:$0x3e] %vm2495, %v2684
        %v2693 = vld [vmem:[#allocation3] sm:$0x1f]
        %v2694 = vld [vmem:[#allocation3 + $0x8] sm:$0x1f]
        %v2695 = vld [vmem:[#allocation3 + $0x10] sm:$0x1f]
        %v2699 = vrot.slane %v2693, 2
        %v2700 = vrot.slane %v2694, 2
        %v2701 = vrot.slane %v2695, 2
        %2702 = vrot.lane.b32.xlu0 %v2699, 114
        %v2703 = vpop.permute.xlu0 %2702
        %2704 = vrot.lane.b32.xlu0 %v2700, 114
        %v2705 = vpop.permute.xlu0 %2704
        %2706 = vrot.lane.b32.xlu0 %v2701, 114
        %v2707 = vpop.permute.xlu0 %2706
        %v2708 = vsel %vm801, %v2703, %v2705
        %v2709 = vsel %vm801, %v2705, %v2707
        %2713 = vst [vmem:[#allocation6 + $0xc0] sm:$0xc0] %v2708
        %2714 = vst [vmem:[#allocation6 + $0xc8] sm:$0xc0] %v2709
        %2715 = vst.msk [vmem:[#allocation6 + $0xd0] sm:$0xc0] %vm2519, %v2707
        %2716 = vst [vmem:[#allocation6 + $0xd8] sm:$0x7] %v2708
        %2717 = vst [vmem:[#allocation6 + $0xe0] sm:$0x7] %v2709
        %2718 = vst.msk [vmem:[#allocation6 + $0xe8] sm:$0x7] %vm2523, %v2707
        %v2719 = vld [vmem:[#allocation3] sm:$0x1f]
        %v2720 = vld [vmem:[#allocation3 + $0x8] sm:$0x1f]
        %v2721 = vld [vmem:[#allocation3 + $0x10] sm:$0x1f]
        %v2725 = vrot.slane %v2719, 5
        %v2726 = vrot.slane %v2720, 5
        %v2727 = vrot.slane %v2721, 5
        %2728 = vrot.lane.b32.xlu0 %v2725, 113
        %v2729 = vpop.permute.xlu0 %2728
        %2730 = vrot.lane.b32.xlu0 %v2726, 113
        %v2731 = vpop.permute.xlu0 %2730
        %2732 = vrot.lane.b32.xlu0 %v2727, 113
        %v2733 = vpop.permute.xlu0 %2732
        %v2734 = vsel %vm833, %v2729, %v2731
        %v2735 = vsel %vm833, %v2731, %v2733
        %2739 = vst [vmem:[#allocation6 + $0xd8] sm:$0xf8] %v2734
        %2740 = vst [vmem:[#allocation6 + $0xe0] sm:$0xf8] %v2735
        %2741 = vst.msk [vmem:[#allocation6 + $0xe8] sm:$0xf8] %vm2547, %v2733
        %v2742 = vld [vmem:[#allocation3] sm:$0x1f]
        %v2743 = vld [vmem:[#allocation3 + $0x8] sm:$0x1f]
        %v2744 = vld [vmem:[#allocation3 + $0x10] sm:$0x1f]
        %2748 = vrot.lane.b32.xlu0 %v2742, 112
        %v2749 = vpop.permute.xlu0 %2748
        %2750 = vrot.lane.b32.xlu0 %v2743, 112
        %v2751 = vpop.permute.xlu0 %2750
        %2752 = vrot.lane.b32.xlu0 %v2744, 112
        %v2753 = vpop.permute.xlu0 %2752
        %v2754 = vsel %vm864, %v2749, %v2751
        %v2755 = vsel %vm864, %v2751, %v2753
        %2759 = vst [vmem:[#allocation6 + $0xf0] sm:$0x1f] %v2754
        %2760 = vst [vmem:[#allocation6 + $0xf8] sm:$0x1f] %v2755
        %2761 = vst.msk [vmem:[#allocation6 + $0x100] sm:$0x1f] %vm2363, %v2753
        %v2762 = vld [vmem:[#allocation3] sm:$0x1f]
        %v2763 = vld [vmem:[#allocation3 + $0x8] sm:$0x1f]
        %v2764 = vld [vmem:[#allocation3 + $0x10] sm:$0x1f]
        %v2768 = vrot.slane %v2762, 3
        %v2769 = vrot.slane %v2763, 3
        %v2770 = vrot.slane %v2764, 3
        %2771 = vrot.lane.b32.xlu0 %v2768, 111
        %v2772 = vpop.permute.xlu0 %2771
        %2773 = vrot.lane.b32.xlu0 %v2769, 111
        %v2774 = vpop.permute.xlu0 %2773
        %2775 = vrot.lane.b32.xlu0 %v2770, 111
        %v2776 = vpop.permute.xlu0 %2775
        %v2777 = vsel %vm895, %v2772, %v2774
        %v2778 = vsel %vm895, %v2774, %v2776
        %2782 = vst [vmem:[#allocation6 + $0xf0] sm:$0xe0] %v2777
        %2783 = vst [vmem:[#allocation6 + $0xf8] sm:$0xe0] %v2778
        %2784 = vst.msk [vmem:[#allocation6 + $0x100] sm:$0xe0] %vm2387, %v2776
        %2785 = vst [vmem:[#allocation6 + $0x108] sm:$0x3] %v2777
        %2786 = vst [vmem:[#allocation6 + $0x110] sm:$0x3] %v2778
        %2787 = vst.msk [vmem:[#allocation6 + $0x118] sm:$0x3] %vm2391, %v2776
        %v2788 = vld [vmem:[#allocation3] sm:$0x1f]
        %v2789 = vld [vmem:[#allocation3 + $0x8] sm:$0x1f]
        %v2790 = vld [vmem:[#allocation3 + $0x10] sm:$0x1f]
        %v2794 = vrot.slane %v2788, 6
        %v2795 = vrot.slane %v2789, 6
        %v2796 = vrot.slane %v2790, 6
        %2797 = vrot.lane.b32.xlu0 %v2794, 110
        %v2798 = vpop.permute.xlu0 %2797
        %2799 = vrot.lane.b32.xlu0 %v2795, 110
        %v2800 = vpop.permute.xlu0 %2799
        %2801 = vrot.lane.b32.xlu0 %v2796, 110
        %v2802 = vpop.permute.xlu0 %2801
        %v2803 = vsel %vm927, %v2798, %v2800
        %v2804 = vsel %vm927, %v2800, %v2802
        %2808 = vst [vmem:[#allocation6 + $0x108] sm:$0x7c] %v2803
        %2809 = vst [vmem:[#allocation6 + $0x110] sm:$0x7c] %v2804
        %2810 = vst.msk [vmem:[#allocation6 + $0x118] sm:$0x7c] %vm2415, %v2802
        %v2811 = vld [vmem:[#allocation3] sm:$0x1f]
        %v2812 = vld [vmem:[#allocation3 + $0x8] sm:$0x1f]
        %v2813 = vld [vmem:[#allocation3 + $0x10] sm:$0x1f]
        %v2817 = vrot.slane %v2811, 1
        %v2818 = vrot.slane %v2812, 1
        %v2819 = vrot.slane %v2813, 1
        %2820 = vrot.lane.b32.xlu0 %v2817, 109
        %v2821 = vpop.permute.xlu0 %2820
        %2822 = vrot.lane.b32.xlu0 %v2818, 109
        %v2823 = vpop.permute.xlu0 %2822
        %2824 = vrot.lane.b32.xlu0 %v2819, 109
        %v2825 = vpop.permute.xlu0 %2824
        %v2826 = vsel %vm959, %v2821, %v2823
        %v2827 = vsel %vm959, %v2823, %v2825
        %2831 = vst [vmem:[#allocation6 + $0x108] sm:$0x80] %v2826
        %2832 = vst [vmem:[#allocation6 + $0x110] sm:$0x80] %v2827
        %2833 = vst.msk [vmem:[#allocation6 + $0x118] sm:$0x80] %vm2439, %v2825
        %2834 = vst [vmem:[#allocation6 + $0x120] sm:$0xf] %v2826
        %2835 = vst [vmem:[#allocation6 + $0x128] sm:$0xf] %v2827
        %2836 = vst.msk [vmem:[#allocation6 + $0x130] sm:$0xf] %vm2443, %v2825
        %v2837 = vld [vmem:[#allocation3] sm:$0x1f]
        %v2838 = vld [vmem:[#allocation3 + $0x8] sm:$0x1f]
        %v2839 = vld [vmem:[#allocation3 + $0x10] sm:$0x1f]
        %v2843 = vrot.slane %v2837, 4
        %v2844 = vrot.slane %v2838, 4
        %v2845 = vrot.slane %v2839, 4
        %2846 = vrot.lane.b32.xlu0 %v2843, 108
        %v2847 = vpop.permute.xlu0 %2846
        %2848 = vrot.lane.b32.xlu0 %v2844, 108
        %v2849 = vpop.permute.xlu0 %2848
        %2850 = vrot.lane.b32.xlu0 %v2845, 108
        %v2851 = vpop.permute.xlu0 %2850
        %v2852 = vsel %vm990, %v2847, %v2849
        %v2853 = vsel %vm990, %v2849, %v2851
        %2857 = vst [vmem:[#allocation6 + $0x120] sm:$0xf0] %v2852
        %2858 = vst [vmem:[#allocation6 + $0x128] sm:$0xf0] %v2853
        %2859 = vst.msk [vmem:[#allocation6 + $0x130] sm:$0xf0] %vm2467, %v2851
        %2860 = vst [vmem:[#allocation6 + $0x138] sm:$0x1] %v2852
        %2861 = vst [vmem:[#allocation6 + $0x140] sm:$0x1] %v2853
        %2862 = vst.msk [vmem:[#allocation6 + $0x148] sm:$0x1] %vm2471, %v2851
        %v2863 = vld [vmem:[#allocation3] sm:$0x1f]
        %v2864 = vld [vmem:[#allocation3 + $0x8] sm:$0x1f]
        %v2865 = vld [vmem:[#allocation3 + $0x10] sm:$0x1f]
        %v2869 = vrot.slane %v2863, 7
        %v2870 = vrot.slane %v2864, 7
        %v2871 = vrot.slane %v2865, 7
        %2872 = vrot.lane.b32.xlu0 %v2869, 107
        %v2873 = vpop.permute.xlu0 %2872
        %2874 = vrot.lane.b32.xlu0 %v2870, 107
        %v2875 = vpop.permute.xlu0 %2874
        %2876 = vrot.lane.b32.xlu0 %v2871, 107
        %v2877 = vpop.permute.xlu0 %2876
        %v2878 = vsel %vm1021, %v2873, %v2875
        %v2879 = vsel %vm1021, %v2875, %v2877
        %2883 = vst [vmem:[#allocation6 + $0x138] sm:$0x3e] %v2878
        %2884 = vst [vmem:[#allocation6 + $0x140] sm:$0x3e] %v2879
        %2885 = vst.msk [vmem:[#allocation6 + $0x148] sm:$0x3e] %vm2495, %v2877
        %v2886 = vld [vmem:[#allocation3] sm:$0x1f]
        %v2887 = vld [vmem:[#allocation3 + $0x8] sm:$0x1f]
        %v2888 = vld [vmem:[#allocation3 + $0x10] sm:$0x1f]
        %v2892 = vrot.slane %v2886, 2
        %v2893 = vrot.slane %v2887, 2
        %v2894 = vrot.slane %v2888, 2
        %2895 = vrot.lane.b32.xlu0 %v2892, 106
        %v2896 = vpop.permute.xlu0 %2895
        %2897 = vrot.lane.b32.xlu0 %v2893, 106
        %v2898 = vpop.permute.xlu0 %2897
        %2899 = vrot.lane.b32.xlu0 %v2894, 106
        %v2900 = vpop.permute.xlu0 %2899
        %v2901 = vsel %vm1053, %v2896, %v2898
        %v2902 = vsel %vm1053, %v2898, %v2900
        %2906 = vst [vmem:[#allocation6 + $0x138] sm:$0xc0] %v2901
        %2907 = vst [vmem:[#allocation6 + $0x140] sm:$0xc0] %v2902
        %2908 = vst.msk [vmem:[#allocation6 + $0x148] sm:$0xc0] %vm2519, %v2900
        %2909 = vst [vmem:[#allocation6 + $0x150] sm:$0x7] %v2901
        %2910 = vst [vmem:[#allocation6 + $0x158] sm:$0x7] %v2902
        %2911 = vst.msk [vmem:[#allocation6 + $0x160] sm:$0x7] %vm2523, %v2900
        %v2912 = vld [vmem:[#allocation3] sm:$0x1f]
        %v2913 = vld [vmem:[#allocation3 + $0x8] sm:$0x1f]
        %v2914 = vld [vmem:[#allocation3 + $0x10] sm:$0x1f]
        %v2918 = vrot.slane %v2912, 5
        %v2919 = vrot.slane %v2913, 5
        %v2920 = vrot.slane %v2914, 5
        %2921 = vrot.lane.b32.xlu0 %v2918, 105
        %v2922 = vpop.permute.xlu0 %2921
        %2923 = vrot.lane.b32.xlu0 %v2919, 105
        %v2924 = vpop.permute.xlu0 %2923
        %2925 = vrot.lane.b32.xlu0 %v2920, 105
        %v2926 = vpop.permute.xlu0 %2925
        %v2927 = vsel %vm1085, %v2922, %v2924
        %v2928 = vsel %vm1085, %v2924, %v2926
        %2932 = vst [vmem:[#allocation6 + $0x150] sm:$0xf8] %v2927
        %2933 = vst [vmem:[#allocation6 + $0x158] sm:$0xf8] %v2928
        %2934 = vst.msk [vmem:[#allocation6 + $0x160] sm:$0xf8] %vm2547, %v2926
        %v2935 = vld [vmem:[#allocation3] sm:$0x1f]
        %v2936 = vld [vmem:[#allocation3 + $0x8] sm:$0x1f]
        %v2937 = vld [vmem:[#allocation3 + $0x10] sm:$0x1f]
        %2941 = vrot.lane.b32.xlu0 %v2935, 104
        %v2942 = vpop.permute.xlu0 %2941
        %2943 = vrot.lane.b32.xlu0 %v2936, 104
        %v2944 = vpop.permute.xlu0 %2943
        %2945 = vrot.lane.b32.xlu0 %v2937, 104
        %v2946 = vpop.permute.xlu0 %2945
        %v2947 = vsel %vm1116, %v2942, %v2944
        %v2948 = vsel %vm1116, %v2944, %v2946
        %2952 = vst [vmem:[#allocation6 + $0x168] sm:$0x1f] %v2947
        %2953 = vst [vmem:[#allocation6 + $0x170] sm:$0x1f] %v2948
        %2954 = vst.msk [vmem:[#allocation6 + $0x178] sm:$0x1f] %vm2363, %v2946
        %v2955 = vld [vmem:[#allocation3] sm:$0x1f]
        %v2956 = vld [vmem:[#allocation3 + $0x8] sm:$0x1f]
        %v2957 = vld [vmem:[#allocation3 + $0x10] sm:$0x1f]
        %v2961 = vrot.slane %v2955, 3
        %v2962 = vrot.slane %v2956, 3
        %v2963 = vrot.slane %v2957, 3
        %2964 = vrot.lane.b32.xlu0 %v2961, 103
        %v2965 = vpop.permute.xlu0 %2964
        %2966 = vrot.lane.b32.xlu0 %v2962, 103
        %v2967 = vpop.permute.xlu0 %2966
        %2968 = vrot.lane.b32.xlu0 %v2963, 103
        %v2969 = vpop.permute.xlu0 %2968
        %v2970 = vsel %vm1147, %v2965, %v2967
        %v2971 = vsel %vm1147, %v2967, %v2969
        %2975 = vst [vmem:[#allocation6 + $0x168] sm:$0xe0] %v2970
        %2976 = vst [vmem:[#allocation6 + $0x170] sm:$0xe0] %v2971
        %2977 = vst.msk [vmem:[#allocation6 + $0x178] sm:$0xe0] %vm2387, %v2969
        %2978 = vst [vmem:[#allocation6 + $0x180] sm:$0x3] %v2970
        %2979 = vst [vmem:[#allocation6 + $0x188] sm:$0x3] %v2971
        %2980 = vst.msk [vmem:[#allocation6 + $0x190] sm:$0x3] %vm2391, %v2969
        %v2981 = vld [vmem:[#allocation3] sm:$0x1f]
        %v2982 = vld [vmem:[#allocation3 + $0x8] sm:$0x1f]
        %v2983 = vld [vmem:[#allocation3 + $0x10] sm:$0x1f]
        %v2987 = vrot.slane %v2981, 6
        %v2988 = vrot.slane %v2982, 6
        %v2989 = vrot.slane %v2983, 6
        %2990 = vrot.lane.b32.xlu0 %v2987, 102
        %v2991 = vpop.permute.xlu0 %2990
        %2992 = vrot.lane.b32.xlu0 %v2988, 102
        %v2993 = vpop.permute.xlu0 %2992
        %2994 = vrot.lane.b32.xlu0 %v2989, 102
        %v2995 = vpop.permute.xlu0 %2994
        %v2996 = vsel %vm1179, %v2991, %v2993
        %v2997 = vsel %vm1179, %v2993, %v2995
        %3001 = vst [vmem:[#allocation6 + $0x180] sm:$0x7c] %v2996
        %3002 = vst [vmem:[#allocation6 + $0x188] sm:$0x7c] %v2997
        %3003 = vst.msk [vmem:[#allocation6 + $0x190] sm:$0x7c] %vm2415, %v2995
        %v3004 = vld [vmem:[#allocation3] sm:$0x1f]
        %v3005 = vld [vmem:[#allocation3 + $0x8] sm:$0x1f]
        %v3006 = vld [vmem:[#allocation3 + $0x10] sm:$0x1f]
        %v3010 = vrot.slane %v3004, 1
        %v3011 = vrot.slane %v3005, 1
        %v3012 = vrot.slane %v3006, 1
        %3013 = vrot.lane.b32.xlu0 %v3010, 101
        %v3014 = vpop.permute.xlu0 %3013
        %3015 = vrot.lane.b32.xlu0 %v3011, 101
        %v3016 = vpop.permute.xlu0 %3015
        %3017 = vrot.lane.b32.xlu0 %v3012, 101
        %v3018 = vpop.permute.xlu0 %3017
        %v3019 = vsel %vm1211, %v3014, %v3016
        %v3020 = vsel %vm1211, %v3016, %v3018
        %3024 = vst [vmem:[#allocation6 + $0x180] sm:$0x80] %v3019
        %3025 = vst [vmem:[#allocation6 + $0x188] sm:$0x80] %v3020
        %3026 = vst.msk [vmem:[#allocation6 + $0x190] sm:$0x80] %vm2439, %v3018
        %3027 = vst [vmem:[#allocation6 + $0x198] sm:$0xf] %v3019
        %3028 = vst [vmem:[#allocation6 + $0x1a0] sm:$0xf] %v3020
        %3029 = vst.msk [vmem:[#allocation6 + $0x1a8] sm:$0xf] %vm2443, %v3018
        %v3030 = vld [vmem:[#allocation3] sm:$0x1f]
        %v3031 = vld [vmem:[#allocation3 + $0x8] sm:$0x1f]
        %v3032 = vld [vmem:[#allocation3 + $0x10] sm:$0x1f]
        %v3036 = vrot.slane %v3030, 4
        %v3037 = vrot.slane %v3031, 4
        %v3038 = vrot.slane %v3032, 4
        %3039 = vrot.lane.b32.xlu0 %v3036, 100
        %v3040 = vpop.permute.xlu0 %3039
        %3041 = vrot.lane.b32.xlu0 %v3037, 100
        %v3042 = vpop.permute.xlu0 %3041
        %3043 = vrot.lane.b32.xlu0 %v3038, 100
        %v3044 = vpop.permute.xlu0 %3043
        %v3045 = vsel %vm1242, %v3040, %v3042
        %v3046 = vsel %vm1242, %v3042, %v3044
        %3050 = vst [vmem:[#allocation6 + $0x198] sm:$0xf0] %v3045
        %3051 = vst [vmem:[#allocation6 + $0x1a0] sm:$0xf0] %v3046
        %3052 = vst.msk [vmem:[#allocation6 + $0x1a8] sm:$0xf0] %vm2467, %v3044
        %3053 = vst [vmem:[#allocation6 + $0x1b0] sm:$0x1] %v3045
        %3054 = vst [vmem:[#allocation6 + $0x1b8] sm:$0x1] %v3046
        %3055 = vst.msk [vmem:[#allocation6 + $0x1c0] sm:$0x1] %vm2471, %v3044
        %v3056 = vld [vmem:[#allocation3] sm:$0x1f]
        %v3057 = vld [vmem:[#allocation3 + $0x8] sm:$0x1f]
        %v3058 = vld [vmem:[#allocation3 + $0x10] sm:$0x1f]
        %v3062 = vrot.slane %v3056, 7
        %v3063 = vrot.slane %v3057, 7
        %v3064 = vrot.slane %v3058, 7
        %3065 = vrot.lane.b32.xlu0 %v3062, 99
        %v3066 = vpop.permute.xlu0 %3065
        %3067 = vrot.lane.b32.xlu0 %v3063, 99
        %v3068 = vpop.permute.xlu0 %3067
        %3069 = vrot.lane.b32.xlu0 %v3064, 99
        %v3070 = vpop.permute.xlu0 %3069
        %v3071 = vsel %vm1273, %v3066, %v3068
        %v3072 = vsel %vm1273, %v3068, %v3070
        %3076 = vst [vmem:[#allocation6 + $0x1b0] sm:$0x3e] %v3071
        %3077 = vst [vmem:[#allocation6 + $0x1b8] sm:$0x3e] %v3072
        %3078 = vst.msk [vmem:[#allocation6 + $0x1c0] sm:$0x3e] %vm2495, %v3070
        %v3079 = vld [vmem:[%s3] sm:$0xff]
        %v3080 = vld [vmem:[%s3 + $0x8] sm:$0xff]
        %v3081 = vld [vmem:[%s3 + $0x10] sm:$0x3]
        %v3082 = vld [vmem:[%s3 + $0x18] sm:$0x3]
        %v3083 = vld [vmem:[#allocation6] sm:$0xff]
        %v3084 = vld [vmem:[#allocation6 + $0x8] sm:$0xff]
        %v3085 = vld [vmem:[#allocation6 + $0x10] sm:$0xff]
        %v3086 = vld [vmem:[#allocation6 + $0x18] sm:$0xff]
        %v3087 = vld [vmem:[#allocation6 + $0x20] sm:$0xff]
        %v3088 = vld [vmem:[#allocation6 + $0x28] sm:$0xff]
        %v3089 = vld [vmem:[#allocation6 + $0x30] sm:$0xff]
        %v3090 = vld [vmem:[#allocation6 + $0x38] sm:$0xff]
        %v3091 = vld [vmem:[#allocation6 + $0x40] sm:$0xff]
        %v3092 = vld [vmem:[#allocation6 + $0x48] sm:$0xff]
        %v3093 = vld [vmem:[#allocation6 + $0x50] sm:$0xff]
        %v3094 = vld [vmem:[#allocation6 + $0x58] sm:$0xff]
        %v3095 = vld [vmem:[#allocation6 + $0x60] sm:$0xff]
        %v3096 = vld [vmem:[#allocation6 + $0x68] sm:$0xff]
        %v3097 = vld [vmem:[#allocation6 + $0x70] sm:$0xff]
        %v3098 = vld [vmem:[#allocation6 + $0x78] sm:$0xff]
        %v3099 = vld [vmem:[#allocation6 + $0x80] sm:$0xff]
        %v3100 = vld [vmem:[#allocation6 + $0x88] sm:$0xff]
        %v3101 = vld [vmem:[#allocation6 + $0x90] sm:$0xff]
        %v3102 = vld [vmem:[#allocation6 + $0x98] sm:$0xff]
        %v3103 = vld [vmem:[#allocation6 + $0xa0] sm:$0xff]
        %v3104 = vld [vmem:[#allocation6 + $0xa8] sm:$0xff]
        %v3105 = vld [vmem:[#allocation6 + $0xb0] sm:$0xff]
        %v3106 = vld [vmem:[#allocation6 + $0xb8] sm:$0xff]
        %v3107 = vld [vmem:[#allocation6 + $0xc0] sm:$0xff]
        %v3108 = vld [vmem:[#allocation6 + $0xc8] sm:$0xff]
        %v3109 = vld [vmem:[#allocation6 + $0xd0] sm:$0xff]
        %v3110 = vld [vmem:[#allocation6 + $0xd8] sm:$0xff]
        %v3111 = vld [vmem:[#allocation6 + $0xe0] sm:$0xff]
        %v3112 = vld [vmem:[#allocation6 + $0xe8] sm:$0xff]
        %v3113 = vld [vmem:[#allocation6 + $0xf0] sm:$0xff]
        %v3114 = vld [vmem:[#allocation6 + $0xf8] sm:$0xff]
        %v3115 = vld [vmem:[#allocation6 + $0x100] sm:$0xff]
        %v3116 = vld [vmem:[#allocation6 + $0x108] sm:$0xff]
        %v3117 = vld [vmem:[#allocation6 + $0x110] sm:$0xff]
        %v3118 = vld [vmem:[#allocation6 + $0x118] sm:$0xff]
        %v3119 = vld [vmem:[#allocation6 + $0x120] sm:$0xff]
        %v3120 = vld [vmem:[#allocation6 + $0x128] sm:$0xff]
        %v3121 = vld [vmem:[#allocation6 + $0x130] sm:$0xff]
        %v3122 = vld [vmem:[#allocation6 + $0x138] sm:$0xff]
        %v3123 = vld [vmem:[#allocation6 + $0x140] sm:$0xff]
        %v3124 = vld [vmem:[#allocation6 + $0x148] sm:$0xff]
        %v3125 = vld [vmem:[#allocation6 + $0x150] sm:$0xff]
        %v3126 = vld [vmem:[#allocation6 + $0x158] sm:$0xff]
        %v3127 = vld [vmem:[#allocation6 + $0x160] sm:$0xff]
        %v3128 = vld [vmem:[#allocation6 + $0x168] sm:$0xff]
        %v3129 = vld [vmem:[#allocation6 + $0x170] sm:$0xff]
        %v3130 = vld [vmem:[#allocation6 + $0x178] sm:$0xff]
        %v3131 = vld [vmem:[#allocation6 + $0x180] sm:$0xff]
        %v3132 = vld [vmem:[#allocation6 + $0x188] sm:$0xff]
        %v3133 = vld [vmem:[#allocation6 + $0x190] sm:$0xff]
        %v3134 = vld [vmem:[#allocation6 + $0x198] sm:$0xff]
        %v3135 = vld [vmem:[#allocation6 + $0x1a0] sm:$0xff]
        %v3136 = vld [vmem:[#allocation6 + $0x1a8] sm:$0xff]
        %v3137 = vld [vmem:[#allocation6 + $0x1b0] sm:$0x3f]
        %v3138 = vld [vmem:[#allocation6 + $0x1b8] sm:$0x3f]
        %v3139 = vld [vmem:[#allocation6 + $0x1c0] sm:$0x3f]
        %v3140 = vld [vmem:[%s4] sm:$0xff]
        %v3141 = vld [vmem:[%s4 + $0x8] sm:$0x3]
        %3143 = vset.pattern.permute.xlu0 0
        %3144 = vperm.xlu0 %3143, %v3140
        %v3145 = vpop.permute.xlu0 %3144
        %3148 = vset.pattern.permute.xlu0 0
        %3149 = vperm.xlu0 %3148, %v3141
        %v3150 = vpop.permute.xlu0 %3149
        %vm3152 = vcmask 179200
        %v3154 = vsel %vm3152, %v3080, 0
        %v3157 = vsel %vm3152, %v3082, 0
        %vm3159 = vcmask 1045504
        %v3161 = vsel %vm3159, %v3137, 0
        %v3164 = vsel %vm3159, %v3138, 0
        %v3167 = vsel %vm3159, %v3139, 0
        %3169 = vmatprep.subr.mxu0 %v3084
        %3170 = vmatpush1.msra.mxu0 %v3083
        %3171 = vmatprep.subr.mxu0 %v3087
        %3172 = vmatpush1.msra.mxu0 %v3086
        %3173 = vmatprep.subr.mxu0 %v3090
        %3174 = vmatpush1.msra.mxu0 %v3089
        %3175 = vmatprep.subr.mxu0 %v3093
        %3176 = vmatpush1.msra.mxu0 %v3092
        %3177 = vmatprep.subr.mxu0 %v3096
        %3178 = vmatpush1.msra.mxu0 %v3095
        %3179 = vmatprep.subr.mxu0 %v3099
        %3180 = vmatpush1.msra.mxu0 %v3098
        %3181 = vmatprep.subr.mxu0 %v3102
        %3182 = vmatpush1.msra.mxu0 %v3101
        %3183 = vmatprep.subr.mxu0 %v3105
        %3184 = vmatpush1.msra.mxu0 %v3104
        %3185 = vmatprep.subr.mxu0 %v3108
        %3186 = vmatpush1.msra.mxu0 %v3107
        %3187 = vmatprep.subr.mxu0 %v3111
        %3188 = vmatpush1.msra.mxu0 %v3110
        %3189 = vmatprep.subr.mxu0 %v3114
        %3190 = vmatpush1.msra.mxu0 %v3113
        %3191 = vmatprep.subr.mxu0 %v3117
        %3192 = vmatpush1.msra.mxu0 %v3116
        %3193 = vmatprep.subr.mxu0 %v3120
        %3194 = vmatpush1.msra.mxu0 %v3119
        %3195 = vmatprep.subr.mxu0 %v3123
        %3196 = vmatpush1.msra.mxu0 %v3122
        %3197 = vmatprep.subr.mxu0 %v3126
        %3198 = vmatpush1.msra.mxu0 %v3125
        %3199 = vmatprep.subr.mxu0 %v3129
        %3200 = vmatpush1.msra.mxu0 %v3128
        %3201 = vmatprep.subr.mxu0 %v3132
        %3202 = vmatpush1.msra.mxu0 %v3131
        %3203 = vmatprep.subr.mxu0 %v3135
        %3204 = vmatpush1.msra.mxu0 %v3134
        %3205 = vmatprep.subr.mxu0 %v3164
        %3206 = vmatpush1.msra.mxu0 %v3161
        %3207 = vmatprep.subr.mxu0 0.0
        %3208 = vmatpush1.msra.mxu0 0.0
        %3209 = vmatprep.subr.mxu0 0.0
        %3210 = vmatpush1.msra.mxu0 0.0
        %3211 = vmatprep.subr.mxu0 0.0
        %3212 = vmatpush1.msra.mxu0 0.0
        %3213 = vmatprep.subr.mxu0 0.0
        %3214 = vmatpush1.msra.mxu0 0.0
        %3215 = vmatprep.subr.mxu0 0.0
        %3216 = vmatpush1.msra.mxu0 0.0
        %3217 = vmatprep.subr.mxu0 0.0
        %3218 = vmatpush1.msra.mxu0 0.0
        %3219 = vmatprep.subr.mxu0 0.0
        %3220 = vmatpush1.msra.mxu0 0.0
        %3221 = vmatprep.subr.mxu0 0.0
        %3222 = vmatpush1.msra.mxu0 0.0
        %3223 = vmatprep.subr.mxu0 0.0
        %3224 = vmatpush1.msra.mxu0 0.0
        %3225 = vmatprep.subr.mxu0 0.0
        %3226 = vmatpush1.msra.mxu0 0.0
        %3227 = vmatprep.subr.mxu0 0.0
        %3228 = vmatpush1.msra.mxu0 0.0
        %3229 = vmatprep.subr.mxu0 0.0
        %3230 = vmatpush1.msra.mxu0 0.0
        %3231 = vmatprep.subr.mxu0 0.0
        %3232 = vmatpush1.msra.mxu0 0.0
        %3233 = vmatprep.mubr.f32.mxu0 %v3154
        %3234 = vmatmul.mubr.f32.gmra.mrb[0].mxu0 %v3079
        %v3235 = vpop.f32.mrb[0].mxu0
        %v3236 = vadd.f32 %v3145, %v3235
        %v3237 = vpop.f32.mrb[0].mxu0
        %v3238 = vadd.f32 %v3145, %v3237
        %3239 = vmatprep.mubr.f32.mxu0 %v3157
        %3240 = vmatmul.mubr.f32.gmra.mrb[0].mxu0 %v3081
        %v3241 = vpop.f32.mrb[0].mxu0
        %v3242 = vadd.f32 %v3150, %v3241
        %v3243 = vpop.f32.mrb[0].mxu0
        %v3244 = vadd.f32 %v3150, %v3243
        %3245 = vdwg.mxu0
        %3246 = vmatprep.subr.mxu0 0.0
        %3247 = vmatpush1.msra.mxu0 %v3085
        %3248 = vmatprep.subr.mxu0 0.0
        %3249 = vmatpush1.msra.mxu0 %v3088
        %3250 = vmatprep.subr.mxu0 0.0
        %3251 = vmatpush1.msra.mxu0 %v3091
        %3252 = vmatprep.subr.mxu0 0.0
        %3253 = vmatpush1.msra.mxu0 %v3094
        %3254 = vmatprep.subr.mxu0 0.0
        %3255 = vmatpush1.msra.mxu0 %v3097
        %3256 = vmatprep.subr.mxu0 0.0
        %3257 = vmatpush1.msra.mxu0 %v3100
        %3258 = vmatprep.subr.mxu0 0.0
        %3259 = vmatpush1.msra.mxu0 %v3103
        %3260 = vmatprep.subr.mxu0 0.0
        %3261 = vmatpush1.msra.mxu0 %v3106
        %3262 = vmatprep.subr.mxu0 0.0
        %3263 = vmatpush1.msra.mxu0 %v3109
        %3264 = vmatprep.subr.mxu0 0.0
        %3265 = vmatpush1.msra.mxu0 %v3112
        %3266 = vmatprep.subr.mxu0 0.0
        %3267 = vmatpush1.msra.mxu0 %v3115
        %3268 = vmatprep.subr.mxu0 0.0
        %3269 = vmatpush1.msra.mxu0 %v3118
        %3270 = vmatprep.subr.mxu0 0.0
        %3271 = vmatpush1.msra.mxu0 %v3121
        %3272 = vmatprep.subr.mxu0 0.0
        %3273 = vmatpush1.msra.mxu0 %v3124
        %3274 = vmatprep.subr.mxu0 0.0
        %3275 = vmatpush1.msra.mxu0 %v3127
        %3276 = vmatprep.subr.mxu0 0.0
        %3277 = vmatpush1.msra.mxu0 %v3130
        %3278 = vmatprep.subr.mxu0 0.0
        %3279 = vmatpush1.msra.mxu0 %v3133
        %3280 = vmatprep.subr.mxu0 0.0
        %3281 = vmatpush1.msra.mxu0 %v3136
        %3282 = vmatprep.subr.mxu0 0.0
        %3283 = vmatpush1.msra.mxu0 %v3167
        %3284 = vmatprep.subr.mxu0 0.0
        %3285 = vmatpush1.msra.mxu0 0.0
        %3286 = vmatprep.subr.mxu0 0.0
        %3287 = vmatpush1.msra.mxu0 0.0
        %3288 = vmatprep.subr.mxu0 0.0
        %3289 = vmatpush1.msra.mxu0 0.0
        %3290 = vmatprep.subr.mxu0 0.0
        %3291 = vmatpush1.msra.mxu0 0.0
        %3292 = vmatprep.subr.mxu0 0.0
        %3293 = vmatpush1.msra.mxu0 0.0
        %3294 = vmatprep.subr.mxu0 0.0
        %3295 = vmatpush1.msra.mxu0 0.0
        %3296 = vmatprep.subr.mxu0 0.0
        %3297 = vmatpush1.msra.mxu0 0.0
        %3298 = vmatprep.subr.mxu0 0.0
        %3299 = vmatpush1.msra.mxu0 0.0
        %3300 = vmatprep.subr.mxu0 0.0
        %3301 = vmatpush1.msra.mxu0 0.0
        %3302 = vmatprep.subr.mxu0 0.0
        %3303 = vmatpush1.msra.mxu0 0.0
        %3304 = vmatprep.subr.mxu0 0.0
        %3305 = vmatpush1.msra.mxu0 0.0
        %3306 = vmatprep.subr.mxu0 0.0
        %3307 = vmatpush1.msra.mxu0 0.0
        %3308 = vmatprep.subr.mxu0 0.0
        %3309 = vmatpush1.msra.mxu0 0.0
        %3310 = vmatprep.mubr.f32.mxu0 %v3154
        %3311 = vmatmul.mubr.f32.gmra.mrb[0].mxu0 %v3079
        %v3312 = vpop.f32.mrb[0].mxu0
        %v3313 = vadd.f32 %v3145, %v3312
        %v3314 = vpop.f32.mrb[0].mxu0
        %3315 = vmatprep.mubr.f32.mxu0 %v3157
        %3316 = vmatmul.mubr.f32.gmra.mrb[0].mxu0 %v3081
        %v3317 = vpop.f32.mrb[0].mxu0
        %v3318 = vadd.f32 %v3150, %v3317
        %v3319 = vpop.f32.mrb[0].mxu0
        %3320 = vdwg.mxu0
        %v3321 = vlaneseq
        %v3322 = vshrl.u32 %v3321, 7
        %v3323 = vadd.s32 %v3322, 8
        %v3324 = vadd.s32 %v3322, 16
        %v3325 = vadd.s32 %v3322, 24
        %v3326 = vadd.s32 %v3322, 32
        %v3327 = vadd.s32 %v3322, 40
        %v3328 = vadd.s32 %v3322, 48
        %v3329 = vadd.s32 %v3322, 56
        %v3330 = vadd.s32 %v3322, 64
        %v3331 = vadd.s32 %v3322, 72
        %v3332 = vadd.s32 %v3322, 80
        %v3333 = vadd.s32 %v3322, 88
        %v3334 = vadd.s32 %v3322, 96
        %v3335 = vadd.s32 %v3322, 104
        %v3336 = vadd.s32 %v3322, 112
        %v3337 = vadd.s32 %v3322, 120
        %v3338 = vadd.s32 %v3322, 128
        %v3339 = vadd.s32 %v3322, 136
        %v3340 = vadd.s32 %v3322, 144
        %v3341 = vadd.s32 %v3322, 152
        %v3342 = vadd.s32 %v3322, 160
        %v3343 = vadd.s32 %v3322, 168
        %v3344 = vadd.s32 %v3322, 176
        %v3345 = vadd.s32 %v3322, 184
        %v3346 = vadd.s32 %v3322, 192
        %v3347 = vadd.s32 %v3322, 200
        %v3348 = vadd.s32 %v3322, 208
        %v3349 = vadd.s32 %v3322, 216
        %v3350 = vadd.s32 %v3322, 224
        %v3351 = vadd.s32 %v3322, 232
        %v3352 = vadd.s32 %v3322, 240
        %v3353 = vadd.s32 %v3322, 248
        %v3354 = vadd.s32 %v3322, 256
        %v3355 = vadd.s32 %v3322, 264
        %v3356 = vadd.s32 %v3322, 272
        %v3357 = vadd.s32 %v3322, 280
        %v3358 = vlaneseq
        %v3359 = vand.u32 %v3358, 127
        %v3360 = vmul.u32 %v3359, 4
        %vm3361 = vcmp.eq.s32.totalorder %v3322, %v3360
        %vm3362 = vcmp.eq.s32.totalorder %v3323, %v3360
        %vm3363 = vcmp.eq.s32.totalorder %v3324, %v3360
        %vm3364 = vcmp.eq.s32.totalorder %v3325, %v3360
        %vm3365 = vcmp.eq.s32.totalorder %v3326, %v3360
        %vm3366 = vcmp.eq.s32.totalorder %v3327, %v3360
        %vm3367 = vcmp.eq.s32.totalorder %v3328, %v3360
        %vm3368 = vcmp.eq.s32.totalorder %v3329, %v3360
        %vm3369 = vcmp.eq.s32.totalorder %v3330, %v3360
        %vm3370 = vcmp.eq.s32.totalorder %v3331, %v3360
        %vm3371 = vcmp.eq.s32.totalorder %v3332, %v3360
        %vm3372 = vcmp.eq.s32.totalorder %v3333, %v3360
        %vm3373 = vcmp.eq.s32.totalorder %v3334, %v3360
        %vm3374 = vcmp.eq.s32.totalorder %v3335, %v3360
        %vm3375 = vcmp.eq.s32.totalorder %v3336, %v3360
        %vm3376 = vcmp.eq.s32.totalorder %v3337, %v3360
        %vm3377 = vcmp.eq.s32.totalorder %v3338, %v3360
        %vm3378 = vcmp.eq.s32.totalorder %v3339, %v3360
        %vm3379 = vcmp.eq.s32.totalorder %v3340, %v3360
        %vm3380 = vcmp.eq.s32.totalorder %v3341, %v3360
        %vm3381 = vcmp.eq.s32.totalorder %v3342, %v3360
        %vm3382 = vcmp.eq.s32.totalorder %v3343, %v3360
        %vm3383 = vcmp.eq.s32.totalorder %v3344, %v3360
        %vm3384 = vcmp.eq.s32.totalorder %v3345, %v3360
        %vm3385 = vcmp.eq.s32.totalorder %v3346, %v3360
        %vm3386 = vcmp.eq.s32.totalorder %v3347, %v3360
        %vm3387 = vcmp.eq.s32.totalorder %v3348, %v3360
        %vm3388 = vcmp.eq.s32.totalorder %v3349, %v3360
        %vm3389 = vcmp.eq.s32.totalorder %v3350, %v3360
        %vm3390 = vcmp.eq.s32.totalorder %v3351, %v3360
        %vm3391 = vcmp.eq.s32.totalorder %v3352, %v3360
        %vm3392 = vcmp.eq.s32.totalorder %v3353, %v3360
        %vm3393 = vcmp.eq.s32.totalorder %v3354, %v3360
        %vm3394 = vcmp.eq.s32.totalorder %v3355, %v3360
        %vm3395 = vcmp.eq.s32.totalorder %v3356, %v3360
        %vm3396 = vcmp.eq.s32.totalorder %v3357, %v3360
        %v3397 = vsel %vm3361, 1, 0
        %v3398 = vsel %vm3362, 1, 0
        %v3399 = vsel %vm3363, 1, 0
        %v3400 = vsel %vm3364, 1, 0
        %v3401 = vsel %vm3365, 1, 0
        %v3402 = vsel %vm3366, 1, 0
        %v3403 = vsel %vm3367, 1, 0
        %v3404 = vsel %vm3368, 1, 0
        %v3405 = vsel %vm3369, 1, 0
        %v3406 = vsel %vm3370, 1, 0
        %v3407 = vsel %vm3371, 1, 0
        %v3408 = vsel %vm3372, 1, 0
        %v3409 = vsel %vm3373, 1, 0
        %v3410 = vsel %vm3374, 1, 0
        %v3411 = vsel %vm3375, 1, 0
        %v3412 = vsel %vm3376, 1, 0
        %v3413 = vsel %vm3377, 1, 0
        %v3414 = vsel %vm3378, 1, 0
        %v3415 = vsel %vm3379, 1, 0
        %v3416 = vsel %vm3380, 1, 0
        %v3417 = vsel %vm3381, 1, 0
        %v3418 = vsel %vm3382, 1, 0
        %v3419 = vsel %vm3383, 1, 0
        %v3420 = vsel %vm3384, 1, 0
        %v3421 = vsel %vm3385, 1, 0
        %v3422 = vsel %vm3386, 1, 0
        %v3423 = vsel %vm3387, 1, 0
        %v3424 = vsel %vm3388, 1, 0
        %v3425 = vsel %vm3389, 1, 0
        %v3426 = vsel %vm3390, 1, 0
        %v3427 = vsel %vm3391, 1, 0
        %v3428 = vsel %vm3392, 1, 0
        %v3429 = vsel %vm3393, 1, 0
        %v3430 = vsel %vm3394, 1, 0
        %v3431 = vsel %vm3395, 1, 0
        %v3432 = vsel %vm3396, 1, 0
        %v3433 = vcvt.s32.f32 %v3397
        %v3434 = vcvt.s32.f32 %v3398
        %v3435 = vcvt.s32.f32 %v3399
        %v3436 = vcvt.s32.f32 %v3400
        %v3437 = vcvt.s32.f32 %v3401
        %v3438 = vcvt.s32.f32 %v3402
        %v3439 = vcvt.s32.f32 %v3403
        %v3440 = vcvt.s32.f32 %v3404
        %v3441 = vcvt.s32.f32 %v3405
        %v3442 = vcvt.s32.f32 %v3406
        %v3443 = vcvt.s32.f32 %v3407
        %v3444 = vcvt.s32.f32 %v3408
        %v3445 = vcvt.s32.f32 %v3409
        %v3446 = vcvt.s32.f32 %v3410
        %v3447 = vcvt.s32.f32 %v3411
        %v3448 = vcvt.s32.f32 %v3412
        %v3449 = vcvt.s32.f32 %v3413
        %v3450 = vcvt.s32.f32 %v3414
        %v3451 = vcvt.s32.f32 %v3415
        %v3452 = vcvt.s32.f32 %v3416
        %v3453 = vcvt.s32.f32 %v3417
        %v3454 = vcvt.s32.f32 %v3418
        %v3455 = vcvt.s32.f32 %v3419
        %v3456 = vcvt.s32.f32 %v3420
        %v3457 = vcvt.s32.f32 %v3421
        %v3458 = vcvt.s32.f32 %v3422
        %v3459 = vcvt.s32.f32 %v3423
        %v3460 = vcvt.s32.f32 %v3424
        %v3461 = vcvt.s32.f32 %v3425
        %v3462 = vcvt.s32.f32 %v3426
        %v3463 = vcvt.s32.f32 %v3427
        %v3464 = vcvt.s32.f32 %v3428
        %v3465 = vcvt.s32.f32 %v3429
        %v3466 = vcvt.s32.f32 %v3430
        %v3467 = vcvt.s32.f32 %v3431
        %v3468 = vcvt.s32.f32 %v3432
        %vm3469 = vcmask 211968
        %v3471 = vsel %vm3469, %v3313, 0
        %v3474 = vsel %vm3469, %v3318, 0
        %v3477 = vsel %vm384, %v3468, 0
        %3479 = vmatprep.subr.mxu0 0.0
        %3480 = vmatpush1.msra.mxu0 %v3433
        %3481 = vmatprep.subr.mxu0 0.0
        %3482 = vmatpush1.msra.mxu0 %v3434
        %3483 = vmatprep.subr.mxu0 0.0
        %3484 = vmatpush1.msra.mxu0 %v3435
        %3485 = vmatprep.subr.mxu0 0.0
        %3486 = vmatpush1.msra.mxu0 %v3436
        %3487 = vmatprep.subr.mxu0 0.0
        %3488 = vmatpush1.msra.mxu0 %v3437
        %3489 = vmatprep.subr.mxu0 0.0
        %3490 = vmatpush1.msra.mxu0 %v3438
        %3491 = vmatprep.subr.mxu0 0.0
        %3492 = vmatpush1.msra.mxu0 %v3439
        %3493 = vmatprep.subr.mxu0 0.0
        %3494 = vmatpush1.msra.mxu0 %v3440
        %3495 = vmatprep.subr.mxu0 0.0
        %3496 = vmatpush1.msra.mxu0 %v3441
        %3497 = vmatprep.subr.mxu0 0.0
        %3498 = vmatpush1.msra.mxu0 %v3442
        %3499 = vmatprep.subr.mxu0 0.0
        %3500 = vmatpush1.msra.mxu0 %v3443
        %3501 = vmatprep.subr.mxu0 0.0
        %3502 = vmatpush1.msra.mxu0 %v3444
        %3503 = vmatprep.subr.mxu0 0.0
        %3504 = vmatpush1.msra.mxu0 %v3445
        %3505 = vmatprep.subr.mxu0 0.0
        %3506 = vmatpush1.msra.mxu0 %v3446
        %3507 = vmatprep.subr.mxu0 0.0
        %3508 = vmatpush1.msra.mxu0 %v3447
        %3509 = vmatprep.subr.mxu0 0.0
        %3510 = vmatpush1.msra.mxu0 %v3448
        %3511 = vmatprep.subr.mxu0 0.0
        %3512 = vmatpush1.msra.mxu0 %v3449
        %3513 = vmatprep.subr.mxu0 0.0
        %3514 = vmatpush1.msra.mxu0 %v3450
        %3515 = vmatprep.subr.mxu0 0.0
        %3516 = vmatpush1.msra.mxu0 %v3451
        %3517 = vmatprep.subr.mxu0 0.0
        %3518 = vmatpush1.msra.mxu0 %v3452
        %3519 = vmatprep.subr.mxu0 0.0
        %3520 = vmatpush1.msra.mxu0 %v3453
        %3521 = vmatprep.subr.mxu0 0.0
        %3522 = vmatpush1.msra.mxu0 %v3454
        %3523 = vmatprep.subr.mxu0 0.0
        %3524 = vmatpush1.msra.mxu0 %v3455
        %3525 = vmatprep.subr.mxu0 0.0
        %3526 = vmatpush1.msra.mxu0 %v3456
        %3527 = vmatprep.subr.mxu0 0.0
        %3528 = vmatpush1.msra.mxu0 %v3457
        %3529 = vmatprep.subr.mxu0 0.0
        %3530 = vmatpush1.msra.mxu0 %v3458
        %3531 = vmatprep.subr.mxu0 0.0
        %3532 = vmatpush1.msra.mxu0 %v3459
        %3533 = vmatprep.subr.mxu0 0.0
        %3534 = vmatpush1.msra.mxu0 %v3460
        %3535 = vmatprep.subr.mxu0 0.0
        %3536 = vmatpush1.msra.mxu0 %v3461
        %3537 = vmatprep.subr.mxu0 0.0
        %3538 = vmatpush1.msra.mxu0 %v3462
        %3539 = vmatprep.subr.mxu0 0.0
        %3540 = vmatpush1.msra.mxu0 %v3463
        %3541 = vmatprep.subr.mxu0 0.0
        %3542 = vmatpush1.msra.mxu0 %v3464
        %3543 = vmatprep.mubr.f32.mxu0 %v3238
        %3544 = vmatmul.mubr.f32.gmra.mrb[0].mxu0 %v3236
        %v3545 = vpop.f32.mrb[0].mxu0
        %v3546 = vadd.f32 0.0, %v3545
        %v3547 = vpop.f32.mrb[0].mxu0
        %3548 = vmatprep.mubr.f32.mxu0 %v3244
        %3549 = vmatmul.mubr.f32.gmra.mrb[0].mxu0 %v3242
        %v3550 = vpop.f32.mrb[0].mxu0
        %v3551 = vadd.f32 0.0, %v3550
        %v3552 = vpop.f32.mrb[0].mxu0
        %3553 = vdwg.mxu0
        %3554 = vmatprep.subr.mxu0 0.0
        %3555 = vmatpush1.msra.mxu0 %v3465
        %3556 = vmatprep.subr.mxu0 0.0
        %3557 = vmatpush1.msra.mxu0 %v3466
        %3558 = vmatprep.subr.mxu0 0.0
        %3559 = vmatpush1.msra.mxu0 %v3467
        %3560 = vmatprep.subr.mxu0 0.0
        %3561 = vmatpush1.msra.mxu0 %v3477
        %3562 = vmatprep.subr.mxu0 0.0
        %3563 = vmatpush1.msra.mxu0 0.0
        %3564 = vmatprep.subr.mxu0 0.0
        %3565 = vmatpush1.msra.mxu0 0.0
        %3566 = vmatprep.subr.mxu0 0.0
        %3567 = vmatpush1.msra.mxu0 0.0
        %3568 = vmatprep.subr.mxu0 0.0
        %3569 = vmatpush1.msra.mxu0 0.0
        %3570 = vmatprep.subr.mxu0 0.0
        %3571 = vmatpush1.msra.mxu0 0.0
        %3572 = vmatprep.subr.mxu0 0.0
        %3573 = vmatpush1.msra.mxu0 0.0
        %3574 = vmatprep.subr.mxu0 0.0
        %3575 = vmatpush1.msra.mxu0 0.0
        %3576 = vmatprep.subr.mxu0 0.0
        %3577 = vmatpush1.msra.mxu0 0.0
        %3578 = vmatprep.subr.mxu0 0.0
        %3579 = vmatpush1.msra.mxu0 0.0
        %3580 = vmatprep.subr.mxu0 0.0
        %3581 = vmatpush1.msra.mxu0 0.0
        %3582 = vmatprep.subr.mxu0 0.0
        %3583 = vmatpush1.msra.mxu0 0.0
        %3584 = vmatprep.subr.mxu0 0.0
        %3585 = vmatpush1.msra.mxu0 0.0
        %3586 = vmatprep.subr.mxu0 0.0
        %3587 = vmatpush1.msra.mxu0 0.0
        %3588 = vmatprep.subr.mxu0 0.0
        %3589 = vmatpush1.msra.mxu0 0.0
        %3590 = vmatprep.subr.mxu0 0.0
        %3591 = vmatpush1.msra.mxu0 0.0
        %3592 = vmatprep.subr.mxu0 0.0
        %3593 = vmatpush1.msra.mxu0 0.0
        %3594 = vmatprep.subr.mxu0 0.0
        %3595 = vmatpush1.msra.mxu0 0.0
        %3596 = vmatprep.subr.mxu0 0.0
        %3597 = vmatpush1.msra.mxu0 0.0
        %3598 = vmatprep.subr.mxu0 0.0
        %3599 = vmatpush1.msra.mxu0 0.0
        %3600 = vmatprep.subr.mxu0 0.0
        %3601 = vmatpush1.msra.mxu0 0.0
        %3602 = vmatprep.subr.mxu0 0.0
        %3603 = vmatpush1.msra.mxu0 0.0
        %3604 = vmatprep.subr.mxu0 0.0
        %3605 = vmatpush1.msra.mxu0 0.0
        %3606 = vmatprep.subr.mxu0 0.0
        %3607 = vmatpush1.msra.mxu0 0.0
        %3608 = vmatprep.subr.mxu0 0.0
        %3609 = vmatpush1.msra.mxu0 0.0
        %3610 = vmatprep.subr.mxu0 0.0
        %3611 = vmatpush1.msra.mxu0 0.0
        %3612 = vmatprep.subr.mxu0 0.0
        %3613 = vmatpush1.msra.mxu0 0.0
        %3614 = vmatprep.subr.mxu0 0.0
        %3615 = vmatpush1.msra.mxu0 0.0
        %3616 = vmatprep.subr.mxu0 0.0
        %3617 = vmatpush1.msra.mxu0 0.0
        %3618 = vmatprep.mubr.f32.mxu0 0.0
        %3619 = vmatmul.mubr.f32.gmra.mrb[0].mxu0 %v3471
        %v3620 = vpop.f32.mrb[0].mxu0
        %v3621 = vadd.f32 %v3546, %v3620
        %v3622 = vpop.f32.mrb[0].mxu0
        %3623 = vmatprep.mubr.f32.mxu0 0.0
        %3624 = vmatmul.mubr.f32.gmra.mrb[0].mxu0 %v3474
        %v3625 = vpop.f32.mrb[0].mxu0
        %v3626 = vadd.f32 %v3551, %v3625
        %v3627 = vpop.f32.mrb[0].mxu0
        %3628 = vdwg.mxu0
        %v3629 = vadd.s32 %v3360, 2
        %vm3630 = vcmp.eq.s32.totalorder %v3322, %v3629
        %vm3631 = vcmp.eq.s32.totalorder %v3323, %v3629
        %vm3632 = vcmp.eq.s32.totalorder %v3324, %v3629
        %vm3633 = vcmp.eq.s32.totalorder %v3325, %v3629
        %vm3634 = vcmp.eq.s32.totalorder %v3326, %v3629
        %vm3635 = vcmp.eq.s32.totalorder %v3327, %v3629
        %vm3636 = vcmp.eq.s32.totalorder %v3328, %v3629
        %vm3637 = vcmp.eq.s32.totalorder %v3329, %v3629
        %vm3638 = vcmp.eq.s32.totalorder %v3330, %v3629
        %vm3639 = vcmp.eq.s32.totalorder %v3331, %v3629
        %vm3640 = vcmp.eq.s32.totalorder %v3332, %v3629
        %vm3641 = vcmp.eq.s32.totalorder %v3333, %v3629
        %vm3642 = vcmp.eq.s32.totalorder %v3334, %v3629
        %vm3643 = vcmp.eq.s32.totalorder %v3335, %v3629
        %vm3644 = vcmp.eq.s32.totalorder %v3336, %v3629
        %vm3645 = vcmp.eq.s32.totalorder %v3337, %v3629
        %vm3646 = vcmp.eq.s32.totalorder %v3338, %v3629
        %vm3647 = vcmp.eq.s32.totalorder %v3339, %v3629
        %vm3648 = vcmp.eq.s32.totalorder %v3340, %v3629
        %vm3649 = vcmp.eq.s32.totalorder %v3341, %v3629
        %vm3650 = vcmp.eq.s32.totalorder %v3342, %v3629
        %vm3651 = vcmp.eq.s32.totalorder %v3343, %v3629
        %vm3652 = vcmp.eq.s32.totalorder %v3344, %v3629
        %vm3653 = vcmp.eq.s32.totalorder %v3345, %v3629
        %vm3654 = vcmp.eq.s32.totalorder %v3346, %v3629
        %vm3655 = vcmp.eq.s32.totalorder %v3347, %v3629
        %vm3656 = vcmp.eq.s32.totalorder %v3348, %v3629
        %vm3657 = vcmp.eq.s32.totalorder %v3349, %v3629
        %vm3658 = vcmp.eq.s32.totalorder %v3350, %v3629
        %vm3659 = vcmp.eq.s32.totalorder %v3351, %v3629
        %vm3660 = vcmp.eq.s32.totalorder %v3352, %v3629
        %vm3661 = vcmp.eq.s32.totalorder %v3353, %v3629
        %vm3662 = vcmp.eq.s32.totalorder %v3354, %v3629
        %vm3663 = vcmp.eq.s32.totalorder %v3355, %v3629
        %vm3664 = vcmp.eq.s32.totalorder %v3356, %v3629
        %vm3665 = vcmp.eq.s32.totalorder %v3357, %v3629
        %v3666 = vsel %vm3630, 1, 0
        %v3667 = vsel %vm3631, 1, 0
        %v3668 = vsel %vm3632, 1, 0
        %v3669 = vsel %vm3633, 1, 0
        %v3670 = vsel %vm3634, 1, 0
        %v3671 = vsel %vm3635, 1, 0
        %v3672 = vsel %vm3636, 1, 0
        %v3673 = vsel %vm3637, 1, 0
        %v3674 = vsel %vm3638, 1, 0
        %v3675 = vsel %vm3639, 1, 0
        %v3676 = vsel %vm3640, 1, 0
        %v3677 = vsel %vm3641, 1, 0
        %v3678 = vsel %vm3642, 1, 0
        %v3679 = vsel %vm3643, 1, 0
        %v3680 = vsel %vm3644, 1, 0
        %v3681 = vsel %vm3645, 1, 0
        %v3682 = vsel %vm3646, 1, 0
        %v3683 = vsel %vm3647, 1, 0
        %v3684 = vsel %vm3648, 1, 0
        %v3685 = vsel %vm3649, 1, 0
        %v3686 = vsel %vm3650, 1, 0
        %v3687 = vsel %vm3651, 1, 0
        %v3688 = vsel %vm3652, 1, 0
        %v3689 = vsel %vm3653, 1, 0
        %v3690 = vsel %vm3654, 1, 0
        %v3691 = vsel %vm3655, 1, 0
        %v3692 = vsel %vm3656, 1, 0
        %v3693 = vsel %vm3657, 1, 0
        %v3694 = vsel %vm3658, 1, 0
        %v3695 = vsel %vm3659, 1, 0
        %v3696 = vsel %vm3660, 1, 0
        %v3697 = vsel %vm3661, 1, 0
        %v3698 = vsel %vm3662, 1, 0
        %v3699 = vsel %vm3663, 1, 0
        %v3700 = vsel %vm3664, 1, 0
        %v3701 = vsel %vm3665, 1, 0
        %v3702 = vcvt.s32.f32 %v3666
        %v3703 = vcvt.s32.f32 %v3667
        %v3704 = vcvt.s32.f32 %v3668
        %v3705 = vcvt.s32.f32 %v3669
        %v3706 = vcvt.s32.f32 %v3670
        %v3707 = vcvt.s32.f32 %v3671
        %v3708 = vcvt.s32.f32 %v3672
        %v3709 = vcvt.s32.f32 %v3673
        %v3710 = vcvt.s32.f32 %v3674
        %v3711 = vcvt.s32.f32 %v3675
        %v3712 = vcvt.s32.f32 %v3676
        %v3713 = vcvt.s32.f32 %v3677
        %v3714 = vcvt.s32.f32 %v3678
        %v3715 = vcvt.s32.f32 %v3679
        %v3716 = vcvt.s32.f32 %v3680
        %v3717 = vcvt.s32.f32 %v3681
        %v3718 = vcvt.s32.f32 %v3682
        %v3719 = vcvt.s32.f32 %v3683
        %v3720 = vcvt.s32.f32 %v3684
        %v3721 = vcvt.s32.f32 %v3685
        %v3722 = vcvt.s32.f32 %v3686
        %v3723 = vcvt.s32.f32 %v3687
        %v3724 = vcvt.s32.f32 %v3688
        %v3725 = vcvt.s32.f32 %v3689
        %v3726 = vcvt.s32.f32 %v3690
        %v3727 = vcvt.s32.f32 %v3691
        %v3728 = vcvt.s32.f32 %v3692
        %v3729 = vcvt.s32.f32 %v3693
        %v3730 = vcvt.s32.f32 %v3694
        %v3731 = vcvt.s32.f32 %v3695
        %v3732 = vcvt.s32.f32 %v3696
        %v3733 = vcvt.s32.f32 %v3697
        %v3734 = vcvt.s32.f32 %v3698
        %v3735 = vcvt.s32.f32 %v3699
        %v3736 = vcvt.s32.f32 %v3700
        %v3737 = vcvt.s32.f32 %v3701
        %v3739 = vsel %vm384, %v3737, 0
        %3741 = vmatprep.subr.mxu0 0.0
        %3742 = vmatpush1.msra.mxu0 %v3702
        %3743 = vmatprep.subr.mxu0 0.0
        %3744 = vmatpush1.msra.mxu0 %v3703
        %3745 = vmatprep.subr.mxu0 0.0
        %3746 = vmatpush1.msra.mxu0 %v3704
        %3747 = vmatprep.subr.mxu0 0.0
        %3748 = vmatpush1.msra.mxu0 %v3705
        %3749 = vmatprep.subr.mxu0 0.0
        %3750 = vmatpush1.msra.mxu0 %v3706
        %3751 = vmatprep.subr.mxu0 0.0
        %3752 = vmatpush1.msra.mxu0 %v3707
        %3753 = vmatprep.subr.mxu0 0.0
        %3754 = vmatpush1.msra.mxu0 %v3708
        %3755 = vmatprep.subr.mxu0 0.0
        %3756 = vmatpush1.msra.mxu0 %v3709
        %3757 = vmatprep.subr.mxu0 0.0
        %3758 = vmatpush1.msra.mxu0 %v3710
        %3759 = vmatprep.subr.mxu0 0.0
        %3760 = vmatpush1.msra.mxu0 %v3711
        %3761 = vmatprep.subr.mxu0 0.0
        %3762 = vmatpush1.msra.mxu0 %v3712
        %3763 = vmatprep.subr.mxu0 0.0
        %3764 = vmatpush1.msra.mxu0 %v3713
        %3765 = vmatprep.subr.mxu0 0.0
        %3766 = vmatpush1.msra.mxu0 %v3714
        %3767 = vmatprep.subr.mxu0 0.0
        %3768 = vmatpush1.msra.mxu0 %v3715
        %3769 = vmatprep.subr.mxu0 0.0
        %3770 = vmatpush1.msra.mxu0 %v3716
        %3771 = vmatprep.subr.mxu0 0.0
        %3772 = vmatpush1.msra.mxu0 %v3717
        %3773 = vmatprep.subr.mxu0 0.0
        %3774 = vmatpush1.msra.mxu0 %v3718
        %3775 = vmatprep.subr.mxu0 0.0
        %3776 = vmatpush1.msra.mxu0 %v3719
        %3777 = vmatprep.subr.mxu0 0.0
        %3778 = vmatpush1.msra.mxu0 %v3720
        %3779 = vmatprep.subr.mxu0 0.0
        %3780 = vmatpush1.msra.mxu0 %v3721
        %3781 = vmatprep.subr.mxu0 0.0
        %3782 = vmatpush1.msra.mxu0 %v3722
        %3783 = vmatprep.subr.mxu0 0.0
        %3784 = vmatpush1.msra.mxu0 %v3723
        %3785 = vmatprep.subr.mxu0 0.0
        %3786 = vmatpush1.msra.mxu0 %v3724
        %3787 = vmatprep.subr.mxu0 0.0
        %3788 = vmatpush1.msra.mxu0 %v3725
        %3789 = vmatprep.subr.mxu0 0.0
        %3790 = vmatpush1.msra.mxu0 %v3726
        %3791 = vmatprep.subr.mxu0 0.0
        %3792 = vmatpush1.msra.mxu0 %v3727
        %3793 = vmatprep.subr.mxu0 0.0
        %3794 = vmatpush1.msra.mxu0 %v3728
        %3795 = vmatprep.subr.mxu0 0.0
        %3796 = vmatpush1.msra.mxu0 %v3729
        %3797 = vmatprep.subr.mxu0 0.0
        %3798 = vmatpush1.msra.mxu0 %v3730
        %3799 = vmatprep.subr.mxu0 0.0
        %3800 = vmatpush1.msra.mxu0 %v3731
        %3801 = vmatprep.subr.mxu0 0.0
        %3802 = vmatpush1.msra.mxu0 %v3732
        %3803 = vmatprep.subr.mxu0 0.0
        %3804 = vmatpush1.msra.mxu0 %v3733
        %3805 = vmatprep.mubr.f32.mxu0 %v3238
        %3806 = vmatmul.mubr.f32.gmra.mrb[0].mxu0 %v3236
        %v3807 = vpop.f32.mrb[0].mxu0
        %v3808 = vadd.f32 0.0, %v3807
        %v3809 = vpop.f32.mrb[0].mxu0
        %3810 = vmatprep.mubr.f32.mxu0 %v3244
        %3811 = vmatmul.mubr.f32.gmra.mrb[0].mxu0 %v3242
        %v3812 = vpop.f32.mrb[0].mxu0
        %v3813 = vadd.f32 0.0, %v3812
        %v3814 = vpop.f32.mrb[0].mxu0
        %3815 = vdwg.mxu0
        %3816 = vmatprep.subr.mxu0 0.0
        %3817 = vmatpush1.msra.mxu0 %v3734
        %3818 = vmatprep.subr.mxu0 0.0
        %3819 = vmatpush1.msra.mxu0 %v3735
        %3820 = vmatprep.subr.mxu0 0.0
        %3821 = vmatpush1.msra.mxu0 %v3736
        %3822 = vmatprep.subr.mxu0 0.0
        %3823 = vmatpush1.msra.mxu0 %v3739
        %3824 = vmatprep.subr.mxu0 0.0
        %3825 = vmatpush1.msra.mxu0 0.0
        %3826 = vmatprep.subr.mxu0 0.0
        %3827 = vmatpush1.msra.mxu0 0.0
        %3828 = vmatprep.subr.mxu0 0.0
        %3829 = vmatpush1.msra.mxu0 0.0
        %3830 = vmatprep.subr.mxu0 0.0
        %3831 = vmatpush1.msra.mxu0 0.0
        %3832 = vmatprep.subr.mxu0 0.0
        %3833 = vmatpush1.msra.mxu0 0.0
        %3834 = vmatprep.subr.mxu0 0.0
        %3835 = vmatpush1.msra.mxu0 0.0
        %3836 = vmatprep.subr.mxu0 0.0
        %3837 = vmatpush1.msra.mxu0 0.0
        %3838 = vmatprep.subr.mxu0 0.0
        %3839 = vmatpush1.msra.mxu0 0.0
        %3840 = vmatprep.subr.mxu0 0.0
        %3841 = vmatpush1.msra.mxu0 0.0
        %3842 = vmatprep.subr.mxu0 0.0
        %3843 = vmatpush1.msra.mxu0 0.0
        %3844 = vmatprep.subr.mxu0 0.0
        %3845 = vmatpush1.msra.mxu0 0.0
        %3846 = vmatprep.subr.mxu0 0.0
        %3847 = vmatpush1.msra.mxu0 0.0
        %3848 = vmatprep.subr.mxu0 0.0
        %3849 = vmatpush1.msra.mxu0 0.0
        %3850 = vmatprep.subr.mxu0 0.0
        %3851 = vmatpush1.msra.mxu0 0.0
        %3852 = vmatprep.subr.mxu0 0.0
        %3853 = vmatpush1.msra.mxu0 0.0
        %3854 = vmatprep.subr.mxu0 0.0
        %3855 = vmatpush1.msra.mxu0 0.0
        %3856 = vmatprep.subr.mxu0 0.0
        %3857 = vmatpush1.msra.mxu0 0.0
        %3858 = vmatprep.subr.mxu0 0.0
        %3859 = vmatpush1.msra.mxu0 0.0
        %3860 = vmatprep.subr.mxu0 0.0
        %3861 = vmatpush1.msra.mxu0 0.0
        %3862 = vmatprep.subr.mxu0 0.0
        %3863 = vmatpush1.msra.mxu0 0.0
        %3864 = vmatprep.subr.mxu0 0.0
        %3865 = vmatpush1.msra.mxu0 0.0
        %3866 = vmatprep.subr.mxu0 0.0
        %3867 = vmatpush1.msra.mxu0 0.0
        %3868 = vmatprep.subr.mxu0 0.0
        %3869 = vmatpush1.msra.mxu0 0.0
        %3870 = vmatprep.subr.mxu0 0.0
        %3871 = vmatpush1.msra.mxu0 0.0
        %3872 = vmatprep.subr.mxu0 0.0
        %3873 = vmatpush1.msra.mxu0 0.0
        %3874 = vmatprep.subr.mxu0 0.0
        %3875 = vmatpush1.msra.mxu0 0.0
        %3876 = vmatprep.subr.mxu0 0.0
        %3877 = vmatpush1.msra.mxu0 0.0
        %3878 = vmatprep.subr.mxu0 0.0
        %3879 = vmatpush1.msra.mxu0 0.0
        %3880 = vmatprep.mubr.f32.mxu0 0.0
        %3881 = vmatmul.mubr.f32.gmra.mrb[0].mxu0 %v3471
        %v3882 = vpop.f32.mrb[0].mxu0
        %v3883 = vadd.f32 %v3808, %v3882
        %v3884 = vpop.f32.mrb[0].mxu0
        %3885 = vmatprep.mubr.f32.mxu0 0.0
        %3886 = vmatmul.mubr.f32.gmra.mrb[0].mxu0 %v3474
        %v3887 = vpop.f32.mrb[0].mxu0
        %v3888 = vadd.f32 %v3813, %v3887
        %v3889 = vpop.f32.mrb[0].mxu0
        %3890 = vdwg.mxu0
        %v3891 = vmax.f32 %v3621, %v3883
        %v3892 = vmax.f32 %v3626, %v3888
        %3893 = vst [vmem:[#allocation4] sm:$0xff] 0.0
        %vm3894 = vcmask 15360
        %3895 = vst.msk [vmem:[#allocation4 + $0x8] sm:$0xff] %vm3894, 0.0
        %3896 = vst [vmem:[#allocation4 + $0x10] sm:$0x3] 0.0
        %vm3897 = vcmask 9216
        %3898 = vst.msk [vmem:[#allocation4 + $0x18] sm:$0x3] %vm3897, 0.0
        %v3899 = vmax.f32 %v3891, 0.0
        %v3900 = vmax.f32 %v3892, 0.0
        %3903 = vrot.lane.b32.xlu0 %v3899, 30
        %v3904 = vpop.permute.xlu0 %3903
        %3905 = vrot.lane.b32.xlu0 %v3900, 30
        %v3906 = vpop.permute.xlu0 %3905
        %vm3909 = vcmask 818416
        %3910 = vst.msk [vmem:[#allocation4] sm:$0xff] %vm3909, %v3904
        %vm3911 = vcmask 812272
        %3912 = vst.msk [vmem:[#allocation4 + $0x10] sm:$0x3] %vm3911, %v3906
        %v3913 = vld [vmem:[#allocation4] sm:$0xff]
        %v3914 = vld [vmem:[#allocation4 + $0x10] sm:$0x3]
        %3915 = vst.msk [vmem:[#allocation7] sm:$0xff] %vm738, %v3913
        %vm3916 = vcmask 943104
        %3917 = vst.msk [vmem:[#allocation7 + $0x8] sm:$0x3] %vm3916, %v3914
        %v3918 = vld [vmem:[#allocation4] sm:$0xff]
        %v3919 = vld [vmem:[#allocation4 + $0x10] sm:$0x3]
        %3922 = vrot.lane.b32.xlu0 %v3918, 127
        %v3923 = vpop.permute.xlu0 %3922
        %3924 = vrot.lane.b32.xlu0 %v3919, 127
        %v3925 = vpop.permute.xlu0 %3924
        %3928 = vst.msk [vmem:[#allocation7 + $0xa] sm:$0xff] %vm738, %v3923
        %3929 = vst.msk [vmem:[#allocation7 + $0x12] sm:$0x3] %vm3916, %v3925
        %v3930 = vld [vmem:[#allocation4] sm:$0xff]
        %v3931 = vld [vmem:[#allocation4 + $0x10] sm:$0x3]
        %3934 = vrot.lane.b32.xlu0 %v3930, 126
        %v3935 = vpop.permute.xlu0 %3934
        %3936 = vrot.lane.b32.xlu0 %v3931, 126
        %v3937 = vpop.permute.xlu0 %3936
        %3940 = vst.msk [vmem:[#allocation7 + $0x14] sm:$0xff] %vm738, %v3935
        %3941 = vst.msk [vmem:[#allocation7 + $0x1c] sm:$0x3] %vm3916, %v3937
        %v3942 = vld [vmem:[#allocation4] sm:$0xff]
        %v3943 = vld [vmem:[#allocation4 + $0x10] sm:$0x3]
        %3946 = vrot.lane.b32.xlu0 %v3942, 125
        %v3947 = vpop.permute.xlu0 %3946
        %3948 = vrot.lane.b32.xlu0 %v3943, 125
        %v3949 = vpop.permute.xlu0 %3948
        %3952 = vst.msk [vmem:[#allocation7 + $0x1e] sm:$0xff] %vm738, %v3947
        %3953 = vst.msk [vmem:[#allocation7 + $0x26] sm:$0x3] %vm3916, %v3949
        %v3954 = vld [vmem:[#allocation4] sm:$0xff]
        %v3955 = vld [vmem:[#allocation4 + $0x10] sm:$0x3]
        %3958 = vrot.lane.b32.xlu0 %v3954, 124
        %v3959 = vpop.permute.xlu0 %3958
        %3960 = vrot.lane.b32.xlu0 %v3955, 124
        %v3961 = vpop.permute.xlu0 %3960
        %3964 = vst.msk [vmem:[#allocation7 + $0x28] sm:$0xff] %vm738, %v3959
        %3965 = vst.msk [vmem:[#allocation7 + $0x30] sm:$0x3] %vm3916, %v3961
        %v3966 = vld [vmem:[#allocation4] sm:$0xff]
        %v3967 = vld [vmem:[#allocation4 + $0x10] sm:$0x3]
        %3970 = vrot.lane.b32.xlu0 %v3966, 123
        %v3971 = vpop.permute.xlu0 %3970
        %3972 = vrot.lane.b32.xlu0 %v3967, 123
        %v3973 = vpop.permute.xlu0 %3972
        %3976 = vst.msk [vmem:[#allocation7 + $0x32] sm:$0xff] %vm738, %v3971
        %3977 = vst.msk [vmem:[#allocation7 + $0x3a] sm:$0x3] %vm3916, %v3973
        %v3978 = vld [vmem:[#allocation4] sm:$0xff]
        %v3979 = vld [vmem:[#allocation4 + $0x10] sm:$0x3]
        %3982 = vrot.lane.b32.xlu0 %v3978, 122
        %v3983 = vpop.permute.xlu0 %3982
        %3984 = vrot.lane.b32.xlu0 %v3979, 122
        %v3985 = vpop.permute.xlu0 %3984
        %3988 = vst.msk [vmem:[#allocation7 + $0x3c] sm:$0xff] %vm738, %v3983
        %3989 = vst.msk [vmem:[#allocation7 + $0x44] sm:$0x3] %vm3916, %v3985
        %v3990 = vld [vmem:[#allocation4] sm:$0xff]
        %v3991 = vld [vmem:[#allocation4 + $0x10] sm:$0x3]
        %3994 = vrot.lane.b32.xlu0 %v3990, 121
        %v3995 = vpop.permute.xlu0 %3994
        %3996 = vrot.lane.b32.xlu0 %v3991, 121
        %v3997 = vpop.permute.xlu0 %3996
        %4000 = vst.msk [vmem:[#allocation7 + $0x46] sm:$0xff] %vm738, %v3995
        %4001 = vst.msk [vmem:[#allocation7 + $0x4e] sm:$0x3] %vm3916, %v3997
        %v4002 = vld [vmem:[#allocation4] sm:$0xff]
        %v4003 = vld [vmem:[#allocation4 + $0x10] sm:$0x3]
        %4006 = vrot.lane.b32.xlu0 %v4002, 120
        %v4007 = vpop.permute.xlu0 %4006
        %4008 = vrot.lane.b32.xlu0 %v4003, 120
        %v4009 = vpop.permute.xlu0 %4008
        %4012 = vst.msk [vmem:[#allocation7 + $0x50] sm:$0xff] %vm738, %v4007
        %4013 = vst.msk [vmem:[#allocation7 + $0x58] sm:$0x3] %vm3916, %v4009
        %v4014 = vld [vmem:[#allocation4] sm:$0xff]
        %v4015 = vld [vmem:[#allocation4 + $0x10] sm:$0x3]
        %4018 = vrot.lane.b32.xlu0 %v4014, 119
        %v4019 = vpop.permute.xlu0 %4018
        %4020 = vrot.lane.b32.xlu0 %v4015, 119
        %v4021 = vpop.permute.xlu0 %4020
        %4024 = vst.msk [vmem:[#allocation7 + $0x5a] sm:$0xff] %vm738, %v4019
        %4025 = vst.msk [vmem:[#allocation7 + $0x62] sm:$0x3] %vm3916, %v4021
        %v4026 = vld [vmem:[#allocation4] sm:$0xff]
        %v4027 = vld [vmem:[#allocation4 + $0x10] sm:$0x3]
        %4030 = vrot.lane.b32.xlu0 %v4026, 118
        %v4031 = vpop.permute.xlu0 %4030
        %4032 = vrot.lane.b32.xlu0 %v4027, 118
        %v4033 = vpop.permute.xlu0 %4032
        %4036 = vst.msk [vmem:[#allocation7 + $0x64] sm:$0xff] %vm738, %v4031
        %4037 = vst.msk [vmem:[#allocation7 + $0x6c] sm:$0x3] %vm3916, %v4033
        %v4038 = vld [vmem:[#allocation4] sm:$0xff]
        %v4039 = vld [vmem:[#allocation4 + $0x10] sm:$0x3]
        %4042 = vrot.lane.b32.xlu0 %v4038, 117
        %v4043 = vpop.permute.xlu0 %4042
        %4044 = vrot.lane.b32.xlu0 %v4039, 117
        %v4045 = vpop.permute.xlu0 %4044
        %4048 = vst.msk [vmem:[#allocation7 + $0x6e] sm:$0xff] %vm738, %v4043
        %4049 = vst.msk [vmem:[#allocation7 + $0x76] sm:$0x3] %vm3916, %v4045
        %v4050 = vld [vmem:[#allocation4] sm:$0xff]
        %v4051 = vld [vmem:[#allocation4 + $0x10] sm:$0x3]
        %4054 = vrot.lane.b32.xlu0 %v4050, 116
        %v4055 = vpop.permute.xlu0 %4054
        %4056 = vrot.lane.b32.xlu0 %v4051, 116
        %v4057 = vpop.permute.xlu0 %4056
        %4060 = vst.msk [vmem:[#allocation7 + $0x78] sm:$0xff] %vm738, %v4055
        %4061 = vst.msk [vmem:[#allocation7 + $0x80] sm:$0x3] %vm3916, %v4057
        %v4062 = vld [vmem:[#allocation4] sm:$0xff]
        %v4063 = vld [vmem:[#allocation4 + $0x8] sm:$0xff]
        %v4064 = vld [vmem:[#allocation4 + $0x10] sm:$0x3]
        %v4065 = vld [vmem:[#allocation4 + $0x18] sm:$0x3]
        %4070 = vrot.lane.b32.xlu0 %v4062, 115
        %v4071 = vpop.permute.xlu0 %4070
        %4072 = vrot.lane.b32.xlu0 %v4063, 115
        %v4073 = vpop.permute.xlu0 %4072
        %4074 = vrot.lane.b32.xlu0 %v4064, 115
        %v4075 = vpop.permute.xlu0 %4074
        %4076 = vrot.lane.b32.xlu0 %v4065, 115
        %v4077 = vpop.permute.xlu0 %4076
        %v4078 = vsel %vm769, %v4071, %v4073
        %v4079 = vsel %vm769, %v4075, %v4077
        %4082 = vst.msk [vmem:[#allocation7 + $0x82] sm:$0xff] %vm738, %v4078
        %4083 = vst.msk [vmem:[#allocation7 + $0x8a] sm:$0x3] %vm3916, %v4079
        %v4084 = vld [vmem:[#allocation4] sm:$0xff]
        %v4085 = vld [vmem:[#allocation4 + $0x8] sm:$0xff]
        %v4086 = vld [vmem:[#allocation4 + $0x10] sm:$0x3]
        %v4087 = vld [vmem:[#allocation4 + $0x18] sm:$0x3]
        %4092 = vrot.lane.b32.xlu0 %v4084, 114
        %v4093 = vpop.permute.xlu0 %4092
        %4094 = vrot.lane.b32.xlu0 %v4085, 114
        %v4095 = vpop.permute.xlu0 %4094
        %4096 = vrot.lane.b32.xlu0 %v4086, 114
        %v4097 = vpop.permute.xlu0 %4096
        %4098 = vrot.lane.b32.xlu0 %v4087, 114
        %v4099 = vpop.permute.xlu0 %4098
        %v4100 = vsel %vm801, %v4093, %v4095
        %v4101 = vsel %vm801, %v4097, %v4099
        %4104 = vst.msk [vmem:[#allocation7 + $0x8c] sm:$0xff] %vm738, %v4100
        %4105 = vst.msk [vmem:[#allocation7 + $0x94] sm:$0x3] %vm3916, %v4101
        %v4106 = vld [vmem:[%s5] sm:$0xff]
        %v4107 = vld [vmem:[%s5 + $0x8] sm:$0xff]
        %v4108 = vld [vmem:[%s5 + $0x10] sm:$0xff]
        %v4109 = vld [vmem:[%s5 + $0x18] sm:$0xff]
        %v4110 = vld [vmem:[%s5 + $0x20] sm:$0xf]
        %v4111 = vld [vmem:[%s5 + $0x28] sm:$0xf]
        %v4112 = vld [vmem:[#allocation7] sm:$0xff]
        %v4113 = vld [vmem:[#allocation7 + $0x8] sm:$0xff]
        %v4114 = vld [vmem:[#allocation7 + $0x10] sm:$0xff]
        %v4115 = vld [vmem:[#allocation7 + $0x18] sm:$0xff]
        %v4116 = vld [vmem:[#allocation7 + $0x20] sm:$0xff]
        %v4117 = vld [vmem:[#allocation7 + $0x28] sm:$0xff]
        %v4118 = vld [vmem:[#allocation7 + $0x30] sm:$0xff]
        %v4119 = vld [vmem:[#allocation7 + $0x38] sm:$0xff]
        %v4120 = vld [vmem:[#allocation7 + $0x40] sm:$0xff]
        %v4121 = vld [vmem:[#allocation7 + $0x48] sm:$0xff]
        %v4122 = vld [vmem:[#allocation7 + $0x50] sm:$0xff]
        %v4123 = vld [vmem:[#allocation7 + $0x58] sm:$0xff]
        %v4124 = vld [vmem:[#allocation7 + $0x60] sm:$0xff]
        %v4125 = vld [vmem:[#allocation7 + $0x68] sm:$0xff]
        %v4126 = vld [vmem:[#allocation7 + $0x70] sm:$0xff]
        %v4127 = vld [vmem:[#allocation7 + $0x78] sm:$0xff]
        %v4128 = vld [vmem:[#allocation7 + $0x80] sm:$0xff]
        %v4129 = vld [vmem:[#allocation7 + $0x88] sm:$0xff]
        %v4130 = vld [vmem:[#allocation7 + $0x90] sm:$0x3f]
        %v4131 = vld [vmem:[%s6] sm:$0xff]
        %v4132 = vld [vmem:[%s6 + $0x8] sm:$0xff]
        %v4133 = vld [vmem:[%s6 + $0x10] sm:$0xf]
        %4135 = vset.pattern.permute.xlu0 0
        %4136 = vperm.xlu0 %4135, %v4131
        %v4137 = vpop.permute.xlu0 %4136
        %4140 = vset.pattern.permute.xlu0 0
        %4141 = vperm.xlu0 %4140, %v4132
        %v4142 = vpop.permute.xlu0 %4141
        %4145 = vset.pattern.permute.xlu0 0
        %4146 = vperm.xlu0 %4145, %v4133
        %v4147 = vpop.permute.xlu0 %4146
        %v4150 = vsel %vm3152, %v4107, 0
        %v4153 = vsel %vm3152, %v4109, 0
        %v4156 = vsel %vm3152, %v4111, 0
        %v4159 = vsel %vm3159, %v4130, 0
        %4161 = vmatprep.subr.mxu0 0.0
        %4162 = vmatpush1.msra.mxu0 %v4112
        %4163 = vmatprep.subr.mxu0 0.0
        %4164 = vmatpush1.msra.mxu0 %v4113
        %4165 = vmatprep.subr.mxu0 0.0
        %4166 = vmatpush1.msra.mxu0 %v4114
        %4167 = vmatprep.subr.mxu0 0.0
        %4168 = vmatpush1.msra.mxu0 %v4115
        %4169 = vmatprep.subr.mxu0 0.0
        %4170 = vmatpush1.msra.mxu0 %v4116
        %4171 = vmatprep.subr.mxu0 0.0
        %4172 = vmatpush1.msra.mxu0 %v4117
        %4173 = vmatprep.subr.mxu0 0.0
        %4174 = vmatpush1.msra.mxu0 %v4118
        %4175 = vmatprep.subr.mxu0 0.0
        %4176 = vmatpush1.msra.mxu0 %v4119
        %4177 = vmatprep.subr.mxu0 0.0
        %4178 = vmatpush1.msra.mxu0 %v4120
        %4179 = vmatprep.subr.mxu0 0.0
        %4180 = vmatpush1.msra.mxu0 %v4121
        %4181 = vmatprep.subr.mxu0 0.0
        %4182 = vmatpush1.msra.mxu0 %v4122
        %4183 = vmatprep.subr.mxu0 0.0
        %4184 = vmatpush1.msra.mxu0 %v4123
        %4185 = vmatprep.subr.mxu0 0.0
        %4186 = vmatpush1.msra.mxu0 %v4124
        %4187 = vmatprep.subr.mxu0 0.0
        %4188 = vmatpush1.msra.mxu0 %v4125
        %4189 = vmatprep.subr.mxu0 0.0
        %4190 = vmatpush1.msra.mxu0 %v4126
        %4191 = vmatprep.subr.mxu0 0.0
        %4192 = vmatpush1.msra.mxu0 %v4127
        %4193 = vmatprep.subr.mxu0 0.0
        %4194 = vmatpush1.msra.mxu0 %v4128
        %4195 = vmatprep.subr.mxu0 0.0
        %4196 = vmatpush1.msra.mxu0 %v4129
        %4197 = vmatprep.subr.mxu0 0.0
        %4198 = vmatpush1.msra.mxu0 %v4159
        %4199 = vmatprep.subr.mxu0 0.0
        %4200 = vmatpush1.msra.mxu0 0.0
        %4201 = vmatprep.subr.mxu0 0.0
        %4202 = vmatpush1.msra.mxu0 0.0
        %4203 = vmatprep.subr.mxu0 0.0
        %4204 = vmatpush1.msra.mxu0 0.0
        %4205 = vmatprep.subr.mxu0 0.0
        %4206 = vmatpush1.msra.mxu0 0.0
        %4207 = vmatprep.subr.mxu0 0.0
        %4208 = vmatpush1.msra.mxu0 0.0
        %4209 = vmatprep.subr.mxu0 0.0
        %4210 = vmatpush1.msra.mxu0 0.0
        %4211 = vmatprep.subr.mxu0 0.0
        %4212 = vmatpush1.msra.mxu0 0.0
        %4213 = vmatprep.subr.mxu0 0.0
        %4214 = vmatpush1.msra.mxu0 0.0
        %4215 = vmatprep.subr.mxu0 0.0
        %4216 = vmatpush1.msra.mxu0 0.0
        %4217 = vmatprep.subr.mxu0 0.0
        %4218 = vmatpush1.msra.mxu0 0.0
        %4219 = vmatprep.subr.mxu0 0.0
        %4220 = vmatpush1.msra.mxu0 0.0
        %4221 = vmatprep.subr.mxu0 0.0
        %4222 = vmatpush1.msra.mxu0 0.0
        %4223 = vmatprep.subr.mxu0 0.0
        %4224 = vmatpush1.msra.mxu0 0.0
        %4225 = vmatprep.mubr.f32.mxu0 %v4150
        %4226 = vmatmul.mubr.f32.gmra.mrb[0].mxu0 %v4106
        %v4227 = vpop.f32.mrb[0].mxu0
        %v4228 = vadd.f32 %v4137, %v4227
        %v4229 = vpop.f32.mrb[0].mxu0
        %4230 = vmatprep.mubr.f32.mxu0 %v4153
        %4231 = vmatmul.mubr.f32.gmra.mrb[0].mxu0 %v4108
        %v4232 = vpop.f32.mrb[0].mxu0
        %v4233 = vadd.f32 %v4142, %v4232
        %v4234 = vpop.f32.mrb[0].mxu0
        %4235 = vmatprep.mubr.f32.mxu0 %v4156
        %4236 = vmatmul.mubr.f32.gmra.mrb[0].mxu0 %v4110
        %v4237 = vpop.f32.mrb[0].mxu0
        %v4238 = vadd.f32 %v4147, %v4237
        %v4239 = vpop.f32.mrb[0].mxu0
        %4240 = vdwg.mxu0
        %v4242 = vsel %vm738, %v4228, 0
        %v4245 = vsel %vm738, %v4233, 0
        %v4248 = vsel %vm738, %v4238, 0
        %vm4250 = vcmask 1043456
        %v4252 = vsel %vm4250, %v3447, 0
        %4254 = vmatprep.subr.mxu0 0.0
        %4255 = vmatpush1.msra.mxu0 %v3433
        %4256 = vmatprep.subr.mxu0 0.0
        %4257 = vmatpush1.msra.mxu0 %v3434
        %4258 = vmatprep.subr.mxu0 0.0
        %4259 = vmatpush1.msra.mxu0 %v3435
        %4260 = vmatprep.subr.mxu0 0.0
        %4261 = vmatpush1.msra.mxu0 %v3436
        %4262 = vmatprep.subr.mxu0 0.0
        %4263 = vmatpush1.msra.mxu0 %v3437
        %4264 = vmatprep.subr.mxu0 0.0
        %4265 = vmatpush1.msra.mxu0 %v3438
        %4266 = vmatprep.subr.mxu0 0.0
        %4267 = vmatpush1.msra.mxu0 %v3439
        %4268 = vmatprep.subr.mxu0 0.0
        %4269 = vmatpush1.msra.mxu0 %v3440
        %4270 = vmatprep.subr.mxu0 0.0
        %4271 = vmatpush1.msra.mxu0 %v3441
        %4272 = vmatprep.subr.mxu0 0.0
        %4273 = vmatpush1.msra.mxu0 %v3442
        %4274 = vmatprep.subr.mxu0 0.0
        %4275 = vmatpush1.msra.mxu0 %v3443
        %4276 = vmatprep.subr.mxu0 0.0
        %4277 = vmatpush1.msra.mxu0 %v3444
        %4278 = vmatprep.subr.mxu0 0.0
        %4279 = vmatpush1.msra.mxu0 %v3445
        %4280 = vmatprep.subr.mxu0 0.0
        %4281 = vmatpush1.msra.mxu0 %v3446
        %4282 = vmatprep.subr.mxu0 0.0
        %4283 = vmatpush1.msra.mxu0 %v4252
        %4284 = vmatprep.subr.mxu0 0.0
        %4285 = vmatpush1.msra.mxu0 0.0
        %4286 = vmatprep.subr.mxu0 0.0
        %4287 = vmatpush1.msra.mxu0 0.0
        %4288 = vmatprep.subr.mxu0 0.0
        %4289 = vmatpush1.msra.mxu0 0.0
        %4290 = vmatprep.subr.mxu0 0.0
        %4291 = vmatpush1.msra.mxu0 0.0
        %4292 = vmatprep.subr.mxu0 0.0
        %4293 = vmatpush1.msra.mxu0 0.0
        %4294 = vmatprep.subr.mxu0 0.0
        %4295 = vmatpush1.msra.mxu0 0.0
        %4296 = vmatprep.subr.mxu0 0.0
        %4297 = vmatpush1.msra.mxu0 0.0
        %4298 = vmatprep.subr.mxu0 0.0
        %4299 = vmatpush1.msra.mxu0 0.0
        %4300 = vmatprep.subr.mxu0 0.0
        %4301 = vmatpush1.msra.mxu0 0.0
        %4302 = vmatprep.subr.mxu0 0.0
        %4303 = vmatpush1.msra.mxu0 0.0
        %4304 = vmatprep.subr.mxu0 0.0
        %4305 = vmatpush1.msra.mxu0 0.0
        %4306 = vmatprep.subr.mxu0 0.0
        %4307 = vmatpush1.msra.mxu0 0.0
        %4308 = vmatprep.subr.mxu0 0.0
        %4309 = vmatpush1.msra.mxu0 0.0
        %4310 = vmatprep.subr.mxu0 0.0
        %4311 = vmatpush1.msra.mxu0 0.0
        %4312 = vmatprep.subr.mxu0 0.0
        %4313 = vmatpush1.msra.mxu0 0.0
        %4314 = vmatprep.subr.mxu0 0.0
        %4315 = vmatpush1.msra.mxu0 0.0
        %4316 = vmatprep.subr.mxu0 0.0
        %4317 = vmatpush1.msra.mxu0 0.0
        %4318 = vmatprep.mubr.f32.mxu0 0.0
        %4319 = vmatmul.mubr.f32.gmra.mrb[0].mxu0 %v4242
        %v4320 = vpop.f32.mrb[0].mxu0
        %v4321 = vadd.f32 0.0, %v4320
        %v4322 = vpop.f32.mrb[0].mxu0
        %4323 = vmatprep.mubr.f32.mxu0 0.0
        %4324 = vmatmul.mubr.f32.gmra.mrb[0].mxu0 %v4245
        %v4325 = vpop.f32.mrb[0].mxu0
        %v4326 = vadd.f32 0.0, %v4325
        %v4327 = vpop.f32.mrb[0].mxu0
        %4328 = vmatprep.mubr.f32.mxu0 0.0
        %4329 = vmatmul.mubr.f32.gmra.mrb[0].mxu0 %v4248
        %v4330 = vpop.f32.mrb[0].mxu0
        %v4331 = vadd.f32 0.0, %v4330
        %v4332 = vpop.f32.mrb[0].mxu0
        %4333 = vdwg.mxu0
        %v4335 = vsel %vm4250, %v3716, 0
        %4337 = vmatprep.subr.mxu0 0.0
        %4338 = vmatpush1.msra.mxu0 %v3702
        %4339 = vmatprep.subr.mxu0 0.0
        %4340 = vmatpush1.msra.mxu0 %v3703
        %4341 = vmatprep.subr.mxu0 0.0
        %4342 = vmatpush1.msra.mxu0 %v3704
        %4343 = vmatprep.subr.mxu0 0.0
        %4344 = vmatpush1.msra.mxu0 %v3705
        %4345 = vmatprep.subr.mxu0 0.0
        %4346 = vmatpush1.msra.mxu0 %v3706
        %4347 = vmatprep.subr.mxu0 0.0
        %4348 = vmatpush1.msra.mxu0 %v3707
        %4349 = vmatprep.subr.mxu0 0.0
        %4350 = vmatpush1.msra.mxu0 %v3708
        %4351 = vmatprep.subr.mxu0 0.0
        %4352 = vmatpush1.msra.mxu0 %v3709
        %4353 = vmatprep.subr.mxu0 0.0
        %4354 = vmatpush1.msra.mxu0 %v3710
        %4355 = vmatprep.subr.mxu0 0.0
        %4356 = vmatpush1.msra.mxu0 %v3711
        %4357 = vmatprep.subr.mxu0 0.0
        %4358 = vmatpush1.msra.mxu0 %v3712
        %4359 = vmatprep.subr.mxu0 0.0
        %4360 = vmatpush1.msra.mxu0 %v3713
        %4361 = vmatprep.subr.mxu0 0.0
        %4362 = vmatpush1.msra.mxu0 %v3714
        %4363 = vmatprep.subr.mxu0 0.0
        %4364 = vmatpush1.msra.mxu0 %v3715
        %4365 = vmatprep.subr.mxu0 0.0
        %4366 = vmatpush1.msra.mxu0 %v4335
        %4367 = vmatprep.subr.mxu0 0.0
        %4368 = vmatpush1.msra.mxu0 0.0
        %4369 = vmatprep.subr.mxu0 0.0
        %4370 = vmatpush1.msra.mxu0 0.0
        %4371 = vmatprep.subr.mxu0 0.0
        %4372 = vmatpush1.msra.mxu0 0.0
        %4373 = vmatprep.subr.mxu0 0.0
        %4374 = vmatpush1.msra.mxu0 0.0
        %4375 = vmatprep.subr.mxu0 0.0
        %4376 = vmatpush1.msra.mxu0 0.0
        %4377 = vmatprep.subr.mxu0 0.0
        %4378 = vmatpush1.msra.mxu0 0.0
        %4379 = vmatprep.subr.mxu0 0.0
        %4380 = vmatpush1.msra.mxu0 0.0
        %4381 = vmatprep.subr.mxu0 0.0
        %4382 = vmatpush1.msra.mxu0 0.0
        %4383 = vmatprep.subr.mxu0 0.0
        %4384 = vmatpush1.msra.mxu0 0.0
        %4385 = vmatprep.subr.mxu0 0.0
        %4386 = vmatpush1.msra.mxu0 0.0
        %4387 = vmatprep.subr.mxu0 0.0
        %4388 = vmatpush1.msra.mxu0 0.0
        %4389 = vmatprep.subr.mxu0 0.0
        %4390 = vmatpush1.msra.mxu0 0.0
        %4391 = vmatprep.subr.mxu0 0.0
        %4392 = vmatpush1.msra.mxu0 0.0
        %4393 = vmatprep.subr.mxu0 0.0
        %4394 = vmatpush1.msra.mxu0 0.0
        %4395 = vmatprep.subr.mxu0 0.0
        %4396 = vmatpush1.msra.mxu0 0.0
        %4397 = vmatprep.subr.mxu0 0.0
        %4398 = vmatpush1.msra.mxu0 0.0
        %4399 = vmatprep.subr.mxu0 0.0
        %4400 = vmatpush1.msra.mxu0 0.0
        %4401 = vmatprep.mubr.f32.mxu0 0.0
        %4402 = vmatmul.mubr.f32.gmra.mrb[0].mxu0 %v4242
        %v4403 = vpop.f32.mrb[0].mxu0
        %v4404 = vadd.f32 0.0, %v4403
        %v4405 = vpop.f32.mrb[0].mxu0
        %4406 = vmatprep.mubr.f32.mxu0 0.0
        %4407 = vmatmul.mubr.f32.gmra.mrb[0].mxu0 %v4245
        %v4408 = vpop.f32.mrb[0].mxu0
        %v4409 = vadd.f32 0.0, %v4408
        %v4410 = vpop.f32.mrb[0].mxu0
        %4411 = vmatprep.mubr.f32.mxu0 0.0
        %4412 = vmatmul.mubr.f32.gmra.mrb[0].mxu0 %v4248
        %v4413 = vpop.f32.mrb[0].mxu0
        %v4414 = vadd.f32 0.0, %v4413
        %v4415 = vpop.f32.mrb[0].mxu0
        %4416 = vdwg.mxu0
        %v4417 = vmax.f32 %v4321, %v4404
        %v4418 = vmax.f32 %v4326, %v4409
        %v4419 = vmax.f32 %v4331, %v4414
        %v4420 = vmax.f32 %v4417, 0.0
        %v4421 = vmax.f32 %v4418, 0.0
        %v4422 = vmax.f32 %v4419, 0.0
        %v4424 = vrot.slane %v4420, 1
        %4425 = vrot.lane.b32.xlu0 %v4424, 29
        %v4426 = vpop.permute.xlu0 %4425
        %v4428 = vrot.slane %v4420, 2
        %4429 = vrot.lane.b32.xlu0 %v4428, 58
        %v4430 = vpop.permute.xlu0 %4429
        %v4432 = vrot.slane %v4420, 3
        %4433 = vrot.lane.b32.xlu0 %v4432, 87
        %v4434 = vpop.permute.xlu0 %4433
        %v4436 = vrot.slane %v4420, 4
        %4437 = vrot.lane.b32.xlu0 %v4436, 116
        %v4438 = vpop.permute.xlu0 %4437
        %v4440 = vrot.slane %v4420, 5
        %4441 = vrot.lane.b32.xlu0 %v4440, 17
        %v4442 = vpop.permute.xlu0 %4441
        %v4444 = vrot.slane %v4420, 6
        %4445 = vrot.lane.b32.xlu0 %v4444, 46
        %v4446 = vpop.permute.xlu0 %4445
        %v4448 = vrot.slane %v4420, 7
        %4449 = vrot.lane.b32.xlu0 %v4448, 75
        %v4450 = vpop.permute.xlu0 %4449
        %4453 = vrot.lane.b32.xlu0 %v4421, 104
        %v4454 = vpop.permute.xlu0 %4453
        %v4456 = vrot.slane %v4421, 1
        %4457 = vrot.lane.b32.xlu0 %v4456, 5
        %v4458 = vpop.permute.xlu0 %4457
        %v4460 = vrot.slane %v4421, 2
        %4461 = vrot.lane.b32.xlu0 %v4460, 34
        %v4462 = vpop.permute.xlu0 %4461
        %v4464 = vrot.slane %v4421, 3
        %4465 = vrot.lane.b32.xlu0 %v4464, 63
        %v4466 = vpop.permute.xlu0 %4465
        %v4468 = vrot.slane %v4421, 4
        %4469 = vrot.lane.b32.xlu0 %v4468, 92
        %v4470 = vpop.permute.xlu0 %4469
        %v4472 = vrot.slane %v4421, 5
        %4473 = vrot.lane.b32.xlu0 %v4472, 121
        %v4474 = vpop.permute.xlu0 %4473
        %v4476 = vrot.slane %v4421, 6
        %4477 = vrot.lane.b32.xlu0 %v4476, 22
        %v4478 = vpop.permute.xlu0 %4477
        %v4480 = vrot.slane %v4421, 7
        %4481 = vrot.lane.b32.xlu0 %v4480, 51
        %v4482 = vpop.permute.xlu0 %4481
        %vm4484 = vcmask 236544
        %v4485 = vsel %vm4484, %v4420, %v4426
        %vm4486 = vcmask 474112
        %v4487 = vsel %vm4486, %v4485, %v4430
        %v4488 = vsel %vm1651, %v4487, %v4434
        %v4489 = vsel %vm738, %v4488, %v4438
        %vm4490 = vcmask 138240
        %v4491 = vsel %vm4490, %v4438, %v4442
        %vm4492 = vcmask 375808
        %v4493 = vsel %vm4492, %v4491, %v4446
        %v4494 = vsel %vm2029, %v4493, %v4450
        %v4495 = vsel %vm1116, %v4494, %v4454
        %vm4496 = vcmask 39936
        %v4497 = vsel %vm4496, %v4454, %v4458
        %vm4498 = vcmask 277504
        %v4499 = vsel %vm4498, %v4497, %v4462
        %vm4500 = vcmask 515072
        %v4501 = vsel %vm4500, %v4499, %v4466
        %v4502 = vsel %vm1494, %v4501, %v4470
        %v4503 = vsel %vm581, %v4502, %v4474
        %v4504 = vsel %vm3152, %v4474, %v4478
        %vm4505 = vcmask 416768
        %v4506 = vsel %vm4505, %v4504, %v4482
        %v4508 = vrot.slane %v4422, 1
        %4509 = vrot.lane.b32.xlu0 %v4508, 29
        %v4510 = vpop.permute.xlu0 %4509
        %v4512 = vrot.slane %v4422, 2
        %4513 = vrot.lane.b32.xlu0 %v4512, 58
        %v4514 = vpop.permute.xlu0 %4513
        %v4516 = vrot.slane %v4422, 3
        %4517 = vrot.lane.b32.xlu0 %v4516, 87
        %v4518 = vpop.permute.xlu0 %4517
        %v4520 = vsel %vm4484, %v4422, %v4510
        %v4521 = vsel %vm4486, %v4520, %v4514
        %v4522 = vsel %vm1651, %v4521, %v4518
        %4524 = vrot.lane.b32.xlu0 %v4522, 80
        %v4525 = vpop.permute.xlu0 %4524
        %v4527 = vsel %vm1872, %v4506, %v4525
        %v4528 = vld [vmem:[%s7] sm:$0xff]
        %v4529 = vld [vmem:[%s7 + $0x8] sm:$0xff]
        %v4530 = vld [vmem:[%s7 + $0x10] sm:$0xff]
        %v4531 = vld [vmem:[%s7 + $0x18] sm:$0xff]
        %v4532 = vld [vmem:[%s7 + $0x20] sm:$0xff]
        %v4533 = vld [vmem:[%s7 + $0x28] sm:$0xff]
        %v4534 = vld [vmem:[%s7 + $0x30] sm:$0xff]
        %v4535 = vld [vmem:[%s7 + $0x38] sm:$0xff]
        %v4536 = vld [vmem:[%s7 + $0x40] sm:$0xff]
        %v4537 = vld [vmem:[%s7 + $0x48] sm:$0xff]
        %v4538 = vld [vmem:[%s7 + $0x50] sm:$0xff]
        %v4539 = vld [vmem:[%s7 + $0x58] sm:$0xff]
        %v4540 = vld [vmem:[%s7 + $0x60] sm:$0xff]
        %v4541 = vld [vmem:[%s7 + $0x68] sm:$0xff]
        %v4542 = vld [vmem:[%s7 + $0x70] sm:$0xff]
        %v4543 = vld [vmem:[%s7 + $0x78] sm:$0xff]
        %v4544 = vld [vmem:[%s7 + $0x80] sm:$0xff]
        %v4545 = vld [vmem:[%s7 + $0x88] sm:$0xff]
        %v4546 = vld [vmem:[%s7 + $0x90] sm:$0xff]
        %v4547 = vld [vmem:[%s7 + $0x98] sm:$0xff]
        %v4548 = vld [vmem:[%s7 + $0xa0] sm:$0xff]
        %v4549 = vld [vmem:[%s7 + $0xa8] sm:$0xff]
        %v4550 = vld [vmem:[%s7 + $0xb0] sm:$0xff]
        %v4551 = vld [vmem:[%s7 + $0xb8] sm:$0xff]
        %v4552 = vld [vmem:[%s7 + $0xc0] sm:$0xff]
        %v4553 = vld [vmem:[%s7 + $0xc8] sm:$0xff]
        %v4554 = vld [vmem:[%s7 + $0xd0] sm:$0xff]
        %v4555 = vld [vmem:[%s7 + $0xd8] sm:$0xff]
        %v4556 = vld [vmem:[%s7 + $0xe0] sm:$0xff]
        %v4557 = vld [vmem:[%s7 + $0xe8] sm:$0xff]
        %v4558 = vld [vmem:[%s7 + $0xf0] sm:$0xff]
        %v4559 = vld [vmem:[%s7 + $0xf8] sm:$0xff]
        %v4560 = vld [vmem:[%s7 + $0x100] sm:$0xff]
        %v4561 = vld [vmem:[%s7 + $0x108] sm:$0xff]
        %v4562 = vld [vmem:[%s7 + $0x110] sm:$0xff]
        %v4563 = vld [vmem:[%s7 + $0x118] sm:$0xff]
        %v4564 = vld [vmem:[%s7 + $0x120] sm:$0xff]
        %v4565 = vld [vmem:[%s7 + $0x128] sm:$0xff]
        %v4566 = vld [vmem:[%s7 + $0x130] sm:$0xff]
        %v4567 = vld [vmem:[%s7 + $0x138] sm:$0xff]
        %v4568 = vld [vmem:[%s7 + $0x140] sm:$0xff]
        %v4569 = vld [vmem:[%s7 + $0x148] sm:$0xff]
        %v4570 = vld [vmem:[%s7 + $0x150] sm:$0xff]
        %v4571 = vld [vmem:[%s7 + $0x158] sm:$0xff]
        %v4572 = vld [vmem:[%s7 + $0x160] sm:$0xff]
        %v4573 = vld [vmem:[%s7 + $0x168] sm:$0xff]
        %v4574 = vld [vmem:[%s7 + $0x170] sm:$0xff]
        %v4575 = vld [vmem:[%s7 + $0x178] sm:$0xff]
        %v4576 = vld [vmem:[%s7 + $0x180] sm:$0xff]
        %v4577 = vld [vmem:[%s7 + $0x188] sm:$0xff]
        %v4578 = vld [vmem:[%s7 + $0x190] sm:$0xff]
        %v4579 = vld [vmem:[%s7 + $0x198] sm:$0xff]
        %v4580 = vld [vmem:[%s7 + $0x1a0] sm:$0xff]
        %v4581 = vld [vmem:[%s7 + $0x1a8] sm:$0xff]
        %v4582 = vld [vmem:[%s7 + $0x1b0] sm:$0xff]
        %v4583 = vld [vmem:[%s7 + $0x1b8] sm:$0xff]
        %v4584 = vld [vmem:[%s7 + $0x1c0] sm:$0xff]
        %v4585 = vld [vmem:[%s7 + $0x1c8] sm:$0xff]
        %v4586 = vld [vmem:[%s7 + $0x1d0] sm:$0xff]
        %v4587 = vld [vmem:[%s7 + $0x1d8] sm:$0xff]
        %v4588 = vld [vmem:[%s7 + $0x1e0] sm:$0xff]
        %v4589 = vld [vmem:[%s7 + $0x1e8] sm:$0xff]
        %v4590 = vld [vmem:[%s7 + $0x1f0] sm:$0xff]
        %v4591 = vld [vmem:[%s7 + $0x1f8] sm:$0xff]
        %v4592 = vld [vmem:[%s7 + $0x200] sm:$0xff]
        %v4593 = vld [vmem:[%s7 + $0x208] sm:$0xff]
        %v4594 = vld [vmem:[%s7 + $0x210] sm:$0xff]
        %v4595 = vld [vmem:[%s7 + $0x218] sm:$0xff]
        %v4596 = vld [vmem:[%s7 + $0x220] sm:$0xff]
        %v4597 = vld [vmem:[%s7 + $0x228] sm:$0xff]
        %v4598 = vld [vmem:[%s7 + $0x230] sm:$0xff]
        %v4599 = vld [vmem:[%s7 + $0x238] sm:$0xff]
        %v4600 = vld [vmem:[%s7 + $0x240] sm:$0xf]
        %v4601 = vld [vmem:[%s8] sm:$0x1]
        %vm4602 = vcmask 556032
        %v4603 = vsel %vm4602, %v4525, 0
        %v4606 = vsel %vm4250, %v4600, 0
        %4608 = vmatprep.subr.mxu0 0.0
        %4609 = vmatpush1.msra.mxu0 %v4528
        %4610 = vmatprep.subr.mxu0 0.0
        %4611 = vmatpush1.msra.mxu0 %v4529
        %4612 = vmatprep.subr.mxu0 0.0
        %4613 = vmatpush1.msra.mxu0 %v4530
        %4614 = vmatprep.subr.mxu0 0.0
        %4615 = vmatpush1.msra.mxu0 %v4531
        %4616 = vmatprep.subr.mxu0 0.0
        %4617 = vmatpush1.msra.mxu0 %v4532
        %4618 = vmatprep.subr.mxu0 0.0
        %4619 = vmatpush1.msra.mxu0 %v4533
        %4620 = vmatprep.subr.mxu0 0.0
        %4621 = vmatpush1.msra.mxu0 %v4534
        %4622 = vmatprep.subr.mxu0 0.0
        %4623 = vmatpush1.msra.mxu0 %v4535
        %4624 = vmatprep.subr.mxu0 0.0
        %4625 = vmatpush1.msra.mxu0 %v4536
        %4626 = vmatprep.subr.mxu0 0.0
        %4627 = vmatpush1.msra.mxu0 %v4537
        %4628 = vmatprep.subr.mxu0 0.0
        %4629 = vmatpush1.msra.mxu0 %v4538
        %4630 = vmatprep.subr.mxu0 0.0
        %4631 = vmatpush1.msra.mxu0 %v4539
        %4632 = vmatprep.subr.mxu0 0.0
        %4633 = vmatpush1.msra.mxu0 %v4540
        %4634 = vmatprep.subr.mxu0 0.0
        %4635 = vmatpush1.msra.mxu0 %v4541
        %4636 = vmatprep.subr.mxu0 0.0
        %4637 = vmatpush1.msra.mxu0 %v4542
        %4638 = vmatprep.subr.mxu0 0.0
        %4639 = vmatpush1.msra.mxu0 %v4543
        %4640 = vmatprep.subr.mxu0 0.0
        %4641 = vmatpush1.msra.mxu0 %v4544
        %4642 = vmatprep.subr.mxu0 0.0
        %4643 = vmatpush1.msra.mxu0 %v4545
        %4644 = vmatprep.subr.mxu0 0.0
        %4645 = vmatpush1.msra.mxu0 %v4546
        %4646 = vmatprep.subr.mxu0 0.0
        %4647 = vmatpush1.msra.mxu0 %v4547
        %4648 = vmatprep.subr.mxu0 0.0
        %4649 = vmatpush1.msra.mxu0 %v4548
        %4650 = vmatprep.subr.mxu0 0.0
        %4651 = vmatpush1.msra.mxu0 %v4549
        %4652 = vmatprep.subr.mxu0 0.0
        %4653 = vmatpush1.msra.mxu0 %v4550
        %4654 = vmatprep.subr.mxu0 0.0
        %4655 = vmatpush1.msra.mxu0 %v4551
        %4656 = vmatprep.subr.mxu0 0.0
        %4657 = vmatpush1.msra.mxu0 %v4552
        %4658 = vmatprep.subr.mxu0 0.0
        %4659 = vmatpush1.msra.mxu0 %v4553
        %4660 = vmatprep.subr.mxu0 0.0
        %4661 = vmatpush1.msra.mxu0 %v4554
        %4662 = vmatprep.subr.mxu0 0.0
        %4663 = vmatpush1.msra.mxu0 %v4555
        %4664 = vmatprep.subr.mxu0 0.0
        %4665 = vmatpush1.msra.mxu0 %v4556
        %4666 = vmatprep.subr.mxu0 0.0
        %4667 = vmatpush1.msra.mxu0 %v4557
        %4668 = vmatprep.subr.mxu0 0.0
        %4669 = vmatpush1.msra.mxu0 %v4558
        %4670 = vmatprep.subr.mxu0 0.0
        %4671 = vmatpush1.msra.mxu0 %v4559
        %4672 = vmatprep.mubr.f32.mxu0 %v4495
        %4673 = vmatmul.mubr.f32.gmra.mrb[0].mxu0 %v4489
        %v4674 = vpop.f32.mrb[0].mxu0
        %v4675 = vadd.f32 %v4601, %v4674
        %v4676 = vpop.f32.mrb[0].mxu0
        %4677 = vdwg.mxu0
        %4678 = vmatprep.subr.mxu0 0.0
        %4679 = vmatpush1.msra.mxu0 %v4560
        %4680 = vmatprep.subr.mxu0 0.0
        %4681 = vmatpush1.msra.mxu0 %v4561
        %4682 = vmatprep.subr.mxu0 0.0
        %4683 = vmatpush1.msra.mxu0 %v4562
        %4684 = vmatprep.subr.mxu0 0.0
        %4685 = vmatpush1.msra.mxu0 %v4563
        %4686 = vmatprep.subr.mxu0 0.0
        %4687 = vmatpush1.msra.mxu0 %v4564
        %4688 = vmatprep.subr.mxu0 0.0
        %4689 = vmatpush1.msra.mxu0 %v4565
        %4690 = vmatprep.subr.mxu0 0.0
        %4691 = vmatpush1.msra.mxu0 %v4566
        %4692 = vmatprep.subr.mxu0 0.0
        %4693 = vmatpush1.msra.mxu0 %v4567
        %4694 = vmatprep.subr.mxu0 0.0
        %4695 = vmatpush1.msra.mxu0 %v4568
        %4696 = vmatprep.subr.mxu0 0.0
        %4697 = vmatpush1.msra.mxu0 %v4569
        %4698 = vmatprep.subr.mxu0 0.0
        %4699 = vmatpush1.msra.mxu0 %v4570
        %4700 = vmatprep.subr.mxu0 0.0
        %4701 = vmatpush1.msra.mxu0 %v4571
        %4702 = vmatprep.subr.mxu0 0.0
        %4703 = vmatpush1.msra.mxu0 %v4572
        %4704 = vmatprep.subr.mxu0 0.0
        %4705 = vmatpush1.msra.mxu0 %v4573
        %4706 = vmatprep.subr.mxu0 0.0
        %4707 = vmatpush1.msra.mxu0 %v4574
        %4708 = vmatprep.subr.mxu0 0.0
        %4709 = vmatpush1.msra.mxu0 %v4575
        %4710 = vmatprep.subr.mxu0 0.0
        %4711 = vmatpush1.msra.mxu0 %v4576
        %4712 = vmatprep.subr.mxu0 0.0
        %4713 = vmatpush1.msra.mxu0 %v4577
        %4714 = vmatprep.subr.mxu0 0.0
        %4715 = vmatpush1.msra.mxu0 %v4578
        %4716 = vmatprep.subr.mxu0 0.0
        %4717 = vmatpush1.msra.mxu0 %v4579
        %4718 = vmatprep.subr.mxu0 0.0
        %4719 = vmatpush1.msra.mxu0 %v4580
        %4720 = vmatprep.subr.mxu0 0.0
        %4721 = vmatpush1.msra.mxu0 %v4581
        %4722 = vmatprep.subr.mxu0 0.0
        %4723 = vmatpush1.msra.mxu0 %v4582
        %4724 = vmatprep.subr.mxu0 0.0
        %4725 = vmatpush1.msra.mxu0 %v4583
        %4726 = vmatprep.subr.mxu0 0.0
        %4727 = vmatpush1.msra.mxu0 %v4584
        %4728 = vmatprep.subr.mxu0 0.0
        %4729 = vmatpush1.msra.mxu0 %v4585
        %4730 = vmatprep.subr.mxu0 0.0
        %4731 = vmatpush1.msra.mxu0 %v4586
        %4732 = vmatprep.subr.mxu0 0.0
        %4733 = vmatpush1.msra.mxu0 %v4587
        %4734 = vmatprep.subr.mxu0 0.0
        %4735 = vmatpush1.msra.mxu0 %v4588
        %4736 = vmatprep.subr.mxu0 0.0
        %4737 = vmatpush1.msra.mxu0 %v4589
        %4738 = vmatprep.subr.mxu0 0.0
        %4739 = vmatpush1.msra.mxu0 %v4590
        %4740 = vmatprep.subr.mxu0 0.0
        %4741 = vmatpush1.msra.mxu0 %v4591
        %4742 = vmatprep.mubr.f32.mxu0 %v4527
        %4743 = vmatmul.mubr.f32.gmra.mrb[0].mxu0 %v4503
        %v4744 = vpop.f32.mrb[0].mxu0
        %v4745 = vadd.f32 %v4675, %v4744
        %v4746 = vpop.f32.mrb[0].mxu0
        %4747 = vdwg.mxu0
        %4748 = vmatprep.subr.mxu0 0.0
        %4749 = vmatpush1.msra.mxu0 %v4592
        %4750 = vmatprep.subr.mxu0 0.0
        %4751 = vmatpush1.msra.mxu0 %v4593
        %4752 = vmatprep.subr.mxu0 0.0
        %4753 = vmatpush1.msra.mxu0 %v4594
        %4754 = vmatprep.subr.mxu0 0.0
        %4755 = vmatpush1.msra.mxu0 %v4595
        %4756 = vmatprep.subr.mxu0 0.0
        %4757 = vmatpush1.msra.mxu0 %v4596
        %4758 = vmatprep.subr.mxu0 0.0
        %4759 = vmatpush1.msra.mxu0 %v4597
        %4760 = vmatprep.subr.mxu0 0.0
        %4761 = vmatpush1.msra.mxu0 %v4598
        %4762 = vmatprep.subr.mxu0 0.0
        %4763 = vmatpush1.msra.mxu0 %v4599
        %4764 = vmatprep.subr.mxu0 0.0
        %4765 = vmatpush1.msra.mxu0 %v4606
        %4766 = vmatprep.subr.mxu0 0.0
        %4767 = vmatpush1.msra.mxu0 0.0
        %4768 = vmatprep.subr.mxu0 0.0
        %4769 = vmatpush1.msra.mxu0 0.0
        %4770 = vmatprep.subr.mxu0 0.0
        %4771 = vmatpush1.msra.mxu0 0.0
        %4772 = vmatprep.subr.mxu0 0.0
        %4773 = vmatpush1.msra.mxu0 0.0
        %4774 = vmatprep.subr.mxu0 0.0
        %4775 = vmatpush1.msra.mxu0 0.0
        %4776 = vmatprep.subr.mxu0 0.0
        %4777 = vmatpush1.msra.mxu0 0.0
        %4778 = vmatprep.subr.mxu0 0.0
        %4779 = vmatpush1.msra.mxu0 0.0
        %4780 = vmatprep.subr.mxu0 0.0
        %4781 = vmatpush1.msra.mxu0 0.0
        %4782 = vmatprep.subr.mxu0 0.0
        %4783 = vmatpush1.msra.mxu0 0.0
        %4784 = vmatprep.subr.mxu0 0.0
        %4785 = vmatpush1.msra.mxu0 0.0
        %4786 = vmatprep.subr.mxu0 0.0
        %4787 = vmatpush1.msra.mxu0 0.0
        %4788 = vmatprep.subr.mxu0 0.0
        %4789 = vmatpush1.msra.mxu0 0.0
        %4790 = vmatprep.subr.mxu0 0.0
        %4791 = vmatpush1.msra.mxu0 0.0
        %4792 = vmatprep.subr.mxu0 0.0
        %4793 = vmatpush1.msra.mxu0 0.0
        %4794 = vmatprep.subr.mxu0 0.0
        %4795 = vmatpush1.msra.mxu0 0.0
        %4796 = vmatprep.subr.mxu0 0.0
        %4797 = vmatpush1.msra.mxu0 0.0
        %4798 = vmatprep.subr.mxu0 0.0
        %4799 = vmatpush1.msra.mxu0 0.0
        %4800 = vmatprep.subr.mxu0 0.0
        %4801 = vmatpush1.msra.mxu0 0.0
        %4802 = vmatprep.subr.mxu0 0.0
        %4803 = vmatpush1.msra.mxu0 0.0
        %4804 = vmatprep.subr.mxu0 0.0
        %4805 = vmatpush1.msra.mxu0 0.0
        %4806 = vmatprep.subr.mxu0 0.0
        %4807 = vmatpush1.msra.mxu0 0.0
        %4808 = vmatprep.subr.mxu0 0.0
        %4809 = vmatpush1.msra.mxu0 0.0
        %4810 = vmatprep.subr.mxu0 0.0
        %4811 = vmatpush1.msra.mxu0 0.0
        %4812 = vmatprep.mubr.f32.mxu0 0.0
        %4813 = vmatmul.mubr.f32.gmra.mrb[0].mxu0 %v4603
        %v4814 = vpop.f32.mrb[0].mxu0
        %v4815 = vadd.f32 %v4745, %v4814
        %v4816 = vpop.f32.mrb[0].mxu0
        %4817 = vdwg.mxu0
        %v4818 = vtanh.pop %v4815
        %v4819 = vld [vmem:[%s9] sm:$0xff]
        %v4820 = vld [vmem:[%s9 + $0x8] sm:$0xff]
        %v4821 = vld [vmem:[%s9 + $0x10] sm:$0xff]
        %v4822 = vld [vmem:[%s9 + $0x18] sm:$0xff]
        %v4823 = vld [vmem:[%s9 + $0x20] sm:$0xff]
        %v4824 = vld [vmem:[%s9 + $0x28] sm:$0xff]
        %v4825 = vld [vmem:[%s9 + $0x30] sm:$0xff]
        %v4826 = vld [vmem:[%s9 + $0x38] sm:$0xff]
        %v4827 = vld [vmem:[%s9 + $0x40] sm:$0xff]
        %v4828 = vld [vmem:[%s9 + $0x48] sm:$0xff]
        %v4829 = vld [vmem:[%s9 + $0x50] sm:$0xff]
        %v4830 = vld [vmem:[%s9 + $0x58] sm:$0xff]
        %v4831 = vld [vmem:[%s9 + $0x60] sm:$0xf]
        %v4832 = vld [vmem:[%s10] sm:$0x1]
        %v4834 = vsel %vm1242, %v4818, 0
        %v4837 = vsel %vm4250, %v4831, 0
        %4839 = vmatprep.subr.mxu0 0.0
        %4840 = vmatpush1.msra.mxu0 %v4819
        %4841 = vmatprep.subr.mxu0 0.0
        %4842 = vmatpush1.msra.mxu0 %v4820
        %4843 = vmatprep.subr.mxu0 0.0
        %4844 = vmatpush1.msra.mxu0 %v4821
        %4845 = vmatprep.subr.mxu0 0.0
        %4846 = vmatpush1.msra.mxu0 %v4822
        %4847 = vmatprep.subr.mxu0 0.0
        %4848 = vmatpush1.msra.mxu0 %v4823
        %4849 = vmatprep.subr.mxu0 0.0
        %4850 = vmatpush1.msra.mxu0 %v4824
        %4851 = vmatprep.subr.mxu0 0.0
        %4852 = vmatpush1.msra.mxu0 %v4825
        %4853 = vmatprep.subr.mxu0 0.0
        %4854 = vmatpush1.msra.mxu0 %v4826
        %4855 = vmatprep.subr.mxu0 0.0
        %4856 = vmatpush1.msra.mxu0 %v4827
        %4857 = vmatprep.subr.mxu0 0.0
        %4858 = vmatpush1.msra.mxu0 %v4828
        %4859 = vmatprep.subr.mxu0 0.0
        %4860 = vmatpush1.msra.mxu0 %v4829
        %4861 = vmatprep.subr.mxu0 0.0
        %4862 = vmatpush1.msra.mxu0 %v4830
        %4863 = vmatprep.subr.mxu0 0.0
        %4864 = vmatpush1.msra.mxu0 %v4837
        %4865 = vmatprep.subr.mxu0 0.0
        %4866 = vmatpush1.msra.mxu0 0.0
        %4867 = vmatprep.subr.mxu0 0.0
        %4868 = vmatpush1.msra.mxu0 0.0
        %4869 = vmatprep.subr.mxu0 0.0
        %4870 = vmatpush1.msra.mxu0 0.0
        %4871 = vmatprep.subr.mxu0 0.0
        %4872 = vmatpush1.msra.mxu0 0.0
        %4873 = vmatprep.subr.mxu0 0.0
        %4874 = vmatpush1.msra.mxu0 0.0
        %4875 = vmatprep.subr.mxu0 0.0
        %4876 = vmatpush1.msra.mxu0 0.0
        %4877 = vmatprep.subr.mxu0 0.0
        %4878 = vmatpush1.msra.mxu0 0.0
        %4879 = vmatprep.subr.mxu0 0.0
        %4880 = vmatpush1.msra.mxu0 0.0
        %4881 = vmatprep.subr.mxu0 0.0
        %4882 = vmatpush1.msra.mxu0 0.0
        %4883 = vmatprep.subr.mxu0 0.0
        %4884 = vmatpush1.msra.mxu0 0.0
        %4885 = vmatprep.subr.mxu0 0.0
        %4886 = vmatpush1.msra.mxu0 0.0
        %4887 = vmatprep.subr.mxu0 0.0
        %4888 = vmatpush1.msra.mxu0 0.0
        %4889 = vmatprep.subr.mxu0 0.0
        %4890 = vmatpush1.msra.mxu0 0.0
        %4891 = vmatprep.subr.mxu0 0.0
        %4892 = vmatpush1.msra.mxu0 0.0
        %4893 = vmatprep.subr.mxu0 0.0
        %4894 = vmatpush1.msra.mxu0 0.0
        %4895 = vmatprep.subr.mxu0 0.0
        %4896 = vmatpush1.msra.mxu0 0.0
        %4897 = vmatprep.subr.mxu0 0.0
        %4898 = vmatpush1.msra.mxu0 0.0
        %4899 = vmatprep.subr.mxu0 0.0
        %4900 = vmatpush1.msra.mxu0 0.0
        %4901 = vmatprep.subr.mxu0 0.0
        %4902 = vmatpush1.msra.mxu0 0.0
        %4903 = vmatprep.mubr.f32.mxu0 0.0
        %4904 = vmatmul.mubr.f32.gmra.mrb[0].mxu0 %v4834
        %v4905 = vpop.f32.mrb[0].mxu0
        %v4906 = vadd.f32 %v4832, %v4905
        %v4907 = vpop.f32.mrb[0].mxu0
        %4908 = vdwg.mxu0
        %vm4909 = vcmask 8192
        %4910 = vst.msk [vmem:[%s378] sm:$0x1] %vm4909, %v4906
        %s4911 = sand.u32 %s269, 1
        %s4912 = scalar_lea.sflag [#allocation9], %s4911
        %s4913 = sand.u32 %s269, 1
        %s4914 = scalar_lea.vmem [#allocation8], %s4913
        // Predicated region
        $region65: #{forward.1} parent=63 // pred_check
          %p4915 = pneg %p279
        $region66: #{forward.1} parent=63 // pred_check_branch
          %4917 = sbr.rel (%p4915) target = $region68
        $region67: #{forward.1} parent=63 // pred_region
          %s4919 = ssub.s32 16, 16
          %4920 = vsyncadd %s4912, %s4919
          %s4921 = smul.addr %s25, 16
          %s4922 = scalar_lea.hbm %s11, %s4921
          %s4924 = sshll.u32 %s4914, 4
          %s4925 = int_to_ptr.vmem [resolvable:$true] %s4924
          %4927 = dma.vmem_to_hbm [thread:$0]  %s4925, 16, %s4922, %s4912
        $region68: #{forward.1} parent=63 // pred_fallthru
          _
      $region64: #{forward.1} parent=5 // pred_fallthru
        _
      %p4928 = scmp.le.s32.totalorder 2, %s20
      // Predicated region
      $region69: #{forward.1} parent=5 // pred_check
        %p4929 = pneg %p4928
      $region70: #{forward.1} parent=5 // pred_check_branch
        %4931 = sbr.rel (%p4929) target = $region72
      $region71: #{forward.1} parent=5 // pred_region
        %s4932 = ssub.s32 %s20, 2
        // Predicated region
        $region73: #{forward.1} parent=71 // pred_check
          %p4933 = pneg %p285
        $region74: #{forward.1} parent=71 // pred_check_branch
          %4935 = sbr.rel (%p4933) target = $region76
        $region75: #{forward.1} parent=71 // pred_region
          %s4936 = sand.u32 %s270, 1
          %s4937 = scalar_lea.sflag [#allocation9], %s4936
          %s4938 = sand.u32 %s270, 1
          %s4939 = scalar_lea.vmem [#allocation8], %s4938
          %4940 = dma.done %s4937, 16
        $region76: #{forward.1} parent=71 // pred_fallthru
          _
      $region72: #{forward.1} parent=5 // pred_fallthru
        _
    $region6: #{forward.1} parent=1 // loop_footer
      %s24 = sadd.s32 1, %s20
    $region7: #{forward.1} parent=1 // loop_footer_branch
      %19 = sbr.rel target = $region3
    $region8: #{forward.1} parent=1 // loop_exit
      _
    %4941 = vsyncpa [#allocation9], 1
    %s4942 = scalar_lea.sflag [#allocation9], 1
    %4943 = vsyncpa %s4942, 1

</llo_original>
